<compile_context>
chip_gen: v5e
topology: v5e:2x2
jax: 0.10.0
libtpu: 0.0.40
codegen_flags: <defaults>
</compile_context>

<pallas_src>
import functools
import math

import jax
import jax.numpy as jnp
from jax.experimental import pallas as pl
from jax.experimental.pallas import tpu as pltpu

# Everything is tiny (<1 MB padded), so every array is a whole-block VMEM resident.
VMEM = pl.BlockSpec(memory_space=pltpu.MemorySpace.VMEM)


def _layernorm(x, g, b, eps=1e-5):
    mean = jnp.mean(x, axis=-1, keepdims=True)
    var = jnp.mean(jnp.square(x - mean), axis=-1, keepdims=True)
    return (x - mean) * jax.lax.rsqrt(var + eps) * g + b


def _lcm_fused_kernel(
    ids_ref, emb_ref,                 # input_ids [B,S,1] int32, emb table [V,D] f32
    proj_w_ref, final_vec_ref,        # [2,D,D] bf16, [4,D] f32 (in_b,out_b,norm_g,norm_b)
    wqkv_ref, bqkv_ref, wo_ref,       # [L,D,3D] bf16, [L,1,3D] f32, [L,D,D] bf16
    w1_ref, b1_ref, w2_ref,           # [L,D,FF] bf16, [L,1,FF] f32, [L,FF,D] bf16
    layer_vec_ref,                    # [L,6,D] f32: bo, ln1_g, ln1_b, b2, ln2_g, ln2_b
    o_ref,                            # [B,D] f32
    *, num_layers, num_heads, pad_token_id,
):
    f32, bf16 = jnp.float32, jnp.bfloat16

    ids = ids_ref[...]                                   # [B,S,1] int32
    table = emb_ref[...]                                 # [V,D]  f32
    b_sz, s_len, _ = ids.shape
    vocab, d = table.shape

    # ---- fused "encoder" lookup + masked mean pooling (one-hot @ table on MXU)
    mask = (ids != pad_token_id).astype(f32)             # [B,S,1]
    vocab_iota = jax.lax.broadcasted_iota(jnp.int32, (b_sz, s_len, vocab), 2)
    onehot = (ids == vocab_iota).astype(f32) * mask      # [B,S,V]
    counts_mat = jnp.sum(onehot, axis=1)                 # [B,V]
    summed = jnp.dot(counts_mat, table, preferred_element_type=f32)   # [B,D]
    counts = jnp.maximum(jnp.sum(mask, axis=1), 1e-9)    # [B,1]
    pooled = summed * pl.reciprocal(counts, approx=True)

    fv = final_vec_ref[...]                              # [4,D]
    in_b, out_b = fv[0:1], fv[1:2]
    norm_g, norm_b = fv[2:3], fv[3:4]

    # ---- input projection ----------------------------------------------------
    x = jnp.dot(pooled.astype(bf16), proj_w_ref[0],
                preferred_element_type=f32) + in_b       # [rows,D]

    rows = x.shape[0]          # == batch (PyTorch 2-D "unbatched" attention quirk)
    dh = d // num_heads
    scale = 1.0 / math.sqrt(dh)

    # head-segment mask: seg[h,0,dd] = 1 iff feature dd belongs to head h
    h_idx = jax.lax.broadcasted_iota(jnp.int32, (num_heads, 1, d), 0)
    d_idx = jax.lax.broadcasted_iota(jnp.int32, (num_heads, 1, d), 2)
    seg = ((d_idx >= h_idx * dh) & (d_idx < (h_idx + 1) * dh)).astype(f32)  # [H,1,D]

    # ---- transformer encoder layers (post-norm, ReLU FFN, eval/no-dropout) ---
    for l in range(num_layers):
        lv = layer_vec_ref[l]                            # [6,D]
        bo, ln1_g, ln1_b = lv[0:1], lv[1:2], lv[2:3]
        b2, ln2_g, ln2_b = lv[3:4], lv[4:5], lv[5:6]

        # fused Q/K/V projection: one [rows,D] @ [D,3D] matmul (bf16 operands, f32 acc)
        qkv = jnp.dot(x.astype(bf16), wqkv_ref[l],
                      preferred_element_type=f32) + bqkv_ref[l]       # [rows,3D]
        q, k, v = qkv[:, :d], qkv[:, d:2 * d], qkv[:, 2 * d:]

        # batched multi-head attention without per-head loops / reshapes:
        #   scores[h,i,j] = sum_{dd in head h} q[i,dd] * k[j,dd]
        qh = q[None, :, :] * seg                                       # [H,rows,D]
        kb = jnp.broadcast_to(k[None, :, :], (num_heads, rows, d))     # [H,rows,D]
        vb = jnp.broadcast_to(v[None, :, :], (num_heads, rows, d))     # [H,rows,D]
        s = jnp.einsum('hid,hjd->hij', qh, kb,
                       preferred_element_type=f32) * scale             # [H,rows,rows]
        m = jnp.max(s, axis=-1, keepdims=True)
        p = jnp.exp(s - m)
        p = p * pl.reciprocal(jnp.sum(p, axis=-1, keepdims=True), approx=True)
        pv = jnp.einsum('hij,hjd->hid', p, vb,
                        preferred_element_type=f32)                    # [H,rows,D]
        o = jnp.sum(pv * seg, axis=0)                                  # [rows,D] (concat layout)

        # single output projection matmul (review: no per-head Wo folding)
        attn = jnp.dot(o.astype(bf16), wo_ref[l],
                       preferred_element_type=f32) + bo

        x = _layernorm(x + attn, ln1_g, ln1_b)                         # post-norm 1

        hdn = jnp.maximum(
            jnp.dot(x.astype(bf16), w1_ref[l],
                    preferred_element_type=f32) + b1_ref[l], 0.0)      # ReLU FFN
        ff = jnp.dot(hdn.astype(bf16), w2_ref[l],
                     preferred_element_type=f32) + b2
        x = _layernorm(x + ff, ln2_g, ln2_b)                           # post-norm 2

    # ---- output projection + final LayerNorm (single lane-dense store) ------
    out = jnp.dot(x.astype(bf16), proj_w_ref[1],
                  preferred_element_type=f32) + out_b
    o_ref[...] = _layernorm(out, norm_g, norm_b)


@functools.partial(jax.jit,
                   static_argnames=("num_layers", "num_heads", "pad_token_id"))
def lcm_forward(input_ids, params, num_layers, num_heads, pad_token_id=0):
    b = input_ids.shape[0]
    d = params["emb_table"].shape[1]
    # [B,S] -> [B,S,1] so token ids sit on the sublane axis (lane dim stays free
    # for the in-kernel one-hot compare); host-side reshape, no in-kernel relayout.
    ids3 = input_ids.astype(jnp.int32)[:, :, None]

    kernel = functools.partial(
        _lcm_fused_kernel, num_layers=num_layers, num_heads=num_heads,
        pad_token_id=pad_token_id)

    return pl.pallas_call(
        kernel,
        out_shape=jax.ShapeDtypeStruct((b, d), jnp.float32),
        in_specs=[VMEM] * 11,
        out_specs=VMEM,
    )(
        ids3, params["emb_table"],
        params["proj_w"], params["final_vecs"],
        params["wqkv"], params["bqkv"], params["wo"],
        params["w1"], params["b1"], params["w2"],
        params["layer_vecs"],
    )


def init_params(key, vocab, d, ff, num_layers):
    keys = iter(jax.random.split(key, 8))

    def w(shape, scale=0.02, dtype=jnp.bfloat16):
        return (scale * jax.random.normal(next(keys), shape)).astype(dtype)

    def zeros(shape):
        return jnp.zeros(shape, jnp.float32)

    def ones(shape):
        return jnp.ones(shape, jnp.float32)

    L = num_layers
    # Packed per-layer D-wide vectors: bo, ln1_g, ln1_b, b2, ln2_g, ln2_b
    layer_vecs = jnp.stack(
        [zeros((L, d)), ones((L, d)), zeros((L, d)),
         zeros((L, d)), ones((L, d)), zeros((L, d))], axis=1)          # [L,6,D]
    # Packed final vectors: in_proj_b, out_proj_b, norm_g, norm_b
    final_vecs = jnp.stack(
        [zeros((d,)), zeros((d,)), ones((d,)), zeros((d,))], axis=0)   # [4,D]

    return {
        "emb_table": w((vocab, d), scale=1.0, dtype=jnp.float32),
        "proj_w": w((2, d, d)),                  # [in_proj_w, out_proj_w], bf16
        "final_vecs": final_vecs,
        "wqkv": w((L, d, 3 * d)),                # bf16
        "bqkv": zeros((L, 1, 3 * d)),
        "wo": w((L, d, d)),                      # bf16
        "w1": w((L, d, ff)),                     # bf16
        "b1": zeros((L, 1, ff)),
        "w2": w((L, ff, d)),                     # bf16
        "layer_vecs": layer_vecs,
    }


if __name__ == "__main__":
    # Small shapes consistent with the forward pass (hidden scaled down).
    B, S, D, H, FF, L, VOCAB = 2, 8, 32, 8, 128, 4, 64
    PAD_TOKEN_ID = 0

    key = jax.random.PRNGKey(0)
    k_params, k_ids = jax.random.split(key)

    params = init_params(k_params, VOCAB, D, FF, L)

    input_ids = jax.random.randint(k_ids, (B, S), 1, VOCAB, dtype=jnp.int32)
    # Introduce some padding so the mask / pooling path is exercised.
    input_ids = input_ids.at[1, 6:].set(PAD_TOKEN_ID)

    out = lcm_forward(input_ids, params, num_layers=L, num_heads=H,
                      pad_token_id=PAD_TOKEN_ID)
    out = jax.block_until_ready(out)

    assert out.shape == (B, D), out.shape
    assert out.dtype == jnp.float32
    assert bool(jnp.all(jnp.isfinite(out)))
    print("KERNEL_OK")
</pallas_src>

<mosaic_0001>
module attributes {stable_mosaic.version = 11 : i64} {
  func.func @_lcm_fused_kernel(%arg0: memref<2x8x1xi32, #tpu.memory_space<vmem>>, %arg1: memref<64x32xf32, #tpu.memory_space<vmem>>, %arg2: memref<2x32x32xbf16, #tpu.memory_space<vmem>>, %arg3: memref<4x32xf32, #tpu.memory_space<vmem>>, %arg4: memref<4x32x96xbf16, #tpu.memory_space<vmem>>, %arg5: memref<4x1x96xf32, #tpu.memory_space<vmem>>, %arg6: memref<4x32x32xbf16, #tpu.memory_space<vmem>>, %arg7: memref<4x32x128xbf16, #tpu.memory_space<vmem>>, %arg8: memref<4x1x128xf32, #tpu.memory_space<vmem>>, %arg9: memref<4x128x32xbf16, #tpu.memory_space<vmem>>, %arg10: memref<4x6x32xf32, #tpu.memory_space<vmem>>, %arg11: memref<2x32xf32, #tpu.memory_space<vmem>>) attributes {dimension_semantics = [], scalar_prefetch = 0 : i64, scratch_operands = 0 : i64, tpu.core_type = #tpu.core_type<tc>} {
    %c0 = arith.constant 0 : index
    %c0_0 = arith.constant 0 : index
    %c0_1 = arith.constant 0 : index
    %0 = vector.load %arg0[%c0, %c0_0, %c0_1] : memref<2x8x1xi32, #tpu.memory_space<vmem>>, vector<2x8x1xi32>
    %c0_2 = arith.constant 0 : index
    %c0_3 = arith.constant 0 : index
    %1 = vector.load %arg1[%c0_2, %c0_3] : memref<64x32xf32, #tpu.memory_space<vmem>>, vector<64x32xf32>
    %c0_i32 = arith.constant 0 : i32
    %2 = vector.broadcast %c0_i32 : i32 to vector<2x8x1xi32>
    %3 = arith.cmpi ne, %0, %2 : vector<2x8x1xi32>
    %4 = arith.extui %3 : vector<2x8x1xi1> to vector<2x8x1xi32>
    %5 = arith.sitofp %4 : vector<2x8x1xi32> to vector<2x8x1xf32>
    %6 = tpu.iota {dimensions = array<i32: 2>} : vector<2x8x64xi32>
    %7 = vector.broadcast %0 : vector<2x8x1xi32> to vector<2x8x64xi32>
    %8 = arith.cmpi eq, %7, %6 : vector<2x8x64xi32>
    %9 = arith.extui %8 : vector<2x8x64xi1> to vector<2x8x64xi32>
    %10 = arith.sitofp %9 : vector<2x8x64xi32> to vector<2x8x64xf32>
    %11 = vector.broadcast %5 : vector<2x8x1xf32> to vector<2x8x64xf32>
    %12 = arith.mulf %10, %11 : vector<2x8x64xf32>
    %cst = arith.constant dense<0.000000e+00> : vector<2x64xf32>
    %13 = vector.multi_reduction <add>, %12, %cst [1] : vector<2x8x64xf32> to vector<2x64xf32>
    %cst_4 = arith.constant dense<0.000000e+00> : vector<2x32xf32>
    %14 = tpu.matmul %13, %1, %cst_4 {dimension_numbers = #tpu.dot_dimension_numbers<[1], [0], [0], [1], [0, 0, 1, 1], [], []>} : vector<2x64xf32>, vector<64x32xf32>, vector<2x32xf32> -> vector<2x32xf32>
    %cst_5 = arith.constant dense<0.000000e+00> : vector<2x1xf32>
    %15 = vector.multi_reduction <add>, %5, %cst_5 [1] : vector<2x8x1xf32> to vector<2x1xf32>
    %cst_6 = arith.constant 9.99999971E-10 : f32
    %16 = vector.broadcast %cst_6 : f32 to vector<2x1xf32>
    %17 = arith.maximumf %15, %16 : vector<2x1xf32>
    %18 = tpu.reciprocal %17 {approx = true} : vector<2x1xf32> -> vector<2x1xf32>
    %19 = vector.broadcast %18 : vector<2x1xf32> to vector<2x32xf32>
    %20 = arith.mulf %14, %19 : vector<2x32xf32>
    %c0_7 = arith.constant 0 : index
    %c0_8 = arith.constant 0 : index
    %21 = vector.load %arg3[%c0_7, %c0_8] : memref<4x32xf32, #tpu.memory_space<vmem>>, vector<4x32xf32>
    %22 = vector.extract_strided_slice %21 {offsets = [0, 0], sizes = [1, 32], strides = [1, 1]} : vector<4x32xf32> to vector<1x32xf32>
    %23 = vector.extract_strided_slice %21 {offsets = [1, 0], sizes = [1, 32], strides = [1, 1]} : vector<4x32xf32> to vector<1x32xf32>
    %24 = vector.extract_strided_slice %21 {offsets = [2, 0], sizes = [1, 32], strides = [1, 1]} : vector<4x32xf32> to vector<1x32xf32>
    %25 = vector.extract_strided_slice %21 {offsets = [3, 0], sizes = [1, 32], strides = [1, 1]} : vector<4x32xf32> to vector<1x32xf32>
    %26 = arith.truncf %20 : vector<2x32xf32> to vector<2x32xbf16>
    %c0_9 = arith.constant 0 : index
    %c0_10 = arith.constant 0 : index
    %c0_11 = arith.constant 0 : index
    %27 = vector.load %arg2[%c0_9, %c0_10, %c0_11] : memref<2x32x32xbf16, #tpu.memory_space<vmem>>, vector<1x32x32xbf16>
    %28 = vector.shape_cast %27 : vector<1x32x32xbf16> to vector<32x32xbf16>
    %cst_12 = arith.constant dense<0.000000e+00> : vector<2x32xf32>
    %29 = tpu.matmul %26, %28, %cst_12 {dimension_numbers = #tpu.dot_dimension_numbers<[1], [0], [0], [1], [0, 0, 1, 1], [], []>} : vector<2x32xbf16>, vector<32x32xbf16>, vector<2x32xf32> -> vector<2x32xf32>
    %30 = vector.broadcast %22 : vector<1x32xf32> to vector<2x32xf32>
    %31 = arith.addf %29, %30 : vector<2x32xf32>
    %32 = tpu.iota {dimensions = array<i32: 0>} : vector<8x1x32xi32>
    %33 = tpu.iota {dimensions = array<i32: 2>} : vector<8x1x32xi32>
    %c4_i32 = arith.constant 4 : i32
    %34 = vector.broadcast %c4_i32 : i32 to vector<8x1x32xi32>
    %35 = arith.muli %32, %34 : vector<8x1x32xi32>
    %36 = arith.cmpi sge, %33, %35 : vector<8x1x32xi32>
    %c1_i32 = arith.constant 1 : i32
    %37 = vector.broadcast %c1_i32 : i32 to vector<8x1x32xi32>
    %38 = arith.addi %32, %37 : vector<8x1x32xi32>
    %c4_i32_13 = arith.constant 4 : i32
    %39 = vector.broadcast %c4_i32_13 : i32 to vector<8x1x32xi32>
    %40 = arith.muli %38, %39 : vector<8x1x32xi32>
    %41 = arith.cmpi slt, %33, %40 : vector<8x1x32xi32>
    %42 = arith.andi %36, %41 : vector<8x1x32xi1>
    %43 = arith.extui %42 : vector<8x1x32xi1> to vector<8x1x32xi32>
    %44 = arith.sitofp %43 : vector<8x1x32xi32> to vector<8x1x32xf32>
    %c0_14 = arith.constant 0 : index
    %c0_15 = arith.constant 0 : index
    %c0_16 = arith.constant 0 : index
    %45 = vector.load %arg10[%c0_14, %c0_15, %c0_16] : memref<4x6x32xf32, #tpu.memory_space<vmem>>, vector<1x6x32xf32>
    %46 = vector.shape_cast %45 : vector<1x6x32xf32> to vector<6x32xf32>
    %47 = vector.extract_strided_slice %46 {offsets = [0, 0], sizes = [1, 32], strides = [1, 1]} : vector<6x32xf32> to vector<1x32xf32>
    %48 = vector.extract_strided_slice %46 {offsets = [1, 0], sizes = [1, 32], strides = [1, 1]} : vector<6x32xf32> to vector<1x32xf32>
    %49 = vector.extract_strided_slice %46 {offsets = [2, 0], sizes = [1, 32], strides = [1, 1]} : vector<6x32xf32> to vector<1x32xf32>
    %50 = vector.extract_strided_slice %46 {offsets = [3, 0], sizes = [1, 32], strides = [1, 1]} : vector<6x32xf32> to vector<1x32xf32>
    %51 = vector.extract_strided_slice %46 {offsets = [4, 0], sizes = [1, 32], strides = [1, 1]} : vector<6x32xf32> to vector<1x32xf32>
    %52 = vector.extract_strided_slice %46 {offsets = [5, 0], sizes = [1, 32], strides = [1, 1]} : vector<6x32xf32> to vector<1x32xf32>
    %53 = arith.truncf %31 : vector<2x32xf32> to vector<2x32xbf16>
    %c0_17 = arith.constant 0 : index
    %c0_18 = arith.constant 0 : index
    %c0_19 = arith.constant 0 : index
    %54 = vector.load %arg4[%c0_17, %c0_18, %c0_19] : memref<4x32x96xbf16, #tpu.memory_space<vmem>>, vector<1x32x96xbf16>
    %55 = vector.shape_cast %54 : vector<1x32x96xbf16> to vector<32x96xbf16>
    %cst_20 = arith.constant dense<0.000000e+00> : vector<2x96xf32>
    %56 = tpu.matmul %53, %55, %cst_20 {dimension_numbers = #tpu.dot_dimension_numbers<[1], [0], [0], [1], [0, 0, 1, 1], [], []>} : vector<2x32xbf16>, vector<32x96xbf16>, vector<2x96xf32> -> vector<2x96xf32>
    %c0_21 = arith.constant 0 : index
    %c0_22 = arith.constant 0 : index
    %c0_23 = arith.constant 0 : index
    %57 = vector.load %arg5[%c0_21, %c0_22, %c0_23] : memref<4x1x96xf32, #tpu.memory_space<vmem>>, vector<1x1x96xf32>
    %58 = vector.shape_cast %57 : vector<1x1x96xf32> to vector<1x96xf32>
    %59 = vector.broadcast %58 : vector<1x96xf32> to vector<2x96xf32>
    %60 = arith.addf %56, %59 : vector<2x96xf32>
    %61 = vector.extract_strided_slice %60 {offsets = [0, 0], sizes = [2, 32], strides = [1, 1]} : vector<2x96xf32> to vector<2x32xf32>
    %62 = vector.extract_strided_slice %60 {offsets = [0, 32], sizes = [2, 32], strides = [1, 1]} : vector<2x96xf32> to vector<2x32xf32>
    %63 = vector.extract_strided_slice %60 {offsets = [0, 64], sizes = [2, 32], strides = [1, 1]} : vector<2x96xf32> to vector<2x32xf32>
    %64 = vector.shape_cast %61 : vector<2x32xf32> to vector<1x2x32xf32>
    %65 = vector.broadcast %64 : vector<1x2x32xf32> to vector<8x2x32xf32>
    %66 = vector.broadcast %44 : vector<8x1x32xf32> to vector<8x2x32xf32>
    %67 = arith.mulf %65, %66 : vector<8x2x32xf32>
    %68 = vector.shape_cast %62 : vector<2x32xf32> to vector<1x2x32xf32>
    %69 = vector.shape_cast %68 : vector<1x2x32xf32> to vector<1x2x32xf32>
    %70 = vector.broadcast %69 : vector<1x2x32xf32> to vector<8x2x32xf32>
    %71 = vector.shape_cast %63 : vector<2x32xf32> to vector<1x2x32xf32>
    %72 = vector.shape_cast %71 : vector<1x2x32xf32> to vector<1x2x32xf32>
    %73 = vector.broadcast %72 : vector<1x2x32xf32> to vector<8x2x32xf32>
    "tpu.trace_start"() <{level = 10 : i32, message = "hid,hjd->hij"}> : () -> ()
    %cst_24 = arith.constant dense<0.000000e+00> : vector<8x2x2xf32>
    %74 = tpu.matmul %67, %70, %cst_24 {dimension_numbers = #tpu.dot_dimension_numbers<[2], [2], [1], [1], [0, 0, 0, 1, 1, 1], [0], [0]>} : vector<8x2x32xf32>, vector<8x2x32xf32>, vector<8x2x2xf32> -> vector<8x2x2xf32>
    "tpu.trace_stop"() : () -> ()
    %cst_25 = arith.constant 5.000000e-01 : f32
    %75 = vector.broadcast %cst_25 : f32 to vector<8x2x2xf32>
    %76 = arith.mulf %74, %75 : vector<8x2x2xf32>
    %cst_26 = arith.constant dense<0xFF800000> : vector<8x2xf32>
    %77 = vector.multi_reduction <maximumf>, %76, %cst_26 [2] : vector<8x2x2xf32> to vector<8x2xf32>
    %78 = vector.shape_cast %77 : vector<8x2xf32> to vector<8x2x1xf32>
    %79 = vector.broadcast %78 : vector<8x2x1xf32> to vector<8x2x2xf32>
    %80 = arith.subf %76, %79 : vector<8x2x2xf32>
    %81 = math.exp %80 : vector<8x2x2xf32>
    %cst_27 = arith.constant dense<0.000000e+00> : vector<8x2xf32>
    %82 = vector.multi_reduction <add>, %81, %cst_27 [2] : vector<8x2x2xf32> to vector<8x2xf32>
    %83 = vector.shape_cast %82 : vector<8x2xf32> to vector<8x2x1xf32>
    %84 = tpu.reciprocal %83 {approx = true} : vector<8x2x1xf32> -> vector<8x2x1xf32>
    %85 = vector.broadcast %84 : vector<8x2x1xf32> to vector<8x2x2xf32>
    %86 = arith.mulf %81, %85 : vector<8x2x2xf32>
    "tpu.trace_start"() <{level = 10 : i32, message = "hij,hjd->hid"}> : () -> ()
    %cst_28 = arith.constant dense<0.000000e+00> : vector<8x2x32xf32>
    %87 = tpu.matmul %86, %73, %cst_28 {dimension_numbers = #tpu.dot_dimension_numbers<[2], [1], [1], [2], [0, 0, 0, 1, 1, 2], [0], [0]>} : vector<8x2x2xf32>, vector<8x2x32xf32>, vector<8x2x32xf32> -> vector<8x2x32xf32>
    "tpu.trace_stop"() : () -> ()
    %88 = vector.broadcast %44 : vector<8x1x32xf32> to vector<8x2x32xf32>
    %89 = arith.mulf %87, %88 : vector<8x2x32xf32>
    %cst_29 = arith.constant dense<0.000000e+00> : vector<2x32xf32>
    %90 = vector.multi_reduction <add>, %89, %cst_29 [0] : vector<8x2x32xf32> to vector<2x32xf32>
    %91 = arith.truncf %90 : vector<2x32xf32> to vector<2x32xbf16>
    %c0_30 = arith.constant 0 : index
    %c0_31 = arith.constant 0 : index
    %c0_32 = arith.constant 0 : index
    %92 = vector.load %arg6[%c0_30, %c0_31, %c0_32] : memref<4x32x32xbf16, #tpu.memory_space<vmem>>, vector<1x32x32xbf16>
    %93 = vector.shape_cast %92 : vector<1x32x32xbf16> to vector<32x32xbf16>
    %cst_33 = arith.constant dense<0.000000e+00> : vector<2x32xf32>
    %94 = tpu.matmul %91, %93, %cst_33 {dimension_numbers = #tpu.dot_dimension_numbers<[1], [0], [0], [1], [0, 0, 1, 1], [], []>} : vector<2x32xbf16>, vector<32x32xbf16>, vector<2x32xf32> -> vector<2x32xf32>
    %95 = vector.broadcast %47 : vector<1x32xf32> to vector<2x32xf32>
    %96 = arith.addf %94, %95 : vector<2x32xf32>
    %97 = arith.addf %31, %96 : vector<2x32xf32>
    %cst_34 = arith.constant dense<0.000000e+00> : vector<2xf32>
    %98 = vector.multi_reduction <add>, %97, %cst_34 [1] : vector<2x32xf32> to vector<2xf32>
    %99 = vector.shape_cast %98 : vector<2xf32> to vector<2x1xf32>
    %cst_35 = arith.constant 3.200000e+01 : f32
    %100 = vector.broadcast %cst_35 : f32 to vector<2x1xf32>
    %101 = arith.divf %99, %100 : vector<2x1xf32>
    %102 = vector.broadcast %101 : vector<2x1xf32> to vector<2x32xf32>
    %103 = arith.subf %97, %102 : vector<2x32xf32>
    %104 = arith.mulf %103, %103 : vector<2x32xf32>
    %cst_36 = arith.constant dense<0.000000e+00> : vector<2xf32>
    %105 = vector.multi_reduction <add>, %104, %cst_36 [1] : vector<2x32xf32> to vector<2xf32>
    %106 = vector.shape_cast %105 : vector<2xf32> to vector<2x1xf32>
    %cst_37 = arith.constant 3.200000e+01 : f32
    %107 = vector.broadcast %cst_37 : f32 to vector<2x1xf32>
    %108 = arith.divf %106, %107 : vector<2x1xf32>
    %109 = vector.broadcast %101 : vector<2x1xf32> to vector<2x32xf32>
    %110 = arith.subf %97, %109 : vector<2x32xf32>
    %cst_38 = arith.constant 9.99999974E-6 : f32
    %111 = vector.broadcast %cst_38 : f32 to vector<2x1xf32>
    %112 = arith.addf %108, %111 : vector<2x1xf32>
    %113 = math.rsqrt %112 : vector<2x1xf32>
    %114 = vector.broadcast %113 : vector<2x1xf32> to vector<2x32xf32>
    %115 = arith.mulf %110, %114 : vector<2x32xf32>
    %116 = vector.broadcast %48 : vector<1x32xf32> to vector<2x32xf32>
    %117 = arith.mulf %115, %116 : vector<2x32xf32>
    %118 = vector.broadcast %49 : vector<1x32xf32> to vector<2x32xf32>
    %119 = arith.addf %117, %118 : vector<2x32xf32>
    %120 = arith.truncf %119 : vector<2x32xf32> to vector<2x32xbf16>
    %c0_39 = arith.constant 0 : index
    %c0_40 = arith.constant 0 : index
    %c0_41 = arith.constant 0 : index
    %121 = vector.load %arg7[%c0_39, %c0_40, %c0_41] : memref<4x32x128xbf16, #tpu.memory_space<vmem>>, vector<1x32x128xbf16>
    %122 = vector.shape_cast %121 : vector<1x32x128xbf16> to vector<32x128xbf16>
    %cst_42 = arith.constant dense<0.000000e+00> : vector<2x128xf32>
    %123 = tpu.matmul %120, %122, %cst_42 {dimension_numbers = #tpu.dot_dimension_numbers<[1], [0], [0], [1], [0, 0, 1, 1], [], []>} : vector<2x32xbf16>, vector<32x128xbf16>, vector<2x128xf32> -> vector<2x128xf32>
    %c0_43 = arith.constant 0 : index
    %c0_44 = arith.constant 0 : index
    %c0_45 = arith.constant 0 : index
    %124 = vector.load %arg8[%c0_43, %c0_44, %c0_45] : memref<4x1x128xf32, #tpu.memory_space<vmem>>, vector<1x1x128xf32>
    %125 = vector.shape_cast %124 : vector<1x1x128xf32> to vector<1x128xf32>
    %126 = vector.broadcast %125 : vector<1x128xf32> to vector<2x128xf32>
    %127 = arith.addf %123, %126 : vector<2x128xf32>
    %cst_46 = arith.constant 0.000000e+00 : f32
    %128 = vector.broadcast %cst_46 : f32 to vector<2x128xf32>
    %129 = arith.maximumf %127, %128 : vector<2x128xf32>
    %130 = arith.truncf %129 : vector<2x128xf32> to vector<2x128xbf16>
    %c0_47 = arith.constant 0 : index
    %c0_48 = arith.constant 0 : index
    %c0_49 = arith.constant 0 : index
    %131 = vector.load %arg9[%c0_47, %c0_48, %c0_49] : memref<4x128x32xbf16, #tpu.memory_space<vmem>>, vector<1x128x32xbf16>
    %132 = vector.shape_cast %131 : vector<1x128x32xbf16> to vector<128x32xbf16>
    %cst_50 = arith.constant dense<0.000000e+00> : vector<2x32xf32>
    %133 = tpu.matmul %130, %132, %cst_50 {dimension_numbers = #tpu.dot_dimension_numbers<[1], [0], [0], [1], [0, 0, 1, 1], [], []>} : vector<2x128xbf16>, vector<128x32xbf16>, vector<2x32xf32> -> vector<2x32xf32>
    %134 = vector.broadcast %50 : vector<1x32xf32> to vector<2x32xf32>
    %135 = arith.addf %133, %134 : vector<2x32xf32>
    %136 = arith.addf %119, %135 : vector<2x32xf32>
    %cst_51 = arith.constant dense<0.000000e+00> : vector<2xf32>
    %137 = vector.multi_reduction <add>, %136, %cst_51 [1] : vector<2x32xf32> to vector<2xf32>
    %138 = vector.shape_cast %137 : vector<2xf32> to vector<2x1xf32>
    %cst_52 = arith.constant 3.200000e+01 : f32
    %139 = vector.broadcast %cst_52 : f32 to vector<2x1xf32>
    %140 = arith.divf %138, %139 : vector<2x1xf32>
    %141 = vector.broadcast %140 : vector<2x1xf32> to vector<2x32xf32>
    %142 = arith.subf %136, %141 : vector<2x32xf32>
    %143 = arith.mulf %142, %142 : vector<2x32xf32>
    %cst_53 = arith.constant dense<0.000000e+00> : vector<2xf32>
    %144 = vector.multi_reduction <add>, %143, %cst_53 [1] : vector<2x32xf32> to vector<2xf32>
    %145 = vector.shape_cast %144 : vector<2xf32> to vector<2x1xf32>
    %cst_54 = arith.constant 3.200000e+01 : f32
    %146 = vector.broadcast %cst_54 : f32 to vector<2x1xf32>
    %147 = arith.divf %145, %146 : vector<2x1xf32>
    %148 = vector.broadcast %140 : vector<2x1xf32> to vector<2x32xf32>
    %149 = arith.subf %136, %148 : vector<2x32xf32>
    %cst_55 = arith.constant 9.99999974E-6 : f32
    %150 = vector.broadcast %cst_55 : f32 to vector<2x1xf32>
    %151 = arith.addf %147, %150 : vector<2x1xf32>
    %152 = math.rsqrt %151 : vector<2x1xf32>
    %153 = vector.broadcast %152 : vector<2x1xf32> to vector<2x32xf32>
    %154 = arith.mulf %149, %153 : vector<2x32xf32>
    %155 = vector.broadcast %51 : vector<1x32xf32> to vector<2x32xf32>
    %156 = arith.mulf %154, %155 : vector<2x32xf32>
    %157 = vector.broadcast %52 : vector<1x32xf32> to vector<2x32xf32>
    %158 = arith.addf %156, %157 : vector<2x32xf32>
    %c1 = arith.constant 1 : index
    %c0_56 = arith.constant 0 : index
    %c0_57 = arith.constant 0 : index
    %159 = vector.load %arg10[%c1, %c0_56, %c0_57] : memref<4x6x32xf32, #tpu.memory_space<vmem>>, vector<1x6x32xf32>
    %160 = vector.shape_cast %159 : vector<1x6x32xf32> to vector<6x32xf32>
    %161 = vector.extract_strided_slice %160 {offsets = [0, 0], sizes = [1, 32], strides = [1, 1]} : vector<6x32xf32> to vector<1x32xf32>
    %162 = vector.extract_strided_slice %160 {offsets = [1, 0], sizes = [1, 32], strides = [1, 1]} : vector<6x32xf32> to vector<1x32xf32>
    %163 = vector.extract_strided_slice %160 {offsets = [2, 0], sizes = [1, 32], strides = [1, 1]} : vector<6x32xf32> to vector<1x32xf32>
    %164 = vector.extract_strided_slice %160 {offsets = [3, 0], sizes = [1, 32], strides = [1, 1]} : vector<6x32xf32> to vector<1x32xf32>
    %165 = vector.extract_strided_slice %160 {offsets = [4, 0], sizes = [1, 32], strides = [1, 1]} : vector<6x32xf32> to vector<1x32xf32>
    %166 = vector.extract_strided_slice %160 {offsets = [5, 0], sizes = [1, 32], strides = [1, 1]} : vector<6x32xf32> to vector<1x32xf32>
    %167 = arith.truncf %158 : vector<2x32xf32> to vector<2x32xbf16>
    %c1_58 = arith.constant 1 : index
    %c0_59 = arith.constant 0 : index
    %c0_60 = arith.constant 0 : index
    %168 = vector.load %arg4[%c1_58, %c0_59, %c0_60] : memref<4x32x96xbf16, #tpu.memory_space<vmem>>, vector<1x32x96xbf16>
    %169 = vector.shape_cast %168 : vector<1x32x96xbf16> to vector<32x96xbf16>
    %cst_61 = arith.constant dense<0.000000e+00> : vector<2x96xf32>
    %170 = tpu.matmul %167, %169, %cst_61 {dimension_numbers = #tpu.dot_dimension_numbers<[1], [0], [0], [1], [0, 0, 1, 1], [], []>} : vector<2x32xbf16>, vector<32x96xbf16>, vector<2x96xf32> -> vector<2x96xf32>
    %c1_62 = arith.constant 1 : index
    %c0_63 = arith.constant 0 : index
    %c0_64 = arith.constant 0 : index
    %171 = vector.load %arg5[%c1_62, %c0_63, %c0_64] : memref<4x1x96xf32, #tpu.memory_space<vmem>>, vector<1x1x96xf32>
    %172 = vector.shape_cast %171 : vector<1x1x96xf32> to vector<1x96xf32>
    %173 = vector.broadcast %172 : vector<1x96xf32> to vector<2x96xf32>
    %174 = arith.addf %170, %173 : vector<2x96xf32>
    %175 = vector.extract_strided_slice %174 {offsets = [0, 0], sizes = [2, 32], strides = [1, 1]} : vector<2x96xf32> to vector<2x32xf32>
    %176 = vector.extract_strided_slice %174 {offsets = [0, 32], sizes = [2, 32], strides = [1, 1]} : vector<2x96xf32> to vector<2x32xf32>
    %177 = vector.extract_strided_slice %174 {offsets = [0, 64], sizes = [2, 32], strides = [1, 1]} : vector<2x96xf32> to vector<2x32xf32>
    %178 = vector.shape_cast %175 : vector<2x32xf32> to vector<1x2x32xf32>
    %179 = vector.broadcast %178 : vector<1x2x32xf32> to vector<8x2x32xf32>
    %180 = vector.broadcast %44 : vector<8x1x32xf32> to vector<8x2x32xf32>
    %181 = arith.mulf %179, %180 : vector<8x2x32xf32>
    %182 = vector.shape_cast %176 : vector<2x32xf32> to vector<1x2x32xf32>
    %183 = vector.shape_cast %182 : vector<1x2x32xf32> to vector<1x2x32xf32>
    %184 = vector.broadcast %183 : vector<1x2x32xf32> to vector<8x2x32xf32>
    %185 = vector.shape_cast %177 : vector<2x32xf32> to vector<1x2x32xf32>
    %186 = vector.shape_cast %185 : vector<1x2x32xf32> to vector<1x2x32xf32>
    %187 = vector.broadcast %186 : vector<1x2x32xf32> to vector<8x2x32xf32>
    "tpu.trace_start"() <{level = 10 : i32, message = "hid,hjd->hij"}> : () -> ()
    %cst_65 = arith.constant dense<0.000000e+00> : vector<8x2x2xf32>
    %188 = tpu.matmul %181, %184, %cst_65 {dimension_numbers = #tpu.dot_dimension_numbers<[2], [2], [1], [1], [0, 0, 0, 1, 1, 1], [0], [0]>} : vector<8x2x32xf32>, vector<8x2x32xf32>, vector<8x2x2xf32> -> vector<8x2x2xf32>
    "tpu.trace_stop"() : () -> ()
    %cst_66 = arith.constant 5.000000e-01 : f32
    %189 = vector.broadcast %cst_66 : f32 to vector<8x2x2xf32>
    %190 = arith.mulf %188, %189 : vector<8x2x2xf32>
    %cst_67 = arith.constant dense<0xFF800000> : vector<8x2xf32>
    %191 = vector.multi_reduction <maximumf>, %190, %cst_67 [2] : vector<8x2x2xf32> to vector<8x2xf32>
    %192 = vector.shape_cast %191 : vector<8x2xf32> to vector<8x2x1xf32>
    %193 = vector.broadcast %192 : vector<8x2x1xf32> to vector<8x2x2xf32>
    %194 = arith.subf %190, %193 : vector<8x2x2xf32>
    %195 = math.exp %194 : vector<8x2x2xf32>
    %cst_68 = arith.constant dense<0.000000e+00> : vector<8x2xf32>
    %196 = vector.multi_reduction <add>, %195, %cst_68 [2] : vector<8x2x2xf32> to vector<8x2xf32>
    %197 = vector.shape_cast %196 : vector<8x2xf32> to vector<8x2x1xf32>
    %198 = tpu.reciprocal %197 {approx = true} : vector<8x2x1xf32> -> vector<8x2x1xf32>
    %199 = vector.broadcast %198 : vector<8x2x1xf32> to vector<8x2x2xf32>
    %200 = arith.mulf %195, %199 : vector<8x2x2xf32>
    "tpu.trace_start"() <{level = 10 : i32, message = "hij,hjd->hid"}> : () -> ()
    %cst_69 = arith.constant dense<0.000000e+00> : vector<8x2x32xf32>
    %201 = tpu.matmul %200, %187, %cst_69 {dimension_numbers = #tpu.dot_dimension_numbers<[2], [1], [1], [2], [0, 0, 0, 1, 1, 2], [0], [0]>} : vector<8x2x2xf32>, vector<8x2x32xf32>, vector<8x2x32xf32> -> vector<8x2x32xf32>
    "tpu.trace_stop"() : () -> ()
    %202 = vector.broadcast %44 : vector<8x1x32xf32> to vector<8x2x32xf32>
    %203 = arith.mulf %201, %202 : vector<8x2x32xf32>
    %cst_70 = arith.constant dense<0.000000e+00> : vector<2x32xf32>
    %204 = vector.multi_reduction <add>, %203, %cst_70 [0] : vector<8x2x32xf32> to vector<2x32xf32>
    %205 = arith.truncf %204 : vector<2x32xf32> to vector<2x32xbf16>
    %c1_71 = arith.constant 1 : index
    %c0_72 = arith.constant 0 : index
    %c0_73 = arith.constant 0 : index
    %206 = vector.load %arg6[%c1_71, %c0_72, %c0_73] : memref<4x32x32xbf16, #tpu.memory_space<vmem>>, vector<1x32x32xbf16>
    %207 = vector.shape_cast %206 : vector<1x32x32xbf16> to vector<32x32xbf16>
    %cst_74 = arith.constant dense<0.000000e+00> : vector<2x32xf32>
    %208 = tpu.matmul %205, %207, %cst_74 {dimension_numbers = #tpu.dot_dimension_numbers<[1], [0], [0], [1], [0, 0, 1, 1], [], []>} : vector<2x32xbf16>, vector<32x32xbf16>, vector<2x32xf32> -> vector<2x32xf32>
    %209 = vector.broadcast %161 : vector<1x32xf32> to vector<2x32xf32>
    %210 = arith.addf %208, %209 : vector<2x32xf32>
    %211 = arith.addf %158, %210 : vector<2x32xf32>
    %cst_75 = arith.constant dense<0.000000e+00> : vector<2xf32>
    %212 = vector.multi_reduction <add>, %211, %cst_75 [1] : vector<2x32xf32> to vector<2xf32>
    %213 = vector.shape_cast %212 : vector<2xf32> to vector<2x1xf32>
    %cst_76 = arith.constant 3.200000e+01 : f32
    %214 = vector.broadcast %cst_76 : f32 to vector<2x1xf32>
    %215 = arith.divf %213, %214 : vector<2x1xf32>
    %216 = vector.broadcast %215 : vector<2x1xf32> to vector<2x32xf32>
    %217 = arith.subf %211, %216 : vector<2x32xf32>
    %218 = arith.mulf %217, %217 : vector<2x32xf32>
    %cst_77 = arith.constant dense<0.000000e+00> : vector<2xf32>
    %219 = vector.multi_reduction <add>, %218, %cst_77 [1] : vector<2x32xf32> to vector<2xf32>
    %220 = vector.shape_cast %219 : vector<2xf32> to vector<2x1xf32>
    %cst_78 = arith.constant 3.200000e+01 : f32
    %221 = vector.broadcast %cst_78 : f32 to vector<2x1xf32>
    %222 = arith.divf %220, %221 : vector<2x1xf32>
    %223 = vector.broadcast %215 : vector<2x1xf32> to vector<2x32xf32>
    %224 = arith.subf %211, %223 : vector<2x32xf32>
    %cst_79 = arith.constant 9.99999974E-6 : f32
    %225 = vector.broadcast %cst_79 : f32 to vector<2x1xf32>
    %226 = arith.addf %222, %225 : vector<2x1xf32>
    %227 = math.rsqrt %226 : vector<2x1xf32>
    %228 = vector.broadcast %227 : vector<2x1xf32> to vector<2x32xf32>
    %229 = arith.mulf %224, %228 : vector<2x32xf32>
    %230 = vector.broadcast %162 : vector<1x32xf32> to vector<2x32xf32>
    %231 = arith.mulf %229, %230 : vector<2x32xf32>
    %232 = vector.broadcast %163 : vector<1x32xf32> to vector<2x32xf32>
    %233 = arith.addf %231, %232 : vector<2x32xf32>
    %234 = arith.truncf %233 : vector<2x32xf32> to vector<2x32xbf16>
    %c1_80 = arith.constant 1 : index
    %c0_81 = arith.constant 0 : index
    %c0_82 = arith.constant 0 : index
    %235 = vector.load %arg7[%c1_80, %c0_81, %c0_82] : memref<4x32x128xbf16, #tpu.memory_space<vmem>>, vector<1x32x128xbf16>
    %236 = vector.shape_cast %235 : vector<1x32x128xbf16> to vector<32x128xbf16>
    %cst_83 = arith.constant dense<0.000000e+00> : vector<2x128xf32>
    %237 = tpu.matmul %234, %236, %cst_83 {dimension_numbers = #tpu.dot_dimension_numbers<[1], [0], [0], [1], [0, 0, 1, 1], [], []>} : vector<2x32xbf16>, vector<32x128xbf16>, vector<2x128xf32> -> vector<2x128xf32>
    %c1_84 = arith.constant 1 : index
    %c0_85 = arith.constant 0 : index
    %c0_86 = arith.constant 0 : index
    %238 = vector.load %arg8[%c1_84, %c0_85, %c0_86] : memref<4x1x128xf32, #tpu.memory_space<vmem>>, vector<1x1x128xf32>
    %239 = vector.shape_cast %238 : vector<1x1x128xf32> to vector<1x128xf32>
    %240 = vector.broadcast %239 : vector<1x128xf32> to vector<2x128xf32>
    %241 = arith.addf %237, %240 : vector<2x128xf32>
    %cst_87 = arith.constant 0.000000e+00 : f32
    %242 = vector.broadcast %cst_87 : f32 to vector<2x128xf32>
    %243 = arith.maximumf %241, %242 : vector<2x128xf32>
    %244 = arith.truncf %243 : vector<2x128xf32> to vector<2x128xbf16>
    %c1_88 = arith.constant 1 : index
    %c0_89 = arith.constant 0 : index
    %c0_90 = arith.constant 0 : index
    %245 = vector.load %arg9[%c1_88, %c0_89, %c0_90] : memref<4x128x32xbf16, #tpu.memory_space<vmem>>, vector<1x128x32xbf16>
    %246 = vector.shape_cast %245 : vector<1x128x32xbf16> to vector<128x32xbf16>
    %cst_91 = arith.constant dense<0.000000e+00> : vector<2x32xf32>
    %247 = tpu.matmul %244, %246, %cst_91 {dimension_numbers = #tpu.dot_dimension_numbers<[1], [0], [0], [1], [0, 0, 1, 1], [], []>} : vector<2x128xbf16>, vector<128x32xbf16>, vector<2x32xf32> -> vector<2x32xf32>
    %248 = vector.broadcast %164 : vector<1x32xf32> to vector<2x32xf32>
    %249 = arith.addf %247, %248 : vector<2x32xf32>
    %250 = arith.addf %233, %249 : vector<2x32xf32>
    %cst_92 = arith.constant dense<0.000000e+00> : vector<2xf32>
    %251 = vector.multi_reduction <add>, %250, %cst_92 [1] : vector<2x32xf32> to vector<2xf32>
    %252 = vector.shape_cast %251 : vector<2xf32> to vector<2x1xf32>
    %cst_93 = arith.constant 3.200000e+01 : f32
    %253 = vector.broadcast %cst_93 : f32 to vector<2x1xf32>
    %254 = arith.divf %252, %253 : vector<2x1xf32>
    %255 = vector.broadcast %254 : vector<2x1xf32> to vector<2x32xf32>
    %256 = arith.subf %250, %255 : vector<2x32xf32>
    %257 = arith.mulf %256, %256 : vector<2x32xf32>
    %cst_94 = arith.constant dense<0.000000e+00> : vector<2xf32>
    %258 = vector.multi_reduction <add>, %257, %cst_94 [1] : vector<2x32xf32> to vector<2xf32>
    %259 = vector.shape_cast %258 : vector<2xf32> to vector<2x1xf32>
    %cst_95 = arith.constant 3.200000e+01 : f32
    %260 = vector.broadcast %cst_95 : f32 to vector<2x1xf32>
    %261 = arith.divf %259, %260 : vector<2x1xf32>
    %262 = vector.broadcast %254 : vector<2x1xf32> to vector<2x32xf32>
    %263 = arith.subf %250, %262 : vector<2x32xf32>
    %cst_96 = arith.constant 9.99999974E-6 : f32
    %264 = vector.broadcast %cst_96 : f32 to vector<2x1xf32>
    %265 = arith.addf %261, %264 : vector<2x1xf32>
    %266 = math.rsqrt %265 : vector<2x1xf32>
    %267 = vector.broadcast %266 : vector<2x1xf32> to vector<2x32xf32>
    %268 = arith.mulf %263, %267 : vector<2x32xf32>
    %269 = vector.broadcast %165 : vector<1x32xf32> to vector<2x32xf32>
    %270 = arith.mulf %268, %269 : vector<2x32xf32>
    %271 = vector.broadcast %166 : vector<1x32xf32> to vector<2x32xf32>
    %272 = arith.addf %270, %271 : vector<2x32xf32>
    %c2 = arith.constant 2 : index
    %c0_97 = arith.constant 0 : index
    %c0_98 = arith.constant 0 : index
    %273 = vector.load %arg10[%c2, %c0_97, %c0_98] : memref<4x6x32xf32, #tpu.memory_space<vmem>>, vector<1x6x32xf32>
    %274 = vector.shape_cast %273 : vector<1x6x32xf32> to vector<6x32xf32>
    %275 = vector.extract_strided_slice %274 {offsets = [0, 0], sizes = [1, 32], strides = [1, 1]} : vector<6x32xf32> to vector<1x32xf32>
    %276 = vector.extract_strided_slice %274 {offsets = [1, 0], sizes = [1, 32], strides = [1, 1]} : vector<6x32xf32> to vector<1x32xf32>
    %277 = vector.extract_strided_slice %274 {offsets = [2, 0], sizes = [1, 32], strides = [1, 1]} : vector<6x32xf32> to vector<1x32xf32>
    %278 = vector.extract_strided_slice %274 {offsets = [3, 0], sizes = [1, 32], strides = [1, 1]} : vector<6x32xf32> to vector<1x32xf32>
    %279 = vector.extract_strided_slice %274 {offsets = [4, 0], sizes = [1, 32], strides = [1, 1]} : vector<6x32xf32> to vector<1x32xf32>
    %280 = vector.extract_strided_slice %274 {offsets = [5, 0], sizes = [1, 32], strides = [1, 1]} : vector<6x32xf32> to vector<1x32xf32>
    %281 = arith.truncf %272 : vector<2x32xf32> to vector<2x32xbf16>
    %c2_99 = arith.constant 2 : index
    %c0_100 = arith.constant 0 : index
    %c0_101 = arith.constant 0 : index
    %282 = vector.load %arg4[%c2_99, %c0_100, %c0_101] : memref<4x32x96xbf16, #tpu.memory_space<vmem>>, vector<1x32x96xbf16>
    %283 = vector.shape_cast %282 : vector<1x32x96xbf16> to vector<32x96xbf16>
    %cst_102 = arith.constant dense<0.000000e+00> : vector<2x96xf32>
    %284 = tpu.matmul %281, %283, %cst_102 {dimension_numbers = #tpu.dot_dimension_numbers<[1], [0], [0], [1], [0, 0, 1, 1], [], []>} : vector<2x32xbf16>, vector<32x96xbf16>, vector<2x96xf32> -> vector<2x96xf32>
    %c2_103 = arith.constant 2 : index
    %c0_104 = arith.constant 0 : index
    %c0_105 = arith.constant 0 : index
    %285 = vector.load %arg5[%c2_103, %c0_104, %c0_105] : memref<4x1x96xf32, #tpu.memory_space<vmem>>, vector<1x1x96xf32>
    %286 = vector.shape_cast %285 : vector<1x1x96xf32> to vector<1x96xf32>
    %287 = vector.broadcast %286 : vector<1x96xf32> to vector<2x96xf32>
    %288 = arith.addf %284, %287 : vector<2x96xf32>
    %289 = vector.extract_strided_slice %288 {offsets = [0, 0], sizes = [2, 32], strides = [1, 1]} : vector<2x96xf32> to vector<2x32xf32>
    %290 = vector.extract_strided_slice %288 {offsets = [0, 32], sizes = [2, 32], strides = [1, 1]} : vector<2x96xf32> to vector<2x32xf32>
    %291 = vector.extract_strided_slice %288 {offsets = [0, 64], sizes = [2, 32], strides = [1, 1]} : vector<2x96xf32> to vector<2x32xf32>
    %292 = vector.shape_cast %289 : vector<2x32xf32> to vector<1x2x32xf32>
    %293 = vector.broadcast %292 : vector<1x2x32xf32> to vector<8x2x32xf32>
    %294 = vector.broadcast %44 : vector<8x1x32xf32> to vector<8x2x32xf32>
    %295 = arith.mulf %293, %294 : vector<8x2x32xf32>
    %296 = vector.shape_cast %290 : vector<2x32xf32> to vector<1x2x32xf32>
    %297 = vector.shape_cast %296 : vector<1x2x32xf32> to vector<1x2x32xf32>
    %298 = vector.broadcast %297 : vector<1x2x32xf32> to vector<8x2x32xf32>
    %299 = vector.shape_cast %291 : vector<2x32xf32> to vector<1x2x32xf32>
    %300 = vector.shape_cast %299 : vector<1x2x32xf32> to vector<1x2x32xf32>
    %301 = vector.broadcast %300 : vector<1x2x32xf32> to vector<8x2x32xf32>
    "tpu.trace_start"() <{level = 10 : i32, message = "hid,hjd->hij"}> : () -> ()
    %cst_106 = arith.constant dense<0.000000e+00> : vector<8x2x2xf32>
    %302 = tpu.matmul %295, %298, %cst_106 {dimension_numbers = #tpu.dot_dimension_numbers<[2], [2], [1], [1], [0, 0, 0, 1, 1, 1], [0], [0]>} : vector<8x2x32xf32>, vector<8x2x32xf32>, vector<8x2x2xf32> -> vector<8x2x2xf32>
    "tpu.trace_stop"() : () -> ()
    %cst_107 = arith.constant 5.000000e-01 : f32
    %303 = vector.broadcast %cst_107 : f32 to vector<8x2x2xf32>
    %304 = arith.mulf %302, %303 : vector<8x2x2xf32>
    %cst_108 = arith.constant dense<0xFF800000> : vector<8x2xf32>
    %305 = vector.multi_reduction <maximumf>, %304, %cst_108 [2] : vector<8x2x2xf32> to vector<8x2xf32>
    %306 = vector.shape_cast %305 : vector<8x2xf32> to vector<8x2x1xf32>
    %307 = vector.broadcast %306 : vector<8x2x1xf32> to vector<8x2x2xf32>
    %308 = arith.subf %304, %307 : vector<8x2x2xf32>
    %309 = math.exp %308 : vector<8x2x2xf32>
    %cst_109 = arith.constant dense<0.000000e+00> : vector<8x2xf32>
    %310 = vector.multi_reduction <add>, %309, %cst_109 [2] : vector<8x2x2xf32> to vector<8x2xf32>
    %311 = vector.shape_cast %310 : vector<8x2xf32> to vector<8x2x1xf32>
    %312 = tpu.reciprocal %311 {approx = true} : vector<8x2x1xf32> -> vector<8x2x1xf32>
    %313 = vector.broadcast %312 : vector<8x2x1xf32> to vector<8x2x2xf32>
    %314 = arith.mulf %309, %313 : vector<8x2x2xf32>
    "tpu.trace_start"() <{level = 10 : i32, message = "hij,hjd->hid"}> : () -> ()
    %cst_110 = arith.constant dense<0.000000e+00> : vector<8x2x32xf32>
    %315 = tpu.matmul %314, %301, %cst_110 {dimension_numbers = #tpu.dot_dimension_numbers<[2], [1], [1], [2], [0, 0, 0, 1, 1, 2], [0], [0]>} : vector<8x2x2xf32>, vector<8x2x32xf32>, vector<8x2x32xf32> -> vector<8x2x32xf32>
    "tpu.trace_stop"() : () -> ()
    %316 = vector.broadcast %44 : vector<8x1x32xf32> to vector<8x2x32xf32>
    %317 = arith.mulf %315, %316 : vector<8x2x32xf32>
    %cst_111 = arith.constant dense<0.000000e+00> : vector<2x32xf32>
    %318 = vector.multi_reduction <add>, %317, %cst_111 [0] : vector<8x2x32xf32> to vector<2x32xf32>
    %319 = arith.truncf %318 : vector<2x32xf32> to vector<2x32xbf16>
    %c2_112 = arith.constant 2 : index
    %c0_113 = arith.constant 0 : index
    %c0_114 = arith.constant 0 : index
    %320 = vector.load %arg6[%c2_112, %c0_113, %c0_114] : memref<4x32x32xbf16, #tpu.memory_space<vmem>>, vector<1x32x32xbf16>
    %321 = vector.shape_cast %320 : vector<1x32x32xbf16> to vector<32x32xbf16>
    %cst_115 = arith.constant dense<0.000000e+00> : vector<2x32xf32>
    %322 = tpu.matmul %319, %321, %cst_115 {dimension_numbers = #tpu.dot_dimension_numbers<[1], [0], [0], [1], [0, 0, 1, 1], [], []>} : vector<2x32xbf16>, vector<32x32xbf16>, vector<2x32xf32> -> vector<2x32xf32>
    %323 = vector.broadcast %275 : vector<1x32xf32> to vector<2x32xf32>
    %324 = arith.addf %322, %323 : vector<2x32xf32>
    %325 = arith.addf %272, %324 : vector<2x32xf32>
    %cst_116 = arith.constant dense<0.000000e+00> : vector<2xf32>
    %326 = vector.multi_reduction <add>, %325, %cst_116 [1] : vector<2x32xf32> to vector<2xf32>
    %327 = vector.shape_cast %326 : vector<2xf32> to vector<2x1xf32>
    %cst_117 = arith.constant 3.200000e+01 : f32
    %328 = vector.broadcast %cst_117 : f32 to vector<2x1xf32>
    %329 = arith.divf %327, %328 : vector<2x1xf32>
    %330 = vector.broadcast %329 : vector<2x1xf32> to vector<2x32xf32>
    %331 = arith.subf %325, %330 : vector<2x32xf32>
    %332 = arith.mulf %331, %331 : vector<2x32xf32>
    %cst_118 = arith.constant dense<0.000000e+00> : vector<2xf32>
    %333 = vector.multi_reduction <add>, %332, %cst_118 [1] : vector<2x32xf32> to vector<2xf32>
    %334 = vector.shape_cast %333 : vector<2xf32> to vector<2x1xf32>
    %cst_119 = arith.constant 3.200000e+01 : f32
    %335 = vector.broadcast %cst_119 : f32 to vector<2x1xf32>
    %336 = arith.divf %334, %335 : vector<2x1xf32>
    %337 = vector.broadcast %329 : vector<2x1xf32> to vector<2x32xf32>
    %338 = arith.subf %325, %337 : vector<2x32xf32>
    %cst_120 = arith.constant 9.99999974E-6 : f32
    %339 = vector.broadcast %cst_120 : f32 to vector<2x1xf32>
    %340 = arith.addf %336, %339 : vector<2x1xf32>
    %341 = math.rsqrt %340 : vector<2x1xf32>
    %342 = vector.broadcast %341 : vector<2x1xf32> to vector<2x32xf32>
    %343 = arith.mulf %338, %342 : vector<2x32xf32>
    %344 = vector.broadcast %276 : vector<1x32xf32> to vector<2x32xf32>
    %345 = arith.mulf %343, %344 : vector<2x32xf32>
    %346 = vector.broadcast %277 : vector<1x32xf32> to vector<2x32xf32>
    %347 = arith.addf %345, %346 : vector<2x32xf32>
    %348 = arith.truncf %347 : vector<2x32xf32> to vector<2x32xbf16>
    %c2_121 = arith.constant 2 : index
    %c0_122 = arith.constant 0 : index
    %c0_123 = arith.constant 0 : index
    %349 = vector.load %arg7[%c2_121, %c0_122, %c0_123] : memref<4x32x128xbf16, #tpu.memory_space<vmem>>, vector<1x32x128xbf16>
    %350 = vector.shape_cast %349 : vector<1x32x128xbf16> to vector<32x128xbf16>
    %cst_124 = arith.constant dense<0.000000e+00> : vector<2x128xf32>
    %351 = tpu.matmul %348, %350, %cst_124 {dimension_numbers = #tpu.dot_dimension_numbers<[1], [0], [0], [1], [0, 0, 1, 1], [], []>} : vector<2x32xbf16>, vector<32x128xbf16>, vector<2x128xf32> -> vector<2x128xf32>
    %c2_125 = arith.constant 2 : index
    %c0_126 = arith.constant 0 : index
    %c0_127 = arith.constant 0 : index
    %352 = vector.load %arg8[%c2_125, %c0_126, %c0_127] : memref<4x1x128xf32, #tpu.memory_space<vmem>>, vector<1x1x128xf32>
    %353 = vector.shape_cast %352 : vector<1x1x128xf32> to vector<1x128xf32>
    %354 = vector.broadcast %353 : vector<1x128xf32> to vector<2x128xf32>
    %355 = arith.addf %351, %354 : vector<2x128xf32>
    %cst_128 = arith.constant 0.000000e+00 : f32
    %356 = vector.broadcast %cst_128 : f32 to vector<2x128xf32>
    %357 = arith.maximumf %355, %356 : vector<2x128xf32>
    %358 = arith.truncf %357 : vector<2x128xf32> to vector<2x128xbf16>
    %c2_129 = arith.constant 2 : index
    %c0_130 = arith.constant 0 : index
    %c0_131 = arith.constant 0 : index
    %359 = vector.load %arg9[%c2_129, %c0_130, %c0_131] : memref<4x128x32xbf16, #tpu.memory_space<vmem>>, vector<1x128x32xbf16>
    %360 = vector.shape_cast %359 : vector<1x128x32xbf16> to vector<128x32xbf16>
    %cst_132 = arith.constant dense<0.000000e+00> : vector<2x32xf32>
    %361 = tpu.matmul %358, %360, %cst_132 {dimension_numbers = #tpu.dot_dimension_numbers<[1], [0], [0], [1], [0, 0, 1, 1], [], []>} : vector<2x128xbf16>, vector<128x32xbf16>, vector<2x32xf32> -> vector<2x32xf32>
    %362 = vector.broadcast %278 : vector<1x32xf32> to vector<2x32xf32>
    %363 = arith.addf %361, %362 : vector<2x32xf32>
    %364 = arith.addf %347, %363 : vector<2x32xf32>
    %cst_133 = arith.constant dense<0.000000e+00> : vector<2xf32>
    %365 = vector.multi_reduction <add>, %364, %cst_133 [1] : vector<2x32xf32> to vector<2xf32>
    %366 = vector.shape_cast %365 : vector<2xf32> to vector<2x1xf32>
    %cst_134 = arith.constant 3.200000e+01 : f32
    %367 = vector.broadcast %cst_134 : f32 to vector<2x1xf32>
    %368 = arith.divf %366, %367 : vector<2x1xf32>
    %369 = vector.broadcast %368 : vector<2x1xf32> to vector<2x32xf32>
    %370 = arith.subf %364, %369 : vector<2x32xf32>
    %371 = arith.mulf %370, %370 : vector<2x32xf32>
    %cst_135 = arith.constant dense<0.000000e+00> : vector<2xf32>
    %372 = vector.multi_reduction <add>, %371, %cst_135 [1] : vector<2x32xf32> to vector<2xf32>
    %373 = vector.shape_cast %372 : vector<2xf32> to vector<2x1xf32>
    %cst_136 = arith.constant 3.200000e+01 : f32
    %374 = vector.broadcast %cst_136 : f32 to vector<2x1xf32>
    %375 = arith.divf %373, %374 : vector<2x1xf32>
    %376 = vector.broadcast %368 : vector<2x1xf32> to vector<2x32xf32>
    %377 = arith.subf %364, %376 : vector<2x32xf32>
    %cst_137 = arith.constant 9.99999974E-6 : f32
    %378 = vector.broadcast %cst_137 : f32 to vector<2x1xf32>
    %379 = arith.addf %375, %378 : vector<2x1xf32>
    %380 = math.rsqrt %379 : vector<2x1xf32>
    %381 = vector.broadcast %380 : vector<2x1xf32> to vector<2x32xf32>
    %382 = arith.mulf %377, %381 : vector<2x32xf32>
    %383 = vector.broadcast %279 : vector<1x32xf32> to vector<2x32xf32>
    %384 = arith.mulf %382, %383 : vector<2x32xf32>
    %385 = vector.broadcast %280 : vector<1x32xf32> to vector<2x32xf32>
    %386 = arith.addf %384, %385 : vector<2x32xf32>
    %c3 = arith.constant 3 : index
    %c0_138 = arith.constant 0 : index
    %c0_139 = arith.constant 0 : index
    %387 = vector.load %arg10[%c3, %c0_138, %c0_139] : memref<4x6x32xf32, #tpu.memory_space<vmem>>, vector<1x6x32xf32>
    %388 = vector.shape_cast %387 : vector<1x6x32xf32> to vector<6x32xf32>
    %389 = vector.extract_strided_slice %388 {offsets = [0, 0], sizes = [1, 32], strides = [1, 1]} : vector<6x32xf32> to vector<1x32xf32>
    %390 = vector.extract_strided_slice %388 {offsets = [1, 0], sizes = [1, 32], strides = [1, 1]} : vector<6x32xf32> to vector<1x32xf32>
    %391 = vector.extract_strided_slice %388 {offsets = [2, 0], sizes = [1, 32], strides = [1, 1]} : vector<6x32xf32> to vector<1x32xf32>
    %392 = vector.extract_strided_slice %388 {offsets = [3, 0], sizes = [1, 32], strides = [1, 1]} : vector<6x32xf32> to vector<1x32xf32>
    %393 = vector.extract_strided_slice %388 {offsets = [4, 0], sizes = [1, 32], strides = [1, 1]} : vector<6x32xf32> to vector<1x32xf32>
    %394 = vector.extract_strided_slice %388 {offsets = [5, 0], sizes = [1, 32], strides = [1, 1]} : vector<6x32xf32> to vector<1x32xf32>
    %395 = arith.truncf %386 : vector<2x32xf32> to vector<2x32xbf16>
    %c3_140 = arith.constant 3 : index
    %c0_141 = arith.constant 0 : index
    %c0_142 = arith.constant 0 : index
    %396 = vector.load %arg4[%c3_140, %c0_141, %c0_142] : memref<4x32x96xbf16, #tpu.memory_space<vmem>>, vector<1x32x96xbf16>
    %397 = vector.shape_cast %396 : vector<1x32x96xbf16> to vector<32x96xbf16>
    %cst_143 = arith.constant dense<0.000000e+00> : vector<2x96xf32>
    %398 = tpu.matmul %395, %397, %cst_143 {dimension_numbers = #tpu.dot_dimension_numbers<[1], [0], [0], [1], [0, 0, 1, 1], [], []>} : vector<2x32xbf16>, vector<32x96xbf16>, vector<2x96xf32> -> vector<2x96xf32>
    %c3_144 = arith.constant 3 : index
    %c0_145 = arith.constant 0 : index
    %c0_146 = arith.constant 0 : index
    %399 = vector.load %arg5[%c3_144, %c0_145, %c0_146] : memref<4x1x96xf32, #tpu.memory_space<vmem>>, vector<1x1x96xf32>
    %400 = vector.shape_cast %399 : vector<1x1x96xf32> to vector<1x96xf32>
    %401 = vector.broadcast %400 : vector<1x96xf32> to vector<2x96xf32>
    %402 = arith.addf %398, %401 : vector<2x96xf32>
    %403 = vector.extract_strided_slice %402 {offsets = [0, 0], sizes = [2, 32], strides = [1, 1]} : vector<2x96xf32> to vector<2x32xf32>
    %404 = vector.extract_strided_slice %402 {offsets = [0, 32], sizes = [2, 32], strides = [1, 1]} : vector<2x96xf32> to vector<2x32xf32>
    %405 = vector.extract_strided_slice %402 {offsets = [0, 64], sizes = [2, 32], strides = [1, 1]} : vector<2x96xf32> to vector<2x32xf32>
    %406 = vector.shape_cast %403 : vector<2x32xf32> to vector<1x2x32xf32>
    %407 = vector.broadcast %406 : vector<1x2x32xf32> to vector<8x2x32xf32>
    %408 = vector.broadcast %44 : vector<8x1x32xf32> to vector<8x2x32xf32>
    %409 = arith.mulf %407, %408 : vector<8x2x32xf32>
    %410 = vector.shape_cast %404 : vector<2x32xf32> to vector<1x2x32xf32>
    %411 = vector.shape_cast %410 : vector<1x2x32xf32> to vector<1x2x32xf32>
    %412 = vector.broadcast %411 : vector<1x2x32xf32> to vector<8x2x32xf32>
    %413 = vector.shape_cast %405 : vector<2x32xf32> to vector<1x2x32xf32>
    %414 = vector.shape_cast %413 : vector<1x2x32xf32> to vector<1x2x32xf32>
    %415 = vector.broadcast %414 : vector<1x2x32xf32> to vector<8x2x32xf32>
    "tpu.trace_start"() <{level = 10 : i32, message = "hid,hjd->hij"}> : () -> ()
    %cst_147 = arith.constant dense<0.000000e+00> : vector<8x2x2xf32>
    %416 = tpu.matmul %409, %412, %cst_147 {dimension_numbers = #tpu.dot_dimension_numbers<[2], [2], [1], [1], [0, 0, 0, 1, 1, 1], [0], [0]>} : vector<8x2x32xf32>, vector<8x2x32xf32>, vector<8x2x2xf32> -> vector<8x2x2xf32>
    "tpu.trace_stop"() : () -> ()
    %cst_148 = arith.constant 5.000000e-01 : f32
    %417 = vector.broadcast %cst_148 : f32 to vector<8x2x2xf32>
    %418 = arith.mulf %416, %417 : vector<8x2x2xf32>
    %cst_149 = arith.constant dense<0xFF800000> : vector<8x2xf32>
    %419 = vector.multi_reduction <maximumf>, %418, %cst_149 [2] : vector<8x2x2xf32> to vector<8x2xf32>
    %420 = vector.shape_cast %419 : vector<8x2xf32> to vector<8x2x1xf32>
    %421 = vector.broadcast %420 : vector<8x2x1xf32> to vector<8x2x2xf32>
    %422 = arith.subf %418, %421 : vector<8x2x2xf32>
    %423 = math.exp %422 : vector<8x2x2xf32>
    %cst_150 = arith.constant dense<0.000000e+00> : vector<8x2xf32>
    %424 = vector.multi_reduction <add>, %423, %cst_150 [2] : vector<8x2x2xf32> to vector<8x2xf32>
    %425 = vector.shape_cast %424 : vector<8x2xf32> to vector<8x2x1xf32>
    %426 = tpu.reciprocal %425 {approx = true} : vector<8x2x1xf32> -> vector<8x2x1xf32>
    %427 = vector.broadcast %426 : vector<8x2x1xf32> to vector<8x2x2xf32>
    %428 = arith.mulf %423, %427 : vector<8x2x2xf32>
    "tpu.trace_start"() <{level = 10 : i32, message = "hij,hjd->hid"}> : () -> ()
    %cst_151 = arith.constant dense<0.000000e+00> : vector<8x2x32xf32>
    %429 = tpu.matmul %428, %415, %cst_151 {dimension_numbers = #tpu.dot_dimension_numbers<[2], [1], [1], [2], [0, 0, 0, 1, 1, 2], [0], [0]>} : vector<8x2x2xf32>, vector<8x2x32xf32>, vector<8x2x32xf32> -> vector<8x2x32xf32>
    "tpu.trace_stop"() : () -> ()
    %430 = vector.broadcast %44 : vector<8x1x32xf32> to vector<8x2x32xf32>
    %431 = arith.mulf %429, %430 : vector<8x2x32xf32>
    %cst_152 = arith.constant dense<0.000000e+00> : vector<2x32xf32>
    %432 = vector.multi_reduction <add>, %431, %cst_152 [0] : vector<8x2x32xf32> to vector<2x32xf32>
    %433 = arith.truncf %432 : vector<2x32xf32> to vector<2x32xbf16>
    %c3_153 = arith.constant 3 : index
    %c0_154 = arith.constant 0 : index
    %c0_155 = arith.constant 0 : index
    %434 = vector.load %arg6[%c3_153, %c0_154, %c0_155] : memref<4x32x32xbf16, #tpu.memory_space<vmem>>, vector<1x32x32xbf16>
    %435 = vector.shape_cast %434 : vector<1x32x32xbf16> to vector<32x32xbf16>
    %cst_156 = arith.constant dense<0.000000e+00> : vector<2x32xf32>
    %436 = tpu.matmul %433, %435, %cst_156 {dimension_numbers = #tpu.dot_dimension_numbers<[1], [0], [0], [1], [0, 0, 1, 1], [], []>} : vector<2x32xbf16>, vector<32x32xbf16>, vector<2x32xf32> -> vector<2x32xf32>
    %437 = vector.broadcast %389 : vector<1x32xf32> to vector<2x32xf32>
    %438 = arith.addf %436, %437 : vector<2x32xf32>
    %439 = arith.addf %386, %438 : vector<2x32xf32>
    %cst_157 = arith.constant dense<0.000000e+00> : vector<2xf32>
    %440 = vector.multi_reduction <add>, %439, %cst_157 [1] : vector<2x32xf32> to vector<2xf32>
    %441 = vector.shape_cast %440 : vector<2xf32> to vector<2x1xf32>
    %cst_158 = arith.constant 3.200000e+01 : f32
    %442 = vector.broadcast %cst_158 : f32 to vector<2x1xf32>
    %443 = arith.divf %441, %442 : vector<2x1xf32>
    %444 = vector.broadcast %443 : vector<2x1xf32> to vector<2x32xf32>
    %445 = arith.subf %439, %444 : vector<2x32xf32>
    %446 = arith.mulf %445, %445 : vector<2x32xf32>
    %cst_159 = arith.constant dense<0.000000e+00> : vector<2xf32>
    %447 = vector.multi_reduction <add>, %446, %cst_159 [1] : vector<2x32xf32> to vector<2xf32>
    %448 = vector.shape_cast %447 : vector<2xf32> to vector<2x1xf32>
    %cst_160 = arith.constant 3.200000e+01 : f32
    %449 = vector.broadcast %cst_160 : f32 to vector<2x1xf32>
    %450 = arith.divf %448, %449 : vector<2x1xf32>
    %451 = vector.broadcast %443 : vector<2x1xf32> to vector<2x32xf32>
    %452 = arith.subf %439, %451 : vector<2x32xf32>
    %cst_161 = arith.constant 9.99999974E-6 : f32
    %453 = vector.broadcast %cst_161 : f32 to vector<2x1xf32>
    %454 = arith.addf %450, %453 : vector<2x1xf32>
    %455 = math.rsqrt %454 : vector<2x1xf32>
    %456 = vector.broadcast %455 : vector<2x1xf32> to vector<2x32xf32>
    %457 = arith.mulf %452, %456 : vector<2x32xf32>
    %458 = vector.broadcast %390 : vector<1x32xf32> to vector<2x32xf32>
    %459 = arith.mulf %457, %458 : vector<2x32xf32>
    %460 = vector.broadcast %391 : vector<1x32xf32> to vector<2x32xf32>
    %461 = arith.addf %459, %460 : vector<2x32xf32>
    %462 = arith.truncf %461 : vector<2x32xf32> to vector<2x32xbf16>
    %c3_162 = arith.constant 3 : index
    %c0_163 = arith.constant 0 : index
    %c0_164 = arith.constant 0 : index
    %463 = vector.load %arg7[%c3_162, %c0_163, %c0_164] : memref<4x32x128xbf16, #tpu.memory_space<vmem>>, vector<1x32x128xbf16>
    %464 = vector.shape_cast %463 : vector<1x32x128xbf16> to vector<32x128xbf16>
    %cst_165 = arith.constant dense<0.000000e+00> : vector<2x128xf32>
    %465 = tpu.matmul %462, %464, %cst_165 {dimension_numbers = #tpu.dot_dimension_numbers<[1], [0], [0], [1], [0, 0, 1, 1], [], []>} : vector<2x32xbf16>, vector<32x128xbf16>, vector<2x128xf32> -> vector<2x128xf32>
    %c3_166 = arith.constant 3 : index
    %c0_167 = arith.constant 0 : index
    %c0_168 = arith.constant 0 : index
    %466 = vector.load %arg8[%c3_166, %c0_167, %c0_168] : memref<4x1x128xf32, #tpu.memory_space<vmem>>, vector<1x1x128xf32>
    %467 = vector.shape_cast %466 : vector<1x1x128xf32> to vector<1x128xf32>
    %468 = vector.broadcast %467 : vector<1x128xf32> to vector<2x128xf32>
    %469 = arith.addf %465, %468 : vector<2x128xf32>
    %cst_169 = arith.constant 0.000000e+00 : f32
    %470 = vector.broadcast %cst_169 : f32 to vector<2x128xf32>
    %471 = arith.maximumf %469, %470 : vector<2x128xf32>
    %472 = arith.truncf %471 : vector<2x128xf32> to vector<2x128xbf16>
    %c3_170 = arith.constant 3 : index
    %c0_171 = arith.constant 0 : index
    %c0_172 = arith.constant 0 : index
    %473 = vector.load %arg9[%c3_170, %c0_171, %c0_172] : memref<4x128x32xbf16, #tpu.memory_space<vmem>>, vector<1x128x32xbf16>
    %474 = vector.shape_cast %473 : vector<1x128x32xbf16> to vector<128x32xbf16>
    %cst_173 = arith.constant dense<0.000000e+00> : vector<2x32xf32>
    %475 = tpu.matmul %472, %474, %cst_173 {dimension_numbers = #tpu.dot_dimension_numbers<[1], [0], [0], [1], [0, 0, 1, 1], [], []>} : vector<2x128xbf16>, vector<128x32xbf16>, vector<2x32xf32> -> vector<2x32xf32>
    %476 = vector.broadcast %392 : vector<1x32xf32> to vector<2x32xf32>
    %477 = arith.addf %475, %476 : vector<2x32xf32>
    %478 = arith.addf %461, %477 : vector<2x32xf32>
    %cst_174 = arith.constant dense<0.000000e+00> : vector<2xf32>
    %479 = vector.multi_reduction <add>, %478, %cst_174 [1] : vector<2x32xf32> to vector<2xf32>
    %480 = vector.shape_cast %479 : vector<2xf32> to vector<2x1xf32>
    %cst_175 = arith.constant 3.200000e+01 : f32
    %481 = vector.broadcast %cst_175 : f32 to vector<2x1xf32>
    %482 = arith.divf %480, %481 : vector<2x1xf32>
    %483 = vector.broadcast %482 : vector<2x1xf32> to vector<2x32xf32>
    %484 = arith.subf %478, %483 : vector<2x32xf32>
    %485 = arith.mulf %484, %484 : vector<2x32xf32>
    %cst_176 = arith.constant dense<0.000000e+00> : vector<2xf32>
    %486 = vector.multi_reduction <add>, %485, %cst_176 [1] : vector<2x32xf32> to vector<2xf32>
    %487 = vector.shape_cast %486 : vector<2xf32> to vector<2x1xf32>
    %cst_177 = arith.constant 3.200000e+01 : f32
    %488 = vector.broadcast %cst_177 : f32 to vector<2x1xf32>
    %489 = arith.divf %487, %488 : vector<2x1xf32>
    %490 = vector.broadcast %482 : vector<2x1xf32> to vector<2x32xf32>
    %491 = arith.subf %478, %490 : vector<2x32xf32>
    %cst_178 = arith.constant 9.99999974E-6 : f32
    %492 = vector.broadcast %cst_178 : f32 to vector<2x1xf32>
    %493 = arith.addf %489, %492 : vector<2x1xf32>
    %494 = math.rsqrt %493 : vector<2x1xf32>
    %495 = vector.broadcast %494 : vector<2x1xf32> to vector<2x32xf32>
    %496 = arith.mulf %491, %495 : vector<2x32xf32>
    %497 = vector.broadcast %393 : vector<1x32xf32> to vector<2x32xf32>
    %498 = arith.mulf %496, %497 : vector<2x32xf32>
    %499 = vector.broadcast %394 : vector<1x32xf32> to vector<2x32xf32>
    %500 = arith.addf %498, %499 : vector<2x32xf32>
    %501 = arith.truncf %500 : vector<2x32xf32> to vector<2x32xbf16>
    %c1_179 = arith.constant 1 : index
    %c0_180 = arith.constant 0 : index
    %c0_181 = arith.constant 0 : index
    %502 = vector.load %arg2[%c1_179, %c0_180, %c0_181] : memref<2x32x32xbf16, #tpu.memory_space<vmem>>, vector<1x32x32xbf16>
    %503 = vector.shape_cast %502 : vector<1x32x32xbf16> to vector<32x32xbf16>
    %cst_182 = arith.constant dense<0.000000e+00> : vector<2x32xf32>
    %504 = tpu.matmul %501, %503, %cst_182 {dimension_numbers = #tpu.dot_dimension_numbers<[1], [0], [0], [1], [0, 0, 1, 1], [], []>} : vector<2x32xbf16>, vector<32x32xbf16>, vector<2x32xf32> -> vector<2x32xf32>
    %505 = vector.broadcast %23 : vector<1x32xf32> to vector<2x32xf32>
    %506 = arith.addf %504, %505 : vector<2x32xf32>
    %cst_183 = arith.constant dense<0.000000e+00> : vector<2xf32>
    %507 = vector.multi_reduction <add>, %506, %cst_183 [1] : vector<2x32xf32> to vector<2xf32>
    %508 = vector.shape_cast %507 : vector<2xf32> to vector<2x1xf32>
    %cst_184 = arith.constant 3.200000e+01 : f32
    %509 = vector.broadcast %cst_184 : f32 to vector<2x1xf32>
    %510 = arith.divf %508, %509 : vector<2x1xf32>
    %511 = vector.broadcast %510 : vector<2x1xf32> to vector<2x32xf32>
    %512 = arith.subf %506, %511 : vector<2x32xf32>
    %513 = arith.mulf %512, %512 : vector<2x32xf32>
    %cst_185 = arith.constant dense<0.000000e+00> : vector<2xf32>
    %514 = vector.multi_reduction <add>, %513, %cst_185 [1] : vector<2x32xf32> to vector<2xf32>
    %515 = vector.shape_cast %514 : vector<2xf32> to vector<2x1xf32>
    %cst_186 = arith.constant 3.200000e+01 : f32
    %516 = vector.broadcast %cst_186 : f32 to vector<2x1xf32>
    %517 = arith.divf %515, %516 : vector<2x1xf32>
    %518 = vector.broadcast %510 : vector<2x1xf32> to vector<2x32xf32>
    %519 = arith.subf %506, %518 : vector<2x32xf32>
    %cst_187 = arith.constant 9.99999974E-6 : f32
    %520 = vector.broadcast %cst_187 : f32 to vector<2x1xf32>
    %521 = arith.addf %517, %520 : vector<2x1xf32>
    %522 = math.rsqrt %521 : vector<2x1xf32>
    %523 = vector.broadcast %522 : vector<2x1xf32> to vector<2x32xf32>
    %524 = arith.mulf %519, %523 : vector<2x32xf32>
    %525 = vector.broadcast %24 : vector<1x32xf32> to vector<2x32xf32>
    %526 = arith.mulf %524, %525 : vector<2x32xf32>
    %527 = vector.broadcast %25 : vector<1x32xf32> to vector<2x32xf32>
    %528 = arith.addf %526, %527 : vector<2x32xf32>
    %c0_188 = arith.constant 0 : index
    %c0_189 = arith.constant 0 : index
    %529 = vector.load %arg11[%c0_188, %c0_189] : memref<2x32xf32, #tpu.memory_space<vmem>>, vector<2x32xf32>
    tpu.vector_store %arg11[%c0_188, %c0_189], %528 {strides = array<i32>} : memref<2x32xf32, #tpu.memory_space<vmem>>, vector<2x32xf32>,
    return
  }
}

</mosaic_0001>

<llo_original>
// kernel: lcm_forward.1
$region0: #{lcm_forward.1}
  #allocation0 [shape = 'u32[]', space=smem, size = 0x4, offset = 0x4, fixed_abs, tag = 'smem constant byte address 0x4 - core index']
  #allocation1 [shape = 'u32[72,128]{1,0:T(1,128)}', space=vmem, size = 0x9000, scoped, tag = 'internal scratch']
  %s0 = inlined_call_operand.vmem [shape: s32[2,8,1], index: 0, kind: input, shape index: {}]
  %s1 = inlined_call_operand.vmem [shape: f32[64,32], index: 1, kind: input, shape index: {}]
  %s2 = inlined_call_operand.vmem [shape: bf16[2,32,32], index: 2, kind: input, shape index: {}]
  %s3 = inlined_call_operand.vmem [shape: f32[4,32], index: 3, kind: input, shape index: {}]
  %s4 = inlined_call_operand.vmem [shape: bf16[4,32,96], index: 4, kind: input, shape index: {}]
  %s5 = inlined_call_operand.vmem [shape: f32[4,1,96], index: 5, kind: input, shape index: {}]
  %s6 = inlined_call_operand.vmem [shape: bf16[4,32,32], index: 6, kind: input, shape index: {}]
  %s7 = inlined_call_operand.vmem [shape: bf16[4,32,128], index: 7, kind: input, shape index: {}]
  %s8 = inlined_call_operand.vmem [shape: f32[4,1,128], index: 8, kind: input, shape index: {}]
  %s9 = inlined_call_operand.vmem [shape: bf16[4,128,32], index: 9, kind: input, shape index: {}]
  %s10 = inlined_call_operand.vmem [shape: f32[4,6,32], index: 10, kind: input, shape index: {}]
  %s11 = inlined_call_operand.hbm [shape: f32[2,32], index: 11, kind: output, shape index: {}]
  %s12 = sld [smem:[#allocation0]]
  $region54: #{lcm_forward.1} parent=0
    _
  %s14 = ssub.s32 1, %s12
  %s15 = scalar_select 0, %s14, %s12
  $region1: #{lcm_forward.1} parent=0
    #allocation2 [shape = 'u8[1024]{0}', space=vmem, size = 0x400, scoped, tag = 'output window, operand 0, single buffered']
    #allocation3 [shape = 's32[1]{0}', space=sflag, size = 0x4, scoped, tag = 'scoped memory for lcm_forward.1']
    %16 = vsyncpa [#allocation3], 0
    // Predicated region
    $region2: #{lcm_forward.1} parent=1 // pred_check
      _
    $region3: #{lcm_forward.1} parent=1 // pred_check_branch
      %18 = sbr.rel (0) target = $region5
    $region4: #{lcm_forward.1} parent=1 // pred_region
      _
    $region5: #{lcm_forward.1} parent=1 // pred_fallthru
      _
    // Predicated region
    $region6: #{lcm_forward.1} parent=1 // pred_check
      _
    $region7: #{lcm_forward.1} parent=1 // pred_check_branch
      %20 = sbr.rel (0) target = $region9
    $region8: #{lcm_forward.1} parent=1 // pred_region
      _
    $region9: #{lcm_forward.1} parent=1 // pred_fallthru
      _
    // Predicated region
    $region10: #{lcm_forward.1} parent=1 // pred_check
      _
    $region11: #{lcm_forward.1} parent=1 // pred_check_branch
      %22 = sbr.rel (0) target = $region13
    $region12: #{lcm_forward.1} parent=1 // pred_region
      _
    $region13: #{lcm_forward.1} parent=1 // pred_fallthru
      _
    // Predicated region
    $region14: #{lcm_forward.1} parent=1 // pred_check
      _
    $region15: #{lcm_forward.1} parent=1 // pred_check_branch
      %24 = sbr.rel (0) target = $region17
    $region16: #{lcm_forward.1} parent=1 // pred_region
      _
    $region17: #{lcm_forward.1} parent=1 // pred_fallthru
      _
    // Predicated region
    $region18: #{lcm_forward.1} parent=1 // pred_check
      _
    $region19: #{lcm_forward.1} parent=1 // pred_check_branch
      %26 = sbr.rel (0) target = $region21
    $region20: #{lcm_forward.1} parent=1 // pred_region
      _
    $region21: #{lcm_forward.1} parent=1 // pred_fallthru
      _
    // Predicated region
    $region22: #{lcm_forward.1} parent=1 // pred_check
      _
    $region23: #{lcm_forward.1} parent=1 // pred_check_branch
      %28 = sbr.rel (0) target = $region25
    $region24: #{lcm_forward.1} parent=1 // pred_region
      _
    $region25: #{lcm_forward.1} parent=1 // pred_fallthru
      _
    // Predicated region
    $region26: #{lcm_forward.1} parent=1 // pred_check
      _
    $region27: #{lcm_forward.1} parent=1 // pred_check_branch
      %30 = sbr.rel (0) target = $region29
    $region28: #{lcm_forward.1} parent=1 // pred_region
      _
    $region29: #{lcm_forward.1} parent=1 // pred_fallthru
      _
    // Predicated region
    $region30: #{lcm_forward.1} parent=1 // pred_check
      _
    $region31: #{lcm_forward.1} parent=1 // pred_check_branch
      %32 = sbr.rel (0) target = $region33
    $region32: #{lcm_forward.1} parent=1 // pred_region
      _
    $region33: #{lcm_forward.1} parent=1 // pred_fallthru
      _
    // Predicated region
    $region34: #{lcm_forward.1} parent=1 // pred_check
      _
    $region35: #{lcm_forward.1} parent=1 // pred_check_branch
      %34 = sbr.rel (0) target = $region37
    $region36: #{lcm_forward.1} parent=1 // pred_region
      _
    $region37: #{lcm_forward.1} parent=1 // pred_fallthru
      _
    // Predicated region
    $region38: #{lcm_forward.1} parent=1 // pred_check
      _
    $region39: #{lcm_forward.1} parent=1 // pred_check_branch
      %36 = sbr.rel (0) target = $region41
    $region40: #{lcm_forward.1} parent=1 // pred_region
      _
    $region41: #{lcm_forward.1} parent=1 // pred_fallthru
      _
    // Predicated region
    $region42: #{lcm_forward.1} parent=1 // pred_check
      _
    $region43: #{lcm_forward.1} parent=1 // pred_check_branch
      %38 = sbr.rel (0) target = $region45
    $region44: #{lcm_forward.1} parent=1 // pred_region
      _
    $region45: #{lcm_forward.1} parent=1 // pred_fallthru
      _
    %v40 = vld [vmem:[%s0] sm:$0xff]
    %v41 = vld [vmem:[%s0 + $0x8] sm:$0xff]
    %v42 = vld [vmem:[%s1] sm:$0xff]
    %v43 = vld [vmem:[%s1 + $0x8] sm:$0xff]
    %v44 = vld [vmem:[%s1 + $0x10] sm:$0xff]
    %v45 = vld [vmem:[%s1 + $0x18] sm:$0xff]
    %v46 = vld [vmem:[%s1 + $0x20] sm:$0xff]
    %v47 = vld [vmem:[%s1 + $0x28] sm:$0xff]
    %v48 = vld [vmem:[%s1 + $0x30] sm:$0xff]
    %v49 = vld [vmem:[%s1 + $0x38] sm:$0xff]
    %vm50 = vcmp.ne.s32.totalorder %v40, 0
    %vm51 = vcmp.ne.s32.totalorder %v41, 0
    %v52 = vsel %vm50, 1, 0
    %v53 = vsel %vm51, 1, 0
    %v54 = vcvt.s32.f32 %v52
    %v55 = vcvt.s32.f32 %v53
    %v56 = vlaneseq
    %v57 = vand.u32 %v56, 127
    %58 = vset.pattern.permute.xlu0 0
    %59 = vperm.xlu0 %58, %v40
    %v60 = vpop.permute.xlu0 %59
    %61 = vset.pattern.permute.xlu0 0
    %62 = vperm.xlu0 %61, %v41
    %v63 = vpop.permute.xlu0 %62
    %vm64 = vcmp.eq.s32.totalorder %v60, %v57
    %vm65 = vcmp.eq.s32.totalorder %v63, %v57
    %v66 = vsel %vm64, 1, 0
    %v67 = vsel %vm65, 1, 0
    %v68 = vcvt.s32.f32 %v66
    %v69 = vcvt.s32.f32 %v67
    %71 = vset.pattern.permute.xlu0 0
    %72 = vperm.xlu0 %71, %v54
    %v73 = vpop.permute.xlu0 %72
    %76 = vset.pattern.permute.xlu0 0
    %77 = vperm.xlu0 %76, %v55
    %v78 = vpop.permute.xlu0 %77
    %v80 = vmul.f32 %v68, %v73
    %v81 = vmul.f32 %v69, %v78
    %vm82 = vcmask 523264
    %v83 = vsel %vm82, %v80, 0.0
    %v84 = vrot.slane %v83, 4
    %v85 = vadd.f32 %v83, %v84
    %v86 = vrot.slane %v85, 2
    %v87 = vadd.f32 %v85, %v86
    %v88 = vrot.slane %v87, 1
    %v89 = vadd.f32 %v87, %v88
    %v90 = vsel %vm82, %v81, 0.0
    %v91 = vrot.slane %v90, 4
    %v92 = vadd.f32 %v90, %v91
    %v93 = vrot.slane %v92, 2
    %v94 = vadd.f32 %v92, %v93
    %v95 = vrot.slane %v94, 1
    %v96 = vadd.f32 %v94, %v95
    %vm99 = vcmask 1041409
    %v100 = vsel %vm99, %v96, %v89
    %v101 = vsel %vm82, %v100, 0
    %103 = vmatpush.msra.mxu0 0.0
    %104 = vmatpush.msra.mxu0 0.0
    %105 = vmatpush.msra.mxu0 0.0
    %106 = vmatpush.msra.mxu0 0.0
    %107 = vmatpush.msra.mxu0 0.0
    %108 = vmatpush.msra.mxu0 0.0
    %109 = vmatpush.msra.mxu0 0.0
    %110 = vmatpush.msra.mxu0 0.0
    %111 = vmatpush.msra.mxu0 %v49
    %112 = vmatpush.msra.mxu0 %v48
    %113 = vmatpush.msra.mxu0 %v47
    %114 = vmatpush.msra.mxu0 %v46
    %115 = vmatpush.msra.mxu0 %v45
    %116 = vmatpush.msra.mxu0 %v44
    %117 = vmatpush.msra.mxu0 %v43
    %118 = vmatpush.msra.mxu0 %v42
    %119 = vmatmul.f32.gmra.mxu0 %v101
    %v120 = vpop.f32.mrf.mxu0
    %v121 = vadd.f32 0.0, %v120
    %122 = vdwg.mxu0
    %vm123 = vcmask 7168
    %v124 = vsel %vm123, %v54, 0.0
    %v125 = vrot.slane %v124, 4
    %v126 = vadd.f32 %v124, %v125
    %v127 = vrot.slane %v126, 2
    %v128 = vadd.f32 %v126, %v127
    %v129 = vrot.slane %v128, 1
    %v130 = vadd.f32 %v128, %v129
    %v131 = vsel %vm123, %v55, 0.0
    %v132 = vrot.slane %v131, 4
    %v133 = vadd.f32 %v131, %v132
    %v134 = vrot.slane %v133, 2
    %v135 = vadd.f32 %v133, %v134
    %v136 = vrot.slane %v135, 1
    %v137 = vadd.f32 %v135, %v136
    %v138 = vmax.f32 %v130, 1e-09
    %v139 = vmax.f32 %v137, 1e-09
    %v140 = vrcp.pop %v138
    %v141 = vrcp.pop %v139
    %143 = vset.pattern.permute.xlu0 0
    %144 = vperm.xlu0 %143, %v140
    %v145 = vpop.permute.xlu0 %144
    %147 = vset.pattern.permute.xlu0 0
    %148 = vperm.xlu0 %147, %v141
    %v149 = vpop.permute.xlu0 %148
    %v150 = vsel %vm99, %v149, %v145
    %v152 = vmul.f32 %v121, %v150
    %v153 = vld [vmem:[%s3] sm:$0xf]
    %v154 = vpack.c.bf16 %v152, %v152
    %v155 = vld [vmem:[%s2] sm:$0xf]
    %v156 = vld [vmem:[%s2 + $0x4] sm:$0xf]
    %v157 = vld [vmem:[%s2 + $0x8] sm:$0xf]
    %v158 = vld [vmem:[%s2 + $0xc] sm:$0xf]
    %v159 = vperm.slane %v153, 0
    %v164 = vunpack.c.l.b16 %v155
    %v165 = vunpack.c.l.b16 %v156
    %v166 = vunpack.c.l.b16 %v157
    %v167 = vunpack.c.l.b16 %v158
    %v168 = vpack.c.b16 %v165, %v164
    %v169 = vpack.c.b16 %v167, %v166
    %vm172 = vcmask 261120
    %v174 = vsel %vm172, %v154, 0
    %176 = vmatpush.bf16.msra.mxu0 0
    %177 = vmatpush.bf16.msra.mxu0 0
    %178 = vmatpush.bf16.msra.mxu0 0
    %179 = vmatpush.bf16.msra.mxu0 0
    %180 = vmatpush.bf16.msra.mxu0 0
    %181 = vmatpush.bf16.msra.mxu0 0
    %182 = vmatpush.bf16.msra.mxu0 %v169
    %183 = vmatpush.bf16.msra.mxu0 %v168
    %184 = vmatmul.bf16.gmra.mxu0 %v174
    %v185 = vpop.f32.mrf.mxu0
    %v186 = vadd.f32 %v159, %v185
    %v187 = vpop.f32.mrf.mxu0
    %188 = vdwg.mxu0
    %vm189 = vcmp.ge.s32.totalorder %v57, 0
    %vm190 = vcmp.ge.s32.totalorder %v57, 4
    %vm191 = vcmp.ge.s32.totalorder %v57, 8
    %vm192 = vcmp.ge.s32.totalorder %v57, 12
    %vm193 = vcmp.ge.s32.totalorder %v57, 16
    %vm194 = vcmp.ge.s32.totalorder %v57, 20
    %vm195 = vcmp.ge.s32.totalorder %v57, 24
    %vm196 = vcmp.ge.s32.totalorder %v57, 28
    %vm197 = vcmp.lt.s32.totalorder %v57, 4
    %vm198 = vcmp.lt.s32.totalorder %v57, 8
    %vm199 = vcmp.lt.s32.totalorder %v57, 12
    %vm200 = vcmp.lt.s32.totalorder %v57, 16
    %vm201 = vcmp.lt.s32.totalorder %v57, 20
    %vm202 = vcmp.lt.s32.totalorder %v57, 24
    %vm203 = vcmp.lt.s32.totalorder %v57, 28
    %vm204 = vcmp.lt.s32.totalorder %v57, 32
    %vm205 = vmand %vm189, %vm197
    %vm206 = vmand %vm190, %vm198
    %vm207 = vmand %vm191, %vm199
    %vm208 = vmand %vm192, %vm200
    %vm209 = vmand %vm193, %vm201
    %vm210 = vmand %vm194, %vm202
    %vm211 = vmand %vm195, %vm203
    %vm212 = vmand %vm196, %vm204
    %v213 = vsel %vm205, 1, 0
    %v214 = vsel %vm206, 1, 0
    %v215 = vsel %vm207, 1, 0
    %v216 = vsel %vm208, 1, 0
    %v217 = vsel %vm209, 1, 0
    %v218 = vsel %vm210, 1, 0
    %v219 = vsel %vm211, 1, 0
    %v220 = vsel %vm212, 1, 0
    %v221 = vcvt.s32.f32 %v213
    %v222 = vcvt.s32.f32 %v214
    %v223 = vcvt.s32.f32 %v215
    %v224 = vcvt.s32.f32 %v216
    %v225 = vcvt.s32.f32 %v217
    %v226 = vcvt.s32.f32 %v218
    %v227 = vcvt.s32.f32 %v219
    %v228 = vcvt.s32.f32 %v220
    %v229 = vld [vmem:[%s10] sm:$0x3f]
    %v230 = vpack.c.bf16 %v186, %v186
    %v231 = vld [vmem:[%s4] sm:$0xf]
    %v232 = vld [vmem:[%s4 + $0x4] sm:$0xf]
    %v233 = vld [vmem:[%s4 + $0x8] sm:$0xf]
    %v234 = vld [vmem:[%s4 + $0xc] sm:$0xf]
    %v235 = vld [vmem:[%s5] sm:$0x1]
    %v237 = vperm.slane %v235, 0
    %v243 = vunpack.c.l.b16 %v231
    %v244 = vunpack.c.l.b16 %v232
    %v245 = vunpack.c.l.b16 %v233
    %v246 = vunpack.c.l.b16 %v234
    %v247 = vpack.c.b16 %v244, %v243
    %v248 = vpack.c.b16 %v246, %v245
    %v252 = vsel %vm172, %v230, 0
    %254 = vmatpush.bf16.msra.mxu0 0
    %255 = vmatpush.bf16.msra.mxu0 0
    %256 = vmatpush.bf16.msra.mxu0 0
    %257 = vmatpush.bf16.msra.mxu0 0
    %258 = vmatpush.bf16.msra.mxu0 0
    %259 = vmatpush.bf16.msra.mxu0 0
    %260 = vmatpush.bf16.msra.mxu0 %v248
    %261 = vmatpush.bf16.msra.mxu0 %v247
    %262 = vmatmul.bf16.gmra.mxu0 %v252
    %v263 = vpop.f32.mrf.mxu0
    %v264 = vadd.f32 %v237, %v263
    %v265 = vpop.f32.mrf.mxu0
    %266 = vdwg.mxu0
    %v267 = vmul.f32 %v264, %v221
    %v268 = vmul.f32 %v264, %v222
    %v269 = vmul.f32 %v264, %v223
    %v270 = vmul.f32 %v264, %v224
    %v271 = vmul.f32 %v264, %v225
    %v272 = vmul.f32 %v264, %v226
    %v273 = vmul.f32 %v264, %v227
    %v274 = vmul.f32 %v264, %v228
    %276 = vrot.lane.b32.xlu0 %v264, 96
    %v277 = vpop.permute.xlu0 %276
    %v279 = vsel %vm172, %v267, 0
    %v281 = vsel %vm172, %v277, 0
    %283 = vmatpush.xpose.msra.mxu0 0.0
    %284 = vmatpush.xpose.msra.mxu0 0.0
    %285 = vmatpush.xpose.msra.mxu0 0.0
    %286 = vmatpush.xpose.msra.mxu0 0.0
    %287 = vmatpush.xpose.msra.mxu0 0.0
    %288 = vmatpush.xpose.msra.mxu0 0.0
    %289 = vmatpush.xpose.msra.mxu0 0.0
    %290 = vmatpush.xpose.msra.mxu0 0.0
    %291 = vmatpush.xpose.msra.mxu0 0.0
    %292 = vmatpush.xpose.msra.mxu0 0.0
    %293 = vmatpush.xpose.msra.mxu0 0.0
    %294 = vmatpush.xpose.msra.mxu0 0.0
    %295 = vmatpush.xpose.msra.mxu0 0.0
    %296 = vmatpush.xpose.msra.mxu0 0.0
    %297 = vmatpush.xpose.msra.mxu0 0.0
    %298 = vmatpush.xpose.msra.mxu0 %v281
    %299 = vmatmul.f32.gmra.mxu0 %v279
    %v300 = vpop.f32.mrf.mxu0
    %v301 = vadd.f32 0.0, %v300
    %302 = vdwg.mxu0
    %v304 = vsel %vm172, %v268, 0
    %306 = vmatpush.xpose.msra.mxu0 0.0
    %307 = vmatpush.xpose.msra.mxu0 0.0
    %308 = vmatpush.xpose.msra.mxu0 0.0
    %309 = vmatpush.xpose.msra.mxu0 0.0
    %310 = vmatpush.xpose.msra.mxu0 0.0
    %311 = vmatpush.xpose.msra.mxu0 0.0
    %312 = vmatpush.xpose.msra.mxu0 0.0
    %313 = vmatpush.xpose.msra.mxu0 0.0
    %314 = vmatpush.xpose.msra.mxu0 0.0
    %315 = vmatpush.xpose.msra.mxu0 0.0
    %316 = vmatpush.xpose.msra.mxu0 0.0
    %317 = vmatpush.xpose.msra.mxu0 0.0
    %318 = vmatpush.xpose.msra.mxu0 0.0
    %319 = vmatpush.xpose.msra.mxu0 0.0
    %320 = vmatpush.xpose.msra.mxu0 0.0
    %321 = vmatpush.xpose.msra.mxu0 %v281
    %322 = vmatmul.f32.gmra.mxu0 %v304
    %v323 = vpop.f32.mrf.mxu0
    %v324 = vadd.f32 0.0, %v323
    %325 = vdwg.mxu0
    %v327 = vsel %vm172, %v269, 0
    %329 = vmatpush.xpose.msra.mxu0 0.0
    %330 = vmatpush.xpose.msra.mxu0 0.0
    %331 = vmatpush.xpose.msra.mxu0 0.0
    %332 = vmatpush.xpose.msra.mxu0 0.0
    %333 = vmatpush.xpose.msra.mxu0 0.0
    %334 = vmatpush.xpose.msra.mxu0 0.0
    %335 = vmatpush.xpose.msra.mxu0 0.0
    %336 = vmatpush.xpose.msra.mxu0 0.0
    %337 = vmatpush.xpose.msra.mxu0 0.0
    %338 = vmatpush.xpose.msra.mxu0 0.0
    %339 = vmatpush.xpose.msra.mxu0 0.0
    %340 = vmatpush.xpose.msra.mxu0 0.0
    %341 = vmatpush.xpose.msra.mxu0 0.0
    %342 = vmatpush.xpose.msra.mxu0 0.0
    %343 = vmatpush.xpose.msra.mxu0 0.0
    %344 = vmatpush.xpose.msra.mxu0 %v281
    %345 = vmatmul.f32.gmra.mxu0 %v327
    %v346 = vpop.f32.mrf.mxu0
    %v347 = vadd.f32 0.0, %v346
    %348 = vdwg.mxu0
    %v350 = vsel %vm172, %v270, 0
    %352 = vmatpush.xpose.msra.mxu0 0.0
    %353 = vmatpush.xpose.msra.mxu0 0.0
    %354 = vmatpush.xpose.msra.mxu0 0.0
    %355 = vmatpush.xpose.msra.mxu0 0.0
    %356 = vmatpush.xpose.msra.mxu0 0.0
    %357 = vmatpush.xpose.msra.mxu0 0.0
    %358 = vmatpush.xpose.msra.mxu0 0.0
    %359 = vmatpush.xpose.msra.mxu0 0.0
    %360 = vmatpush.xpose.msra.mxu0 0.0
    %361 = vmatpush.xpose.msra.mxu0 0.0
    %362 = vmatpush.xpose.msra.mxu0 0.0
    %363 = vmatpush.xpose.msra.mxu0 0.0
    %364 = vmatpush.xpose.msra.mxu0 0.0
    %365 = vmatpush.xpose.msra.mxu0 0.0
    %366 = vmatpush.xpose.msra.mxu0 0.0
    %367 = vmatpush.xpose.msra.mxu0 %v281
    %368 = vmatmul.f32.gmra.mxu0 %v350
    %v369 = vpop.f32.mrf.mxu0
    %v370 = vadd.f32 0.0, %v369
    %371 = vdwg.mxu0
    %v373 = vsel %vm172, %v271, 0
    %375 = vmatpush.xpose.msra.mxu0 0.0
    %376 = vmatpush.xpose.msra.mxu0 0.0
    %377 = vmatpush.xpose.msra.mxu0 0.0
    %378 = vmatpush.xpose.msra.mxu0 0.0
    %379 = vmatpush.xpose.msra.mxu0 0.0
    %380 = vmatpush.xpose.msra.mxu0 0.0
    %381 = vmatpush.xpose.msra.mxu0 0.0
    %382 = vmatpush.xpose.msra.mxu0 0.0
    %383 = vmatpush.xpose.msra.mxu0 0.0
    %384 = vmatpush.xpose.msra.mxu0 0.0
    %385 = vmatpush.xpose.msra.mxu0 0.0
    %386 = vmatpush.xpose.msra.mxu0 0.0
    %387 = vmatpush.xpose.msra.mxu0 0.0
    %388 = vmatpush.xpose.msra.mxu0 0.0
    %389 = vmatpush.xpose.msra.mxu0 0.0
    %390 = vmatpush.xpose.msra.mxu0 %v281
    %391 = vmatmul.f32.gmra.mxu0 %v373
    %v392 = vpop.f32.mrf.mxu0
    %v393 = vadd.f32 0.0, %v392
    %394 = vdwg.mxu0
    %v396 = vsel %vm172, %v272, 0
    %398 = vmatpush.xpose.msra.mxu0 0.0
    %399 = vmatpush.xpose.msra.mxu0 0.0
    %400 = vmatpush.xpose.msra.mxu0 0.0
    %401 = vmatpush.xpose.msra.mxu0 0.0
    %402 = vmatpush.xpose.msra.mxu0 0.0
    %403 = vmatpush.xpose.msra.mxu0 0.0
    %404 = vmatpush.xpose.msra.mxu0 0.0
    %405 = vmatpush.xpose.msra.mxu0 0.0
    %406 = vmatpush.xpose.msra.mxu0 0.0
    %407 = vmatpush.xpose.msra.mxu0 0.0
    %408 = vmatpush.xpose.msra.mxu0 0.0
    %409 = vmatpush.xpose.msra.mxu0 0.0
    %410 = vmatpush.xpose.msra.mxu0 0.0
    %411 = vmatpush.xpose.msra.mxu0 0.0
    %412 = vmatpush.xpose.msra.mxu0 0.0
    %413 = vmatpush.xpose.msra.mxu0 %v281
    %414 = vmatmul.f32.gmra.mxu0 %v396
    %v415 = vpop.f32.mrf.mxu0
    %v416 = vadd.f32 0.0, %v415
    %417 = vdwg.mxu0
    %v419 = vsel %vm172, %v273, 0
    %421 = vmatpush.xpose.msra.mxu0 0.0
    %422 = vmatpush.xpose.msra.mxu0 0.0
    %423 = vmatpush.xpose.msra.mxu0 0.0
    %424 = vmatpush.xpose.msra.mxu0 0.0
    %425 = vmatpush.xpose.msra.mxu0 0.0
    %426 = vmatpush.xpose.msra.mxu0 0.0
    %427 = vmatpush.xpose.msra.mxu0 0.0
    %428 = vmatpush.xpose.msra.mxu0 0.0
    %429 = vmatpush.xpose.msra.mxu0 0.0
    %430 = vmatpush.xpose.msra.mxu0 0.0
    %431 = vmatpush.xpose.msra.mxu0 0.0
    %432 = vmatpush.xpose.msra.mxu0 0.0
    %433 = vmatpush.xpose.msra.mxu0 0.0
    %434 = vmatpush.xpose.msra.mxu0 0.0
    %435 = vmatpush.xpose.msra.mxu0 0.0
    %436 = vmatpush.xpose.msra.mxu0 %v281
    %437 = vmatmul.f32.gmra.mxu0 %v419
    %v438 = vpop.f32.mrf.mxu0
    %v439 = vadd.f32 0.0, %v438
    %440 = vdwg.mxu0
    %v442 = vsel %vm172, %v274, 0
    %444 = vmatpush.xpose.msra.mxu0 0.0
    %445 = vmatpush.xpose.msra.mxu0 0.0
    %446 = vmatpush.xpose.msra.mxu0 0.0
    %447 = vmatpush.xpose.msra.mxu0 0.0
    %448 = vmatpush.xpose.msra.mxu0 0.0
    %449 = vmatpush.xpose.msra.mxu0 0.0
    %450 = vmatpush.xpose.msra.mxu0 0.0
    %451 = vmatpush.xpose.msra.mxu0 0.0
    %452 = vmatpush.xpose.msra.mxu0 0.0
    %453 = vmatpush.xpose.msra.mxu0 0.0
    %454 = vmatpush.xpose.msra.mxu0 0.0
    %455 = vmatpush.xpose.msra.mxu0 0.0
    %456 = vmatpush.xpose.msra.mxu0 0.0
    %457 = vmatpush.xpose.msra.mxu0 0.0
    %458 = vmatpush.xpose.msra.mxu0 0.0
    %459 = vmatpush.xpose.msra.mxu0 %v281
    %460 = vmatmul.f32.gmra.mxu0 %v442
    %v461 = vpop.f32.mrf.mxu0
    %v462 = vadd.f32 0.0, %v461
    %463 = vdwg.mxu0
    %v464 = vmul.f32 %v301, 0.5
    %v465 = vmul.f32 %v324, 0.5
    %v466 = vmul.f32 %v347, 0.5
    %v467 = vmul.f32 %v370, 0.5
    %v468 = vmul.f32 %v393, 0.5
    %v469 = vmul.f32 %v416, 0.5
    %v470 = vmul.f32 %v439, 0.5
    %v471 = vmul.f32 %v462, 0.5
    %vm472 = vcmask 9216
    %v473 = vsel %vm472, %v464, -inf
    %474 = vmax.xlane.f32.xlu0 %v473
    %v475 = vpop.xlane.xlu0 %474
    %v476 = vsel %vm472, %v465, -inf
    %477 = vmax.xlane.f32.xlu0 %v476
    %v478 = vpop.xlane.xlu0 %477
    %v479 = vsel %vm472, %v466, -inf
    %480 = vmax.xlane.f32.xlu0 %v479
    %v481 = vpop.xlane.xlu0 %480
    %v482 = vsel %vm472, %v467, -inf
    %483 = vmax.xlane.f32.xlu0 %v482
    %v484 = vpop.xlane.xlu0 %483
    %v485 = vsel %vm472, %v468, -inf
    %486 = vmax.xlane.f32.xlu0 %v485
    %v487 = vpop.xlane.xlu0 %486
    %v488 = vsel %vm472, %v469, -inf
    %489 = vmax.xlane.f32.xlu0 %v488
    %v490 = vpop.xlane.xlu0 %489
    %v491 = vsel %vm472, %v470, -inf
    %492 = vmax.xlane.f32.xlu0 %v491
    %v493 = vpop.xlane.xlu0 %492
    %v494 = vsel %vm472, %v471, -inf
    %495 = vmax.xlane.f32.xlu0 %v494
    %v496 = vpop.xlane.xlu0 %495
    %v497 = vsub.f32 %v464, %v475
    %v498 = vsub.f32 %v465, %v478
    %v499 = vsub.f32 %v466, %v481
    %v500 = vsub.f32 %v467, %v484
    %v501 = vsub.f32 %v468, %v487
    %v502 = vsub.f32 %v469, %v490
    %v503 = vsub.f32 %v470, %v493
    %v504 = vsub.f32 %v471, %v496
    %v505 = vmul.f32 %v497, 1.442695
    %v506 = vpow.pop %v505
    %v507 = vmul.f32 %v498, 1.442695
    %v508 = vpow.pop %v507
    %v509 = vmul.f32 %v499, 1.442695
    %v510 = vpow.pop %v509
    %v511 = vmul.f32 %v500, 1.442695
    %v512 = vpow.pop %v511
    %v513 = vmul.f32 %v501, 1.442695
    %v514 = vpow.pop %v513
    %v515 = vmul.f32 %v502, 1.442695
    %v516 = vpow.pop %v515
    %v517 = vmul.f32 %v503, 1.442695
    %v518 = vpow.pop %v517
    %v519 = vmul.f32 %v504, 1.442695
    %v520 = vpow.pop %v519
    %v521 = vsel %vm472, %v506, 0.0
    %522 = vadd.xlane.f32.xlu0 %v521
    %v523 = vpop.xlane.xlu0 %522
    %v524 = vsel %vm472, %v508, 0.0
    %525 = vadd.xlane.f32.xlu0 %v524
    %v526 = vpop.xlane.xlu0 %525
    %v527 = vsel %vm472, %v510, 0.0
    %528 = vadd.xlane.f32.xlu0 %v527
    %v529 = vpop.xlane.xlu0 %528
    %v530 = vsel %vm472, %v512, 0.0
    %531 = vadd.xlane.f32.xlu0 %v530
    %v532 = vpop.xlane.xlu0 %531
    %v533 = vsel %vm472, %v514, 0.0
    %534 = vadd.xlane.f32.xlu0 %v533
    %v535 = vpop.xlane.xlu0 %534
    %v536 = vsel %vm472, %v516, 0.0
    %537 = vadd.xlane.f32.xlu0 %v536
    %v538 = vpop.xlane.xlu0 %537
    %v539 = vsel %vm472, %v518, 0.0
    %540 = vadd.xlane.f32.xlu0 %v539
    %v541 = vpop.xlane.xlu0 %540
    %v542 = vsel %vm472, %v520, 0.0
    %543 = vadd.xlane.f32.xlu0 %v542
    %v544 = vpop.xlane.xlu0 %543
    %v545 = vrcp.pop %v523
    %v546 = vrcp.pop %v526
    %v547 = vrcp.pop %v529
    %v548 = vrcp.pop %v532
    %v549 = vrcp.pop %v535
    %v550 = vrcp.pop %v538
    %v551 = vrcp.pop %v541
    %v552 = vrcp.pop %v544
    %v553 = vmul.f32 %v506, %v545
    %v554 = vmul.f32 %v508, %v546
    %v555 = vmul.f32 %v510, %v547
    %v556 = vmul.f32 %v512, %v548
    %v557 = vmul.f32 %v514, %v549
    %v558 = vmul.f32 %v516, %v550
    %v559 = vmul.f32 %v518, %v551
    %v560 = vmul.f32 %v520, %v552
    %561 = vrot.lane.b32.xlu0 %v264, 64
    %v562 = vpop.permute.xlu0 %561
    %vm563 = vcmask 15360
    %v565 = vsel %vm563, %v553, 0
    %vm567 = vcmask 1041408
    %v568 = vsel %vm567, %v562, 0
    %570 = vmatpush.msra.mxu0 0.0
    %571 = vmatpush.msra.mxu0 0.0
    %572 = vmatpush.msra.mxu0 0.0
    %573 = vmatpush.msra.mxu0 0.0
    %574 = vmatpush.msra.mxu0 0.0
    %575 = vmatpush.msra.mxu0 0.0
    %576 = vmatpush.msra.mxu0 0.0
    %577 = vmatpush.msra.mxu0 0.0
    %578 = vmatpush.msra.mxu0 0.0
    %579 = vmatpush.msra.mxu0 0.0
    %580 = vmatpush.msra.mxu0 0.0
    %581 = vmatpush.msra.mxu0 0.0
    %582 = vmatpush.msra.mxu0 0.0
    %583 = vmatpush.msra.mxu0 0.0
    %584 = vmatpush.msra.mxu0 0.0
    %585 = vmatpush.msra.mxu0 %v568
    %586 = vmatmul.f32.gmra.mxu0 %v565
    %v587 = vpop.f32.mrf.mxu0
    %v588 = vadd.f32 0.0, %v587
    %589 = vdwg.mxu0
    %v591 = vsel %vm563, %v554, 0
    %593 = vmatpush.msra.mxu0 0.0
    %594 = vmatpush.msra.mxu0 0.0
    %595 = vmatpush.msra.mxu0 0.0
    %596 = vmatpush.msra.mxu0 0.0
    %597 = vmatpush.msra.mxu0 0.0
    %598 = vmatpush.msra.mxu0 0.0
    %599 = vmatpush.msra.mxu0 0.0
    %600 = vmatpush.msra.mxu0 0.0
    %601 = vmatpush.msra.mxu0 0.0
    %602 = vmatpush.msra.mxu0 0.0
    %603 = vmatpush.msra.mxu0 0.0
    %604 = vmatpush.msra.mxu0 0.0
    %605 = vmatpush.msra.mxu0 0.0
    %606 = vmatpush.msra.mxu0 0.0
    %607 = vmatpush.msra.mxu0 0.0
    %608 = vmatpush.msra.mxu0 %v568
    %609 = vmatmul.f32.gmra.mxu0 %v591
    %v610 = vpop.f32.mrf.mxu0
    %v611 = vadd.f32 0.0, %v610
    %612 = vdwg.mxu0
    %v614 = vsel %vm563, %v555, 0
    %616 = vmatpush.msra.mxu0 0.0
    %617 = vmatpush.msra.mxu0 0.0
    %618 = vmatpush.msra.mxu0 0.0
    %619 = vmatpush.msra.mxu0 0.0
    %620 = vmatpush.msra.mxu0 0.0
    %621 = vmatpush.msra.mxu0 0.0
    %622 = vmatpush.msra.mxu0 0.0
    %623 = vmatpush.msra.mxu0 0.0
    %624 = vmatpush.msra.mxu0 0.0
    %625 = vmatpush.msra.mxu0 0.0
    %626 = vmatpush.msra.mxu0 0.0
    %627 = vmatpush.msra.mxu0 0.0
    %628 = vmatpush.msra.mxu0 0.0
    %629 = vmatpush.msra.mxu0 0.0
    %630 = vmatpush.msra.mxu0 0.0
    %631 = vmatpush.msra.mxu0 %v568
    %632 = vmatmul.f32.gmra.mxu0 %v614
    %v633 = vpop.f32.mrf.mxu0
    %v634 = vadd.f32 0.0, %v633
    %635 = vdwg.mxu0
    %v637 = vsel %vm563, %v556, 0
    %639 = vmatpush.msra.mxu0 0.0
    %640 = vmatpush.msra.mxu0 0.0
    %641 = vmatpush.msra.mxu0 0.0
    %642 = vmatpush.msra.mxu0 0.0
    %643 = vmatpush.msra.mxu0 0.0
    %644 = vmatpush.msra.mxu0 0.0
    %645 = vmatpush.msra.mxu0 0.0
    %646 = vmatpush.msra.mxu0 0.0
    %647 = vmatpush.msra.mxu0 0.0
    %648 = vmatpush.msra.mxu0 0.0
    %649 = vmatpush.msra.mxu0 0.0
    %650 = vmatpush.msra.mxu0 0.0
    %651 = vmatpush.msra.mxu0 0.0
    %652 = vmatpush.msra.mxu0 0.0
    %653 = vmatpush.msra.mxu0 0.0
    %654 = vmatpush.msra.mxu0 %v568
    %655 = vmatmul.f32.gmra.mxu0 %v637
    %v656 = vpop.f32.mrf.mxu0
    %v657 = vadd.f32 0.0, %v656
    %658 = vdwg.mxu0
    %v660 = vsel %vm563, %v557, 0
    %662 = vmatpush.msra.mxu0 0.0
    %663 = vmatpush.msra.mxu0 0.0
    %664 = vmatpush.msra.mxu0 0.0
    %665 = vmatpush.msra.mxu0 0.0
    %666 = vmatpush.msra.mxu0 0.0
    %667 = vmatpush.msra.mxu0 0.0
    %668 = vmatpush.msra.mxu0 0.0
    %669 = vmatpush.msra.mxu0 0.0
    %670 = vmatpush.msra.mxu0 0.0
    %671 = vmatpush.msra.mxu0 0.0
    %672 = vmatpush.msra.mxu0 0.0
    %673 = vmatpush.msra.mxu0 0.0
    %674 = vmatpush.msra.mxu0 0.0
    %675 = vmatpush.msra.mxu0 0.0
    %676 = vmatpush.msra.mxu0 0.0
    %677 = vmatpush.msra.mxu0 %v568
    %678 = vmatmul.f32.gmra.mxu0 %v660
    %v679 = vpop.f32.mrf.mxu0
    %v680 = vadd.f32 0.0, %v679
    %681 = vdwg.mxu0
    %v683 = vsel %vm563, %v558, 0
    %685 = vmatpush.msra.mxu0 0.0
    %686 = vmatpush.msra.mxu0 0.0
    %687 = vmatpush.msra.mxu0 0.0
    %688 = vmatpush.msra.mxu0 0.0
    %689 = vmatpush.msra.mxu0 0.0
    %690 = vmatpush.msra.mxu0 0.0
    %691 = vmatpush.msra.mxu0 0.0
    %692 = vmatpush.msra.mxu0 0.0
    %693 = vmatpush.msra.mxu0 0.0
    %694 = vmatpush.msra.mxu0 0.0
    %695 = vmatpush.msra.mxu0 0.0
    %696 = vmatpush.msra.mxu0 0.0
    %697 = vmatpush.msra.mxu0 0.0
    %698 = vmatpush.msra.mxu0 0.0
    %699 = vmatpush.msra.mxu0 0.0
    %700 = vmatpush.msra.mxu0 %v568
    %701 = vmatmul.f32.gmra.mxu0 %v683
    %v702 = vpop.f32.mrf.mxu0
    %v703 = vadd.f32 0.0, %v702
    %704 = vdwg.mxu0
    %v706 = vsel %vm563, %v559, 0
    %708 = vmatpush.msra.mxu0 0.0
    %709 = vmatpush.msra.mxu0 0.0
    %710 = vmatpush.msra.mxu0 0.0
    %711 = vmatpush.msra.mxu0 0.0
    %712 = vmatpush.msra.mxu0 0.0
    %713 = vmatpush.msra.mxu0 0.0
    %714 = vmatpush.msra.mxu0 0.0
    %715 = vmatpush.msra.mxu0 0.0
    %716 = vmatpush.msra.mxu0 0.0
    %717 = vmatpush.msra.mxu0 0.0
    %718 = vmatpush.msra.mxu0 0.0
    %719 = vmatpush.msra.mxu0 0.0
    %720 = vmatpush.msra.mxu0 0.0
    %721 = vmatpush.msra.mxu0 0.0
    %722 = vmatpush.msra.mxu0 0.0
    %723 = vmatpush.msra.mxu0 %v568
    %724 = vmatmul.f32.gmra.mxu0 %v706
    %v725 = vpop.f32.mrf.mxu0
    %v726 = vadd.f32 0.0, %v725
    %727 = vdwg.mxu0
    %v729 = vsel %vm563, %v560, 0
    %731 = vmatpush.msra.mxu0 0.0
    %732 = vmatpush.msra.mxu0 0.0
    %733 = vmatpush.msra.mxu0 0.0
    %734 = vmatpush.msra.mxu0 0.0
    %735 = vmatpush.msra.mxu0 0.0
    %736 = vmatpush.msra.mxu0 0.0
    %737 = vmatpush.msra.mxu0 0.0
    %738 = vmatpush.msra.mxu0 0.0
    %739 = vmatpush.msra.mxu0 0.0
    %740 = vmatpush.msra.mxu0 0.0
    %741 = vmatpush.msra.mxu0 0.0
    %742 = vmatpush.msra.mxu0 0.0
    %743 = vmatpush.msra.mxu0 0.0
    %744 = vmatpush.msra.mxu0 0.0
    %745 = vmatpush.msra.mxu0 0.0
    %746 = vmatpush.msra.mxu0 %v568
    %747 = vmatmul.f32.gmra.mxu0 %v729
    %v748 = vpop.f32.mrf.mxu0
    %v749 = vadd.f32 0.0, %v748
    %750 = vdwg.mxu0
    %v751 = vmul.f32 %v588, %v221
    %v752 = vmul.f32 %v611, %v222
    %v753 = vmul.f32 %v634, %v223
    %v754 = vmul.f32 %v657, %v224
    %v755 = vmul.f32 %v680, %v225
    %v756 = vmul.f32 %v703, %v226
    %v757 = vmul.f32 %v726, %v227
    %v758 = vmul.f32 %v749, %v228
    %vm759 = vcmask 254976
    %v760 = vsel %vm759, %v751, 0.0
    %v761 = vsel %vm759, %v752, 0.0
    %v762 = vadd.f32 %v760, %v761
    %v763 = vsel %vm759, %v753, 0.0
    %v764 = vadd.f32 %v762, %v763
    %v765 = vsel %vm759, %v754, 0.0
    %v766 = vadd.f32 %v764, %v765
    %v767 = vsel %vm759, %v755, 0.0
    %v768 = vadd.f32 %v766, %v767
    %v769 = vsel %vm759, %v756, 0.0
    %v770 = vadd.f32 %v768, %v769
    %v771 = vsel %vm759, %v757, 0.0
    %v772 = vadd.f32 %v770, %v771
    %v773 = vsel %vm759, %v758, 0.0
    %v774 = vadd.f32 %v772, %v773
    %v775 = vpack.c.bf16 %v774, %v774
    %v776 = vld [vmem:[%s6] sm:$0xf]
    %v777 = vld [vmem:[%s6 + $0x4] sm:$0xf]
    %v778 = vld [vmem:[%s6 + $0x8] sm:$0xf]
    %v779 = vld [vmem:[%s6 + $0xc] sm:$0xf]
    %v780 = vperm.slane %v229, 0
    %v785 = vunpack.c.l.b16 %v776
    %v786 = vunpack.c.l.b16 %v777
    %v787 = vunpack.c.l.b16 %v778
    %v788 = vunpack.c.l.b16 %v779
    %v789 = vpack.c.b16 %v786, %v785
    %v790 = vpack.c.b16 %v788, %v787
    %v794 = vsel %vm172, %v775, 0
    %796 = vmatpush.bf16.msra.mxu0 0
    %797 = vmatpush.bf16.msra.mxu0 0
    %798 = vmatpush.bf16.msra.mxu0 0
    %799 = vmatpush.bf16.msra.mxu0 0
    %800 = vmatpush.bf16.msra.mxu0 0
    %801 = vmatpush.bf16.msra.mxu0 0
    %802 = vmatpush.bf16.msra.mxu0 %v790
    %803 = vmatpush.bf16.msra.mxu0 %v789
    %804 = vmatmul.bf16.gmra.mxu0 %v794
    %v805 = vpop.f32.mrf.mxu0
    %v806 = vadd.f32 %v780, %v805
    %v807 = vpop.f32.mrf.mxu0
    %808 = vdwg.mxu0
    %v809 = vadd.f32 %v186, %v806
    %v810 = vsel %vm759, %v809, 0.0
    %811 = vadd.xlane.f32.xlu0 %v810
    %v812 = vpop.xlane.xlu0 %811
    %v813 = vrcp.pop 32.0
    %v814 = vmul.f32 32.0, %v813
    %v815 = vsub.f32 1.0, %v814
    %v816 = vmul.f32 %v813, %v815
    %v817 = vadd.f32 %v813, %v816
    %vm818 = vweird.f32 %v813
    %v819 = vsel %vm818, %v813, %v817
    %v820 = vmul.f32 %v812, %v819
    %v821 = vsub.f32 %v809, %v820
    %v822 = vmul.f32 %v821, %v821
    %v823 = vsel %vm759, %v822, 0.0
    %824 = vadd.xlane.f32.xlu0 %v823
    %v825 = vpop.xlane.xlu0 %824
    %v826 = vmul.f32 %v825, %v819
    %v827 = vadd.f32 %v826, 1e-05
    %v828 = vrsqrt.pop %v827
    %v829 = vmul.f32 %v828, %v827
    %v830 = vmul.f32 %v829, %v828
    %v831 = vmul.f32 0.5, %v830
    %v832 = vsub.f32 1.5, %v831
    %v833 = vmul.f32 %v828, %v832
    %vm834 = vweird.f32 %v827
    %vm835 = vweird.f32 %v828
    %vm836 = vmor %vm834, %vm835
    %v837 = vsel %vm836, %v828, %v833
    %v838 = vmul.f32 %v821, %v837
    %v839 = vperm.slane %v229, 1
    %v840 = vmul.f32 %v838, %v839
    %v841 = vperm.slane %v229, 2
    %v842 = vadd.f32 %v840, %v841
    %v843 = vpack.c.bf16 %v842, %v842
    %v844 = vld [vmem:[%s7] sm:$0xf]
    %v845 = vld [vmem:[%s7 + $0x4] sm:$0xf]
    %v846 = vld [vmem:[%s7 + $0x8] sm:$0xf]
    %v847 = vld [vmem:[%s7 + $0xc] sm:$0xf]
    %v848 = vld [vmem:[%s8] sm:$0x1]
    %v850 = vperm.slane %v848, 0
    %v856 = vunpack.c.l.b16 %v844
    %v857 = vunpack.c.l.b16 %v845
    %v858 = vunpack.c.l.b16 %v846
    %v859 = vunpack.c.l.b16 %v847
    %v860 = vpack.c.b16 %v857, %v856
    %v861 = vpack.c.b16 %v859, %v858
    %v865 = vsel %vm172, %v843, 0
    %867 = vmatpush.bf16.msra.mxu0 0
    %868 = vmatpush.bf16.msra.mxu0 0
    %869 = vmatpush.bf16.msra.mxu0 0
    %870 = vmatpush.bf16.msra.mxu0 0
    %871 = vmatpush.bf16.msra.mxu0 0
    %872 = vmatpush.bf16.msra.mxu0 0
    %873 = vmatpush.bf16.msra.mxu0 %v861
    %874 = vmatpush.bf16.msra.mxu0 %v860
    %875 = vmatmul.bf16.gmra.mxu0 %v865
    %v876 = vpop.f32.mrf.mxu0
    %v877 = vadd.f32 %v850, %v876
    %v878 = vpop.f32.mrf.mxu0
    %879 = vdwg.mxu0
    %v880 = vmax.f32 %v877, 0.0
    %v881 = vpack.c.bf16 %v880, %v880
    %v882 = vld [vmem:[%s9] sm:$0xf]
    %v883 = vld [vmem:[%s9 + $0x4] sm:$0xf]
    %v884 = vld [vmem:[%s9 + $0x8] sm:$0xf]
    %v885 = vld [vmem:[%s9 + $0xc] sm:$0xf]
    %v886 = vld [vmem:[%s9 + $0x10] sm:$0xf]
    %v887 = vld [vmem:[%s9 + $0x14] sm:$0xf]
    %v888 = vld [vmem:[%s9 + $0x18] sm:$0xf]
    %v889 = vld [vmem:[%s9 + $0x1c] sm:$0xf]
    %v890 = vld [vmem:[%s9 + $0x20] sm:$0xf]
    %v891 = vld [vmem:[%s9 + $0x24] sm:$0xf]
    %v892 = vld [vmem:[%s9 + $0x28] sm:$0xf]
    %v893 = vld [vmem:[%s9 + $0x2c] sm:$0xf]
    %v894 = vld [vmem:[%s9 + $0x30] sm:$0xf]
    %v895 = vld [vmem:[%s9 + $0x34] sm:$0xf]
    %v896 = vld [vmem:[%s9 + $0x38] sm:$0xf]
    %v897 = vld [vmem:[%s9 + $0x3c] sm:$0xf]
    %v898 = vperm.slane %v229, 3
    %v915 = vunpack.c.l.b16 %v882
    %v916 = vunpack.c.l.b16 %v883
    %v917 = vunpack.c.l.b16 %v884
    %v918 = vunpack.c.l.b16 %v885
    %v919 = vunpack.c.l.b16 %v886
    %v920 = vunpack.c.l.b16 %v887
    %v921 = vunpack.c.l.b16 %v888
    %v922 = vunpack.c.l.b16 %v889
    %v923 = vunpack.c.l.b16 %v890
    %v924 = vunpack.c.l.b16 %v891
    %v925 = vunpack.c.l.b16 %v892
    %v926 = vunpack.c.l.b16 %v893
    %v927 = vunpack.c.l.b16 %v894
    %v928 = vunpack.c.l.b16 %v895
    %v929 = vunpack.c.l.b16 %v896
    %v930 = vunpack.c.l.b16 %v897
    %v931 = vpack.c.b16 %v916, %v915
    %v932 = vpack.c.b16 %v918, %v917
    %v933 = vpack.c.b16 %v920, %v919
    %v934 = vpack.c.b16 %v922, %v921
    %v935 = vpack.c.b16 %v924, %v923
    %v936 = vpack.c.b16 %v926, %v925
    %v937 = vpack.c.b16 %v928, %v927
    %v938 = vpack.c.b16 %v930, %v929
    %947 = vmatpush.bf16.msra.mxu0 %v938
    %948 = vmatpush.bf16.msra.mxu0 %v937
    %949 = vmatpush.bf16.msra.mxu0 %v936
    %950 = vmatpush.bf16.msra.mxu0 %v935
    %951 = vmatpush.bf16.msra.mxu0 %v934
    %952 = vmatpush.bf16.msra.mxu0 %v933
    %953 = vmatpush.bf16.msra.mxu0 %v932
    %954 = vmatpush.bf16.msra.mxu0 %v931
    %955 = vmatmul.bf16.gmra.mxu0 %v881
    %v956 = vpop.f32.mrf.mxu0
    %v957 = vadd.f32 %v898, %v956
    %v958 = vpop.f32.mrf.mxu0
    %959 = vdwg.mxu0
    %v960 = vadd.f32 %v842, %v957
    %v961 = vsel %vm759, %v960, 0.0
    %962 = vadd.xlane.f32.xlu0 %v961
    %v963 = vpop.xlane.xlu0 %962
    %v964 = vmul.f32 %v963, %v819
    %v965 = vsub.f32 %v960, %v964
    %v966 = vmul.f32 %v965, %v965
    %v967 = vsel %vm759, %v966, 0.0
    %968 = vadd.xlane.f32.xlu0 %v967
    %v969 = vpop.xlane.xlu0 %968
    %v970 = vmul.f32 %v969, %v819
    %v971 = vadd.f32 %v970, 1e-05
    %v972 = vrsqrt.pop %v971
    %v973 = vmul.f32 %v972, %v971
    %v974 = vmul.f32 %v973, %v972
    %v975 = vmul.f32 0.5, %v974
    %v976 = vsub.f32 1.5, %v975
    %v977 = vmul.f32 %v972, %v976
    %vm978 = vweird.f32 %v971
    %vm979 = vweird.f32 %v972
    %vm980 = vmor %vm978, %vm979
    %v981 = vsel %vm980, %v972, %v977
    %v982 = vmul.f32 %v965, %v981
    %v983 = vperm.slane %v229, 4
    %v984 = vmul.f32 %v982, %v983
    %v985 = vperm.slane %v229, 5
    %v986 = vadd.f32 %v984, %v985
    %s987 = scalar_lea.vmem %s10, 8
    %v988 = vld [vmem:[%s987] sm:$0x3f]
    %v989 = vpack.c.bf16 %v986, %v986
    %s990 = scalar_lea.vmem %s4, 16
    %v991 = vld [vmem:[%s990] sm:$0xf]
    %v992 = vld [vmem:[%s990 + $0x4] sm:$0xf]
    %v993 = vld [vmem:[%s990 + $0x8] sm:$0xf]
    %v994 = vld [vmem:[%s990 + $0xc] sm:$0xf]
    %s995 = scalar_lea.vmem %s5, 1
    %v996 = vld [vmem:[%s995] sm:$0x1]
    %v998 = vperm.slane %v996, 0
    %v1004 = vunpack.c.l.b16 %v991
    %v1005 = vunpack.c.l.b16 %v992
    %v1006 = vunpack.c.l.b16 %v993
    %v1007 = vunpack.c.l.b16 %v994
    %v1008 = vpack.c.b16 %v1005, %v1004
    %v1009 = vpack.c.b16 %v1007, %v1006
    %v1013 = vsel %vm172, %v989, 0
    %1015 = vmatpush.bf16.msra.mxu0 0
    %1016 = vmatpush.bf16.msra.mxu0 0
    %1017 = vmatpush.bf16.msra.mxu0 0
    %1018 = vmatpush.bf16.msra.mxu0 0
    %1019 = vmatpush.bf16.msra.mxu0 0
    %1020 = vmatpush.bf16.msra.mxu0 0
    %1021 = vmatpush.bf16.msra.mxu0 %v1009
    %1022 = vmatpush.bf16.msra.mxu0 %v1008
    %1023 = vmatmul.bf16.gmra.mxu0 %v1013
    %v1024 = vpop.f32.mrf.mxu0
    %v1025 = vadd.f32 %v998, %v1024
    %v1026 = vpop.f32.mrf.mxu0
    %1027 = vdwg.mxu0
    %v1028 = vmul.f32 %v1025, %v221
    %v1029 = vmul.f32 %v1025, %v222
    %v1030 = vmul.f32 %v1025, %v223
    %v1031 = vmul.f32 %v1025, %v224
    %v1032 = vmul.f32 %v1025, %v225
    %v1033 = vmul.f32 %v1025, %v226
    %v1034 = vmul.f32 %v1025, %v227
    %v1035 = vmul.f32 %v1025, %v228
    %1037 = vrot.lane.b32.xlu0 %v1025, 96
    %v1038 = vpop.permute.xlu0 %1037
    %v1040 = vsel %vm172, %v1028, 0
    %v1042 = vsel %vm172, %v1038, 0
    %1044 = vmatpush.xpose.msra.mxu0 0.0
    %1045 = vmatpush.xpose.msra.mxu0 0.0
    %1046 = vmatpush.xpose.msra.mxu0 0.0
    %1047 = vmatpush.xpose.msra.mxu0 0.0
    %1048 = vmatpush.xpose.msra.mxu0 0.0
    %1049 = vmatpush.xpose.msra.mxu0 0.0
    %1050 = vmatpush.xpose.msra.mxu0 0.0
    %1051 = vmatpush.xpose.msra.mxu0 0.0
    %1052 = vmatpush.xpose.msra.mxu0 0.0
    %1053 = vmatpush.xpose.msra.mxu0 0.0
    %1054 = vmatpush.xpose.msra.mxu0 0.0
    %1055 = vmatpush.xpose.msra.mxu0 0.0
    %1056 = vmatpush.xpose.msra.mxu0 0.0
    %1057 = vmatpush.xpose.msra.mxu0 0.0
    %1058 = vmatpush.xpose.msra.mxu0 0.0
    %1059 = vmatpush.xpose.msra.mxu0 %v1042
    %1060 = vmatmul.f32.gmra.mxu0 %v1040
    %v1061 = vpop.f32.mrf.mxu0
    %v1062 = vadd.f32 0.0, %v1061
    %1063 = vdwg.mxu0
    %v1065 = vsel %vm172, %v1029, 0
    %1067 = vmatpush.xpose.msra.mxu0 0.0
    %1068 = vmatpush.xpose.msra.mxu0 0.0
    %1069 = vmatpush.xpose.msra.mxu0 0.0
    %1070 = vmatpush.xpose.msra.mxu0 0.0
    %1071 = vmatpush.xpose.msra.mxu0 0.0
    %1072 = vmatpush.xpose.msra.mxu0 0.0
    %1073 = vmatpush.xpose.msra.mxu0 0.0
    %1074 = vmatpush.xpose.msra.mxu0 0.0
    %1075 = vmatpush.xpose.msra.mxu0 0.0
    %1076 = vmatpush.xpose.msra.mxu0 0.0
    %1077 = vmatpush.xpose.msra.mxu0 0.0
    %1078 = vmatpush.xpose.msra.mxu0 0.0
    %1079 = vmatpush.xpose.msra.mxu0 0.0
    %1080 = vmatpush.xpose.msra.mxu0 0.0
    %1081 = vmatpush.xpose.msra.mxu0 0.0
    %1082 = vmatpush.xpose.msra.mxu0 %v1042
    %1083 = vmatmul.f32.gmra.mxu0 %v1065
    %v1084 = vpop.f32.mrf.mxu0
    %v1085 = vadd.f32 0.0, %v1084
    %1086 = vdwg.mxu0
    %v1088 = vsel %vm172, %v1030, 0
    %1090 = vmatpush.xpose.msra.mxu0 0.0
    %1091 = vmatpush.xpose.msra.mxu0 0.0
    %1092 = vmatpush.xpose.msra.mxu0 0.0
    %1093 = vmatpush.xpose.msra.mxu0 0.0
    %1094 = vmatpush.xpose.msra.mxu0 0.0
    %1095 = vmatpush.xpose.msra.mxu0 0.0
    %1096 = vmatpush.xpose.msra.mxu0 0.0
    %1097 = vmatpush.xpose.msra.mxu0 0.0
    %1098 = vmatpush.xpose.msra.mxu0 0.0
    %1099 = vmatpush.xpose.msra.mxu0 0.0
    %1100 = vmatpush.xpose.msra.mxu0 0.0
    %1101 = vmatpush.xpose.msra.mxu0 0.0
    %1102 = vmatpush.xpose.msra.mxu0 0.0
    %1103 = vmatpush.xpose.msra.mxu0 0.0
    %1104 = vmatpush.xpose.msra.mxu0 0.0
    %1105 = vmatpush.xpose.msra.mxu0 %v1042
    %1106 = vmatmul.f32.gmra.mxu0 %v1088
    %v1107 = vpop.f32.mrf.mxu0
    %v1108 = vadd.f32 0.0, %v1107
    %1109 = vdwg.mxu0
    %v1111 = vsel %vm172, %v1031, 0
    %1113 = vmatpush.xpose.msra.mxu0 0.0
    %1114 = vmatpush.xpose.msra.mxu0 0.0
    %1115 = vmatpush.xpose.msra.mxu0 0.0
    %1116 = vmatpush.xpose.msra.mxu0 0.0
    %1117 = vmatpush.xpose.msra.mxu0 0.0
    %1118 = vmatpush.xpose.msra.mxu0 0.0
    %1119 = vmatpush.xpose.msra.mxu0 0.0
    %1120 = vmatpush.xpose.msra.mxu0 0.0
    %1121 = vmatpush.xpose.msra.mxu0 0.0
    %1122 = vmatpush.xpose.msra.mxu0 0.0
    %1123 = vmatpush.xpose.msra.mxu0 0.0
    %1124 = vmatpush.xpose.msra.mxu0 0.0
    %1125 = vmatpush.xpose.msra.mxu0 0.0
    %1126 = vmatpush.xpose.msra.mxu0 0.0
    %1127 = vmatpush.xpose.msra.mxu0 0.0
    %1128 = vmatpush.xpose.msra.mxu0 %v1042
    %1129 = vmatmul.f32.gmra.mxu0 %v1111
    %v1130 = vpop.f32.mrf.mxu0
    %v1131 = vadd.f32 0.0, %v1130
    %1132 = vdwg.mxu0
    %v1134 = vsel %vm172, %v1032, 0
    %1136 = vmatpush.xpose.msra.mxu0 0.0
    %1137 = vmatpush.xpose.msra.mxu0 0.0
    %1138 = vmatpush.xpose.msra.mxu0 0.0
    %1139 = vmatpush.xpose.msra.mxu0 0.0
    %1140 = vmatpush.xpose.msra.mxu0 0.0
    %1141 = vmatpush.xpose.msra.mxu0 0.0
    %1142 = vmatpush.xpose.msra.mxu0 0.0
    %1143 = vmatpush.xpose.msra.mxu0 0.0
    %1144 = vmatpush.xpose.msra.mxu0 0.0
    %1145 = vmatpush.xpose.msra.mxu0 0.0
    %1146 = vmatpush.xpose.msra.mxu0 0.0
    %1147 = vmatpush.xpose.msra.mxu0 0.0
    %1148 = vmatpush.xpose.msra.mxu0 0.0
    %1149 = vmatpush.xpose.msra.mxu0 0.0
    %1150 = vmatpush.xpose.msra.mxu0 0.0
    %1151 = vmatpush.xpose.msra.mxu0 %v1042
    %1152 = vmatmul.f32.gmra.mxu0 %v1134
    %v1153 = vpop.f32.mrf.mxu0
    %v1154 = vadd.f32 0.0, %v1153
    %1155 = vdwg.mxu0
    %v1157 = vsel %vm172, %v1033, 0
    %1159 = vmatpush.xpose.msra.mxu0 0.0
    %1160 = vmatpush.xpose.msra.mxu0 0.0
    %1161 = vmatpush.xpose.msra.mxu0 0.0
    %1162 = vmatpush.xpose.msra.mxu0 0.0
    %1163 = vmatpush.xpose.msra.mxu0 0.0
    %1164 = vmatpush.xpose.msra.mxu0 0.0
    %1165 = vmatpush.xpose.msra.mxu0 0.0
    %1166 = vmatpush.xpose.msra.mxu0 0.0
    %1167 = vmatpush.xpose.msra.mxu0 0.0
    %1168 = vmatpush.xpose.msra.mxu0 0.0
    %1169 = vmatpush.xpose.msra.mxu0 0.0
    %1170 = vmatpush.xpose.msra.mxu0 0.0
    %1171 = vmatpush.xpose.msra.mxu0 0.0
    %1172 = vmatpush.xpose.msra.mxu0 0.0
    %1173 = vmatpush.xpose.msra.mxu0 0.0
    %1174 = vmatpush.xpose.msra.mxu0 %v1042
    %1175 = vmatmul.f32.gmra.mxu0 %v1157
    %v1176 = vpop.f32.mrf.mxu0
    %v1177 = vadd.f32 0.0, %v1176
    %1178 = vdwg.mxu0
    %v1180 = vsel %vm172, %v1034, 0
    %1182 = vmatpush.xpose.msra.mxu0 0.0
    %1183 = vmatpush.xpose.msra.mxu0 0.0
    %1184 = vmatpush.xpose.msra.mxu0 0.0
    %1185 = vmatpush.xpose.msra.mxu0 0.0
    %1186 = vmatpush.xpose.msra.mxu0 0.0
    %1187 = vmatpush.xpose.msra.mxu0 0.0
    %1188 = vmatpush.xpose.msra.mxu0 0.0
    %1189 = vmatpush.xpose.msra.mxu0 0.0
    %1190 = vmatpush.xpose.msra.mxu0 0.0
    %1191 = vmatpush.xpose.msra.mxu0 0.0
    %1192 = vmatpush.xpose.msra.mxu0 0.0
    %1193 = vmatpush.xpose.msra.mxu0 0.0
    %1194 = vmatpush.xpose.msra.mxu0 0.0
    %1195 = vmatpush.xpose.msra.mxu0 0.0
    %1196 = vmatpush.xpose.msra.mxu0 0.0
    %1197 = vmatpush.xpose.msra.mxu0 %v1042
    %1198 = vmatmul.f32.gmra.mxu0 %v1180
    %v1199 = vpop.f32.mrf.mxu0
    %v1200 = vadd.f32 0.0, %v1199
    %1201 = vdwg.mxu0
    %v1203 = vsel %vm172, %v1035, 0
    %1205 = vmatpush.xpose.msra.mxu0 0.0
    %1206 = vmatpush.xpose.msra.mxu0 0.0
    %1207 = vmatpush.xpose.msra.mxu0 0.0
    %1208 = vmatpush.xpose.msra.mxu0 0.0
    %1209 = vmatpush.xpose.msra.mxu0 0.0
    %1210 = vmatpush.xpose.msra.mxu0 0.0
    %1211 = vmatpush.xpose.msra.mxu0 0.0
    %1212 = vmatpush.xpose.msra.mxu0 0.0
    %1213 = vmatpush.xpose.msra.mxu0 0.0
    %1214 = vmatpush.xpose.msra.mxu0 0.0
    %1215 = vmatpush.xpose.msra.mxu0 0.0
    %1216 = vmatpush.xpose.msra.mxu0 0.0
    %1217 = vmatpush.xpose.msra.mxu0 0.0
    %1218 = vmatpush.xpose.msra.mxu0 0.0
    %1219 = vmatpush.xpose.msra.mxu0 0.0
    %1220 = vmatpush.xpose.msra.mxu0 %v1042
    %1221 = vmatmul.f32.gmra.mxu0 %v1203
    %v1222 = vpop.f32.mrf.mxu0
    %v1223 = vadd.f32 0.0, %v1222
    %1224 = vdwg.mxu0
    %v1225 = vmul.f32 %v1062, 0.5
    %v1226 = vmul.f32 %v1085, 0.5
    %v1227 = vmul.f32 %v1108, 0.5
    %v1228 = vmul.f32 %v1131, 0.5
    %v1229 = vmul.f32 %v1154, 0.5
    %v1230 = vmul.f32 %v1177, 0.5
    %v1231 = vmul.f32 %v1200, 0.5
    %v1232 = vmul.f32 %v1223, 0.5
    %v1233 = vsel %vm472, %v1225, -inf
    %1234 = vmax.xlane.f32.xlu0 %v1233
    %v1235 = vpop.xlane.xlu0 %1234
    %v1236 = vsel %vm472, %v1226, -inf
    %1237 = vmax.xlane.f32.xlu0 %v1236
    %v1238 = vpop.xlane.xlu0 %1237
    %v1239 = vsel %vm472, %v1227, -inf
    %1240 = vmax.xlane.f32.xlu0 %v1239
    %v1241 = vpop.xlane.xlu0 %1240
    %v1242 = vsel %vm472, %v1228, -inf
    %1243 = vmax.xlane.f32.xlu0 %v1242
    %v1244 = vpop.xlane.xlu0 %1243
    %v1245 = vsel %vm472, %v1229, -inf
    %1246 = vmax.xlane.f32.xlu0 %v1245
    %v1247 = vpop.xlane.xlu0 %1246
    %v1248 = vsel %vm472, %v1230, -inf
    %1249 = vmax.xlane.f32.xlu0 %v1248
    %v1250 = vpop.xlane.xlu0 %1249
    %v1251 = vsel %vm472, %v1231, -inf
    %1252 = vmax.xlane.f32.xlu0 %v1251
    %v1253 = vpop.xlane.xlu0 %1252
    %v1254 = vsel %vm472, %v1232, -inf
    %1255 = vmax.xlane.f32.xlu0 %v1254
    %v1256 = vpop.xlane.xlu0 %1255
    %v1257 = vsub.f32 %v1225, %v1235
    %v1258 = vsub.f32 %v1226, %v1238
    %v1259 = vsub.f32 %v1227, %v1241
    %v1260 = vsub.f32 %v1228, %v1244
    %v1261 = vsub.f32 %v1229, %v1247
    %v1262 = vsub.f32 %v1230, %v1250
    %v1263 = vsub.f32 %v1231, %v1253
    %v1264 = vsub.f32 %v1232, %v1256
    %v1265 = vmul.f32 %v1257, 1.442695
    %v1266 = vpow.pop %v1265
    %v1267 = vmul.f32 %v1258, 1.442695
    %v1268 = vpow.pop %v1267
    %v1269 = vmul.f32 %v1259, 1.442695
    %v1270 = vpow.pop %v1269
    %v1271 = vmul.f32 %v1260, 1.442695
    %v1272 = vpow.pop %v1271
    %v1273 = vmul.f32 %v1261, 1.442695
    %v1274 = vpow.pop %v1273
    %v1275 = vmul.f32 %v1262, 1.442695
    %v1276 = vpow.pop %v1275
    %v1277 = vmul.f32 %v1263, 1.442695
    %v1278 = vpow.pop %v1277
    %v1279 = vmul.f32 %v1264, 1.442695
    %v1280 = vpow.pop %v1279
    %v1281 = vsel %vm472, %v1266, 0.0
    %1282 = vadd.xlane.f32.xlu0 %v1281
    %v1283 = vpop.xlane.xlu0 %1282
    %v1284 = vsel %vm472, %v1268, 0.0
    %1285 = vadd.xlane.f32.xlu0 %v1284
    %v1286 = vpop.xlane.xlu0 %1285
    %v1287 = vsel %vm472, %v1270, 0.0
    %1288 = vadd.xlane.f32.xlu0 %v1287
    %v1289 = vpop.xlane.xlu0 %1288
    %v1290 = vsel %vm472, %v1272, 0.0
    %1291 = vadd.xlane.f32.xlu0 %v1290
    %v1292 = vpop.xlane.xlu0 %1291
    %v1293 = vsel %vm472, %v1274, 0.0
    %1294 = vadd.xlane.f32.xlu0 %v1293
    %v1295 = vpop.xlane.xlu0 %1294
    %v1296 = vsel %vm472, %v1276, 0.0
    %1297 = vadd.xlane.f32.xlu0 %v1296
    %v1298 = vpop.xlane.xlu0 %1297
    %v1299 = vsel %vm472, %v1278, 0.0
    %1300 = vadd.xlane.f32.xlu0 %v1299
    %v1301 = vpop.xlane.xlu0 %1300
    %v1302 = vsel %vm472, %v1280, 0.0
    %1303 = vadd.xlane.f32.xlu0 %v1302
    %v1304 = vpop.xlane.xlu0 %1303
    %v1305 = vrcp.pop %v1283
    %v1306 = vrcp.pop %v1286
    %v1307 = vrcp.pop %v1289
    %v1308 = vrcp.pop %v1292
    %v1309 = vrcp.pop %v1295
    %v1310 = vrcp.pop %v1298
    %v1311 = vrcp.pop %v1301
    %v1312 = vrcp.pop %v1304
    %v1313 = vmul.f32 %v1266, %v1305
    %v1314 = vmul.f32 %v1268, %v1306
    %v1315 = vmul.f32 %v1270, %v1307
    %v1316 = vmul.f32 %v1272, %v1308
    %v1317 = vmul.f32 %v1274, %v1309
    %v1318 = vmul.f32 %v1276, %v1310
    %v1319 = vmul.f32 %v1278, %v1311
    %v1320 = vmul.f32 %v1280, %v1312
    %1321 = vrot.lane.b32.xlu0 %v1025, 64
    %v1322 = vpop.permute.xlu0 %1321
    %v1324 = vsel %vm563, %v1313, 0
    %v1326 = vsel %vm567, %v1322, 0
    %1328 = vmatpush.msra.mxu0 0.0
    %1329 = vmatpush.msra.mxu0 0.0
    %1330 = vmatpush.msra.mxu0 0.0
    %1331 = vmatpush.msra.mxu0 0.0
    %1332 = vmatpush.msra.mxu0 0.0
    %1333 = vmatpush.msra.mxu0 0.0
    %1334 = vmatpush.msra.mxu0 0.0
    %1335 = vmatpush.msra.mxu0 0.0
    %1336 = vmatpush.msra.mxu0 0.0
    %1337 = vmatpush.msra.mxu0 0.0
    %1338 = vmatpush.msra.mxu0 0.0
    %1339 = vmatpush.msra.mxu0 0.0
    %1340 = vmatpush.msra.mxu0 0.0
    %1341 = vmatpush.msra.mxu0 0.0
    %1342 = vmatpush.msra.mxu0 0.0
    %1343 = vmatpush.msra.mxu0 %v1326
    %1344 = vmatmul.f32.gmra.mxu0 %v1324
    %v1345 = vpop.f32.mrf.mxu0
    %v1346 = vadd.f32 0.0, %v1345
    %1347 = vdwg.mxu0
    %v1349 = vsel %vm563, %v1314, 0
    %1351 = vmatpush.msra.mxu0 0.0
    %1352 = vmatpush.msra.mxu0 0.0
    %1353 = vmatpush.msra.mxu0 0.0
    %1354 = vmatpush.msra.mxu0 0.0
    %1355 = vmatpush.msra.mxu0 0.0
    %1356 = vmatpush.msra.mxu0 0.0
    %1357 = vmatpush.msra.mxu0 0.0
    %1358 = vmatpush.msra.mxu0 0.0
    %1359 = vmatpush.msra.mxu0 0.0
    %1360 = vmatpush.msra.mxu0 0.0
    %1361 = vmatpush.msra.mxu0 0.0
    %1362 = vmatpush.msra.mxu0 0.0
    %1363 = vmatpush.msra.mxu0 0.0
    %1364 = vmatpush.msra.mxu0 0.0
    %1365 = vmatpush.msra.mxu0 0.0
    %1366 = vmatpush.msra.mxu0 %v1326
    %1367 = vmatmul.f32.gmra.mxu0 %v1349
    %v1368 = vpop.f32.mrf.mxu0
    %v1369 = vadd.f32 0.0, %v1368
    %1370 = vdwg.mxu0
    %v1372 = vsel %vm563, %v1315, 0
    %1374 = vmatpush.msra.mxu0 0.0
    %1375 = vmatpush.msra.mxu0 0.0
    %1376 = vmatpush.msra.mxu0 0.0
    %1377 = vmatpush.msra.mxu0 0.0
    %1378 = vmatpush.msra.mxu0 0.0
    %1379 = vmatpush.msra.mxu0 0.0
    %1380 = vmatpush.msra.mxu0 0.0
    %1381 = vmatpush.msra.mxu0 0.0
    %1382 = vmatpush.msra.mxu0 0.0
    %1383 = vmatpush.msra.mxu0 0.0
    %1384 = vmatpush.msra.mxu0 0.0
    %1385 = vmatpush.msra.mxu0 0.0
    %1386 = vmatpush.msra.mxu0 0.0
    %1387 = vmatpush.msra.mxu0 0.0
    %1388 = vmatpush.msra.mxu0 0.0
    %1389 = vmatpush.msra.mxu0 %v1326
    %1390 = vmatmul.f32.gmra.mxu0 %v1372
    %v1391 = vpop.f32.mrf.mxu0
    %v1392 = vadd.f32 0.0, %v1391
    %1393 = vdwg.mxu0
    %v1395 = vsel %vm563, %v1316, 0
    %1397 = vmatpush.msra.mxu0 0.0
    %1398 = vmatpush.msra.mxu0 0.0
    %1399 = vmatpush.msra.mxu0 0.0
    %1400 = vmatpush.msra.mxu0 0.0
    %1401 = vmatpush.msra.mxu0 0.0
    %1402 = vmatpush.msra.mxu0 0.0
    %1403 = vmatpush.msra.mxu0 0.0
    %1404 = vmatpush.msra.mxu0 0.0
    %1405 = vmatpush.msra.mxu0 0.0
    %1406 = vmatpush.msra.mxu0 0.0
    %1407 = vmatpush.msra.mxu0 0.0
    %1408 = vmatpush.msra.mxu0 0.0
    %1409 = vmatpush.msra.mxu0 0.0
    %1410 = vmatpush.msra.mxu0 0.0
    %1411 = vmatpush.msra.mxu0 0.0
    %1412 = vmatpush.msra.mxu0 %v1326
    %1413 = vmatmul.f32.gmra.mxu0 %v1395
    %v1414 = vpop.f32.mrf.mxu0
    %v1415 = vadd.f32 0.0, %v1414
    %1416 = vdwg.mxu0
    %v1418 = vsel %vm563, %v1317, 0
    %1420 = vmatpush.msra.mxu0 0.0
    %1421 = vmatpush.msra.mxu0 0.0
    %1422 = vmatpush.msra.mxu0 0.0
    %1423 = vmatpush.msra.mxu0 0.0
    %1424 = vmatpush.msra.mxu0 0.0
    %1425 = vmatpush.msra.mxu0 0.0
    %1426 = vmatpush.msra.mxu0 0.0
    %1427 = vmatpush.msra.mxu0 0.0
    %1428 = vmatpush.msra.mxu0 0.0
    %1429 = vmatpush.msra.mxu0 0.0
    %1430 = vmatpush.msra.mxu0 0.0
    %1431 = vmatpush.msra.mxu0 0.0
    %1432 = vmatpush.msra.mxu0 0.0
    %1433 = vmatpush.msra.mxu0 0.0
    %1434 = vmatpush.msra.mxu0 0.0
    %1435 = vmatpush.msra.mxu0 %v1326
    %1436 = vmatmul.f32.gmra.mxu0 %v1418
    %v1437 = vpop.f32.mrf.mxu0
    %v1438 = vadd.f32 0.0, %v1437
    %1439 = vdwg.mxu0
    %v1441 = vsel %vm563, %v1318, 0
    %1443 = vmatpush.msra.mxu0 0.0
    %1444 = vmatpush.msra.mxu0 0.0
    %1445 = vmatpush.msra.mxu0 0.0
    %1446 = vmatpush.msra.mxu0 0.0
    %1447 = vmatpush.msra.mxu0 0.0
    %1448 = vmatpush.msra.mxu0 0.0
    %1449 = vmatpush.msra.mxu0 0.0
    %1450 = vmatpush.msra.mxu0 0.0
    %1451 = vmatpush.msra.mxu0 0.0
    %1452 = vmatpush.msra.mxu0 0.0
    %1453 = vmatpush.msra.mxu0 0.0
    %1454 = vmatpush.msra.mxu0 0.0
    %1455 = vmatpush.msra.mxu0 0.0
    %1456 = vmatpush.msra.mxu0 0.0
    %1457 = vmatpush.msra.mxu0 0.0
    %1458 = vmatpush.msra.mxu0 %v1326
    %1459 = vmatmul.f32.gmra.mxu0 %v1441
    %v1460 = vpop.f32.mrf.mxu0
    %v1461 = vadd.f32 0.0, %v1460
    %1462 = vdwg.mxu0
    %v1464 = vsel %vm563, %v1319, 0
    %1466 = vmatpush.msra.mxu0 0.0
    %1467 = vmatpush.msra.mxu0 0.0
    %1468 = vmatpush.msra.mxu0 0.0
    %1469 = vmatpush.msra.mxu0 0.0
    %1470 = vmatpush.msra.mxu0 0.0
    %1471 = vmatpush.msra.mxu0 0.0
    %1472 = vmatpush.msra.mxu0 0.0
    %1473 = vmatpush.msra.mxu0 0.0
    %1474 = vmatpush.msra.mxu0 0.0
    %1475 = vmatpush.msra.mxu0 0.0
    %1476 = vmatpush.msra.mxu0 0.0
    %1477 = vmatpush.msra.mxu0 0.0
    %1478 = vmatpush.msra.mxu0 0.0
    %1479 = vmatpush.msra.mxu0 0.0
    %1480 = vmatpush.msra.mxu0 0.0
    %1481 = vmatpush.msra.mxu0 %v1326
    %1482 = vmatmul.f32.gmra.mxu0 %v1464
    %v1483 = vpop.f32.mrf.mxu0
    %v1484 = vadd.f32 0.0, %v1483
    %1485 = vdwg.mxu0
    %v1487 = vsel %vm563, %v1320, 0
    %1489 = vmatpush.msra.mxu0 0.0
    %1490 = vmatpush.msra.mxu0 0.0
    %1491 = vmatpush.msra.mxu0 0.0
    %1492 = vmatpush.msra.mxu0 0.0
    %1493 = vmatpush.msra.mxu0 0.0
    %1494 = vmatpush.msra.mxu0 0.0
    %1495 = vmatpush.msra.mxu0 0.0
    %1496 = vmatpush.msra.mxu0 0.0
    %1497 = vmatpush.msra.mxu0 0.0
    %1498 = vmatpush.msra.mxu0 0.0
    %1499 = vmatpush.msra.mxu0 0.0
    %1500 = vmatpush.msra.mxu0 0.0
    %1501 = vmatpush.msra.mxu0 0.0
    %1502 = vmatpush.msra.mxu0 0.0
    %1503 = vmatpush.msra.mxu0 0.0
    %1504 = vmatpush.msra.mxu0 %v1326
    %1505 = vmatmul.f32.gmra.mxu0 %v1487
    %v1506 = vpop.f32.mrf.mxu0
    %v1507 = vadd.f32 0.0, %v1506
    %1508 = vdwg.mxu0
    %v1509 = vmul.f32 %v1346, %v221
    %v1510 = vmul.f32 %v1369, %v222
    %v1511 = vmul.f32 %v1392, %v223
    %v1512 = vmul.f32 %v1415, %v224
    %v1513 = vmul.f32 %v1438, %v225
    %v1514 = vmul.f32 %v1461, %v226
    %v1515 = vmul.f32 %v1484, %v227
    %v1516 = vmul.f32 %v1507, %v228
    %v1517 = vsel %vm759, %v1509, 0.0
    %v1518 = vsel %vm759, %v1510, 0.0
    %v1519 = vadd.f32 %v1517, %v1518
    %v1520 = vsel %vm759, %v1511, 0.0
    %v1521 = vadd.f32 %v1519, %v1520
    %v1522 = vsel %vm759, %v1512, 0.0
    %v1523 = vadd.f32 %v1521, %v1522
    %v1524 = vsel %vm759, %v1513, 0.0
    %v1525 = vadd.f32 %v1523, %v1524
    %v1526 = vsel %vm759, %v1514, 0.0
    %v1527 = vadd.f32 %v1525, %v1526
    %v1528 = vsel %vm759, %v1515, 0.0
    %v1529 = vadd.f32 %v1527, %v1528
    %v1530 = vsel %vm759, %v1516, 0.0
    %v1531 = vadd.f32 %v1529, %v1530
    %v1532 = vpack.c.bf16 %v1531, %v1531
    %s1533 = scalar_lea.vmem %s6, 16
    %v1534 = vld [vmem:[%s1533] sm:$0xf]
    %v1535 = vld [vmem:[%s1533 + $0x4] sm:$0xf]
    %v1536 = vld [vmem:[%s1533 + $0x8] sm:$0xf]
    %v1537 = vld [vmem:[%s1533 + $0xc] sm:$0xf]
    %v1538 = vperm.slane %v988, 0
    %v1543 = vunpack.c.l.b16 %v1534
    %v1544 = vunpack.c.l.b16 %v1535
    %v1545 = vunpack.c.l.b16 %v1536
    %v1546 = vunpack.c.l.b16 %v1537
    %v1547 = vpack.c.b16 %v1544, %v1543
    %v1548 = vpack.c.b16 %v1546, %v1545
    %v1552 = vsel %vm172, %v1532, 0
    %1554 = vmatpush.bf16.msra.mxu0 0
    %1555 = vmatpush.bf16.msra.mxu0 0
    %1556 = vmatpush.bf16.msra.mxu0 0
    %1557 = vmatpush.bf16.msra.mxu0 0
    %1558 = vmatpush.bf16.msra.mxu0 0
    %1559 = vmatpush.bf16.msra.mxu0 0
    %1560 = vmatpush.bf16.msra.mxu0 %v1548
    %1561 = vmatpush.bf16.msra.mxu0 %v1547
    %1562 = vmatmul.bf16.gmra.mxu0 %v1552
    %v1563 = vpop.f32.mrf.mxu0
    %v1564 = vadd.f32 %v1538, %v1563
    %v1565 = vpop.f32.mrf.mxu0
    %1566 = vdwg.mxu0
    %v1567 = vadd.f32 %v986, %v1564
    %v1568 = vsel %vm759, %v1567, 0.0
    %1569 = vadd.xlane.f32.xlu0 %v1568
    %v1570 = vpop.xlane.xlu0 %1569
    %v1571 = vmul.f32 %v1570, %v819
    %v1572 = vsub.f32 %v1567, %v1571
    %v1573 = vmul.f32 %v1572, %v1572
    %v1574 = vsel %vm759, %v1573, 0.0
    %1575 = vadd.xlane.f32.xlu0 %v1574
    %v1576 = vpop.xlane.xlu0 %1575
    %v1577 = vmul.f32 %v1576, %v819
    %v1578 = vadd.f32 %v1577, 1e-05
    %v1579 = vrsqrt.pop %v1578
    %v1580 = vmul.f32 %v1579, %v1578
    %v1581 = vmul.f32 %v1580, %v1579
    %v1582 = vmul.f32 0.5, %v1581
    %v1583 = vsub.f32 1.5, %v1582
    %v1584 = vmul.f32 %v1579, %v1583
    %vm1585 = vweird.f32 %v1578
    %vm1586 = vweird.f32 %v1579
    %vm1587 = vmor %vm1585, %vm1586
    %v1588 = vsel %vm1587, %v1579, %v1584
    %v1589 = vmul.f32 %v1572, %v1588
    %v1590 = vperm.slane %v988, 1
    %v1591 = vmul.f32 %v1589, %v1590
    %v1592 = vperm.slane %v988, 2
    %v1593 = vadd.f32 %v1591, %v1592
    %v1594 = vpack.c.bf16 %v1593, %v1593
    %s1595 = scalar_lea.vmem %s7, 16
    %v1596 = vld [vmem:[%s1595] sm:$0xf]
    %v1597 = vld [vmem:[%s1595 + $0x4] sm:$0xf]
    %v1598 = vld [vmem:[%s1595 + $0x8] sm:$0xf]
    %v1599 = vld [vmem:[%s1595 + $0xc] sm:$0xf]
    %s1600 = scalar_lea.vmem %s8, 1
    %v1601 = vld [vmem:[%s1600] sm:$0x1]
    %v1603 = vperm.slane %v1601, 0
    %v1609 = vunpack.c.l.b16 %v1596
    %v1610 = vunpack.c.l.b16 %v1597
    %v1611 = vunpack.c.l.b16 %v1598
    %v1612 = vunpack.c.l.b16 %v1599
    %v1613 = vpack.c.b16 %v1610, %v1609
    %v1614 = vpack.c.b16 %v1612, %v1611
    %v1618 = vsel %vm172, %v1594, 0
    %1620 = vmatpush.bf16.msra.mxu0 0
    %1621 = vmatpush.bf16.msra.mxu0 0
    %1622 = vmatpush.bf16.msra.mxu0 0
    %1623 = vmatpush.bf16.msra.mxu0 0
    %1624 = vmatpush.bf16.msra.mxu0 0
    %1625 = vmatpush.bf16.msra.mxu0 0
    %1626 = vmatpush.bf16.msra.mxu0 %v1614
    %1627 = vmatpush.bf16.msra.mxu0 %v1613
    %1628 = vmatmul.bf16.gmra.mxu0 %v1618
    %v1629 = vpop.f32.mrf.mxu0
    %v1630 = vadd.f32 %v1603, %v1629
    %v1631 = vpop.f32.mrf.mxu0
    %1632 = vdwg.mxu0
    %v1633 = vmax.f32 %v1630, 0.0
    %v1634 = vpack.c.bf16 %v1633, %v1633
    %s1635 = scalar_lea.vmem %s9, 64
    %v1636 = vld [vmem:[%s1635] sm:$0xf]
    %v1637 = vld [vmem:[%s1635 + $0x4] sm:$0xf]
    %v1638 = vld [vmem:[%s1635 + $0x8] sm:$0xf]
    %v1639 = vld [vmem:[%s1635 + $0xc] sm:$0xf]
    %v1640 = vld [vmem:[%s1635 + $0x10] sm:$0xf]
    %v1641 = vld [vmem:[%s1635 + $0x14] sm:$0xf]
    %v1642 = vld [vmem:[%s1635 + $0x18] sm:$0xf]
    %v1643 = vld [vmem:[%s1635 + $0x1c] sm:$0xf]
    %v1644 = vld [vmem:[%s1635 + $0x20] sm:$0xf]
    %v1645 = vld [vmem:[%s1635 + $0x24] sm:$0xf]
    %v1646 = vld [vmem:[%s1635 + $0x28] sm:$0xf]
    %v1647 = vld [vmem:[%s1635 + $0x2c] sm:$0xf]
    %v1648 = vld [vmem:[%s1635 + $0x30] sm:$0xf]
    %v1649 = vld [vmem:[%s1635 + $0x34] sm:$0xf]
    %v1650 = vld [vmem:[%s1635 + $0x38] sm:$0xf]
    %v1651 = vld [vmem:[%s1635 + $0x3c] sm:$0xf]
    %v1652 = vperm.slane %v988, 3
    %v1669 = vunpack.c.l.b16 %v1636
    %v1670 = vunpack.c.l.b16 %v1637
    %v1671 = vunpack.c.l.b16 %v1638
    %v1672 = vunpack.c.l.b16 %v1639
    %v1673 = vunpack.c.l.b16 %v1640
    %v1674 = vunpack.c.l.b16 %v1641
    %v1675 = vunpack.c.l.b16 %v1642
    %v1676 = vunpack.c.l.b16 %v1643
    %v1677 = vunpack.c.l.b16 %v1644
    %v1678 = vunpack.c.l.b16 %v1645
    %v1679 = vunpack.c.l.b16 %v1646
    %v1680 = vunpack.c.l.b16 %v1647
    %v1681 = vunpack.c.l.b16 %v1648
    %v1682 = vunpack.c.l.b16 %v1649
    %v1683 = vunpack.c.l.b16 %v1650
    %v1684 = vunpack.c.l.b16 %v1651
    %v1685 = vpack.c.b16 %v1670, %v1669
    %v1686 = vpack.c.b16 %v1672, %v1671
    %v1687 = vpack.c.b16 %v1674, %v1673
    %v1688 = vpack.c.b16 %v1676, %v1675
    %v1689 = vpack.c.b16 %v1678, %v1677
    %v1690 = vpack.c.b16 %v1680, %v1679
    %v1691 = vpack.c.b16 %v1682, %v1681
    %v1692 = vpack.c.b16 %v1684, %v1683
    %1701 = vmatpush.bf16.msra.mxu0 %v1692
    %1702 = vmatpush.bf16.msra.mxu0 %v1691
    %1703 = vmatpush.bf16.msra.mxu0 %v1690
    %1704 = vmatpush.bf16.msra.mxu0 %v1689
    %1705 = vmatpush.bf16.msra.mxu0 %v1688
    %1706 = vmatpush.bf16.msra.mxu0 %v1687
    %1707 = vmatpush.bf16.msra.mxu0 %v1686
    %1708 = vmatpush.bf16.msra.mxu0 %v1685
    %1709 = vmatmul.bf16.gmra.mxu0 %v1634
    %v1710 = vpop.f32.mrf.mxu0
    %v1711 = vadd.f32 %v1652, %v1710
    %v1712 = vpop.f32.mrf.mxu0
    %1713 = vdwg.mxu0
    %v1714 = vadd.f32 %v1593, %v1711
    %v1715 = vsel %vm759, %v1714, 0.0
    %1716 = vadd.xlane.f32.xlu0 %v1715
    %v1717 = vpop.xlane.xlu0 %1716
    %v1718 = vmul.f32 %v1717, %v819
    %v1719 = vsub.f32 %v1714, %v1718
    %v1720 = vmul.f32 %v1719, %v1719
    %v1721 = vsel %vm759, %v1720, 0.0
    %1722 = vadd.xlane.f32.xlu0 %v1721
    %v1723 = vpop.xlane.xlu0 %1722
    %v1724 = vmul.f32 %v1723, %v819
    %v1725 = vadd.f32 %v1724, 1e-05
    %v1726 = vrsqrt.pop %v1725
    %v1727 = vmul.f32 %v1726, %v1725
    %v1728 = vmul.f32 %v1727, %v1726
    %v1729 = vmul.f32 0.5, %v1728
    %v1730 = vsub.f32 1.5, %v1729
    %v1731 = vmul.f32 %v1726, %v1730
    %vm1732 = vweird.f32 %v1725
    %vm1733 = vweird.f32 %v1726
    %vm1734 = vmor %vm1732, %vm1733
    %v1735 = vsel %vm1734, %v1726, %v1731
    %v1736 = vmul.f32 %v1719, %v1735
    %v1737 = vperm.slane %v988, 4
    %v1738 = vmul.f32 %v1736, %v1737
    %v1739 = vperm.slane %v988, 5
    %v1740 = vadd.f32 %v1738, %v1739
    %s1741 = scalar_lea.vmem %s10, 16
    %v1742 = vld [vmem:[%s1741] sm:$0x3f]
    %v1743 = vpack.c.bf16 %v1740, %v1740
    %s1744 = scalar_lea.vmem %s4, 32
    %v1745 = vld [vmem:[%s1744] sm:$0xf]
    %v1746 = vld [vmem:[%s1744 + $0x4] sm:$0xf]
    %v1747 = vld [vmem:[%s1744 + $0x8] sm:$0xf]
    %v1748 = vld [vmem:[%s1744 + $0xc] sm:$0xf]
    %s1749 = scalar_lea.vmem %s5, 2
    %v1750 = vld [vmem:[%s1749] sm:$0x1]
    %v1752 = vperm.slane %v1750, 0
    %v1758 = vunpack.c.l.b16 %v1745
    %v1759 = vunpack.c.l.b16 %v1746
    %v1760 = vunpack.c.l.b16 %v1747
    %v1761 = vunpack.c.l.b16 %v1748
    %v1762 = vpack.c.b16 %v1759, %v1758
    %v1763 = vpack.c.b16 %v1761, %v1760
    %v1767 = vsel %vm172, %v1743, 0
    %1769 = vmatpush.bf16.msra.mxu0 0
    %1770 = vmatpush.bf16.msra.mxu0 0
    %1771 = vmatpush.bf16.msra.mxu0 0
    %1772 = vmatpush.bf16.msra.mxu0 0
    %1773 = vmatpush.bf16.msra.mxu0 0
    %1774 = vmatpush.bf16.msra.mxu0 0
    %1775 = vmatpush.bf16.msra.mxu0 %v1763
    %1776 = vmatpush.bf16.msra.mxu0 %v1762
    %1777 = vmatmul.bf16.gmra.mxu0 %v1767
    %v1778 = vpop.f32.mrf.mxu0
    %v1779 = vadd.f32 %v1752, %v1778
    %v1780 = vpop.f32.mrf.mxu0
    %1781 = vdwg.mxu0
    %v1782 = vmul.f32 %v1779, %v221
    %v1783 = vmul.f32 %v1779, %v222
    %v1784 = vmul.f32 %v1779, %v223
    %v1785 = vmul.f32 %v1779, %v224
    %v1786 = vmul.f32 %v1779, %v225
    %v1787 = vmul.f32 %v1779, %v226
    %v1788 = vmul.f32 %v1779, %v227
    %v1789 = vmul.f32 %v1779, %v228
    %1791 = vrot.lane.b32.xlu0 %v1779, 96
    %v1792 = vpop.permute.xlu0 %1791
    %v1794 = vsel %vm172, %v1782, 0
    %v1796 = vsel %vm172, %v1792, 0
    %1798 = vmatpush.xpose.msra.mxu0 0.0
    %1799 = vmatpush.xpose.msra.mxu0 0.0
    %1800 = vmatpush.xpose.msra.mxu0 0.0
    %1801 = vmatpush.xpose.msra.mxu0 0.0
    %1802 = vmatpush.xpose.msra.mxu0 0.0
    %1803 = vmatpush.xpose.msra.mxu0 0.0
    %1804 = vmatpush.xpose.msra.mxu0 0.0
    %1805 = vmatpush.xpose.msra.mxu0 0.0
    %1806 = vmatpush.xpose.msra.mxu0 0.0
    %1807 = vmatpush.xpose.msra.mxu0 0.0
    %1808 = vmatpush.xpose.msra.mxu0 0.0
    %1809 = vmatpush.xpose.msra.mxu0 0.0
    %1810 = vmatpush.xpose.msra.mxu0 0.0
    %1811 = vmatpush.xpose.msra.mxu0 0.0
    %1812 = vmatpush.xpose.msra.mxu0 0.0
    %1813 = vmatpush.xpose.msra.mxu0 %v1796
    %1814 = vmatmul.f32.gmra.mxu0 %v1794
    %v1815 = vpop.f32.mrf.mxu0
    %v1816 = vadd.f32 0.0, %v1815
    %1817 = vdwg.mxu0
    %v1819 = vsel %vm172, %v1783, 0
    %1821 = vmatpush.xpose.msra.mxu0 0.0
    %1822 = vmatpush.xpose.msra.mxu0 0.0
    %1823 = vmatpush.xpose.msra.mxu0 0.0
    %1824 = vmatpush.xpose.msra.mxu0 0.0
    %1825 = vmatpush.xpose.msra.mxu0 0.0
    %1826 = vmatpush.xpose.msra.mxu0 0.0
    %1827 = vmatpush.xpose.msra.mxu0 0.0
    %1828 = vmatpush.xpose.msra.mxu0 0.0
    %1829 = vmatpush.xpose.msra.mxu0 0.0
    %1830 = vmatpush.xpose.msra.mxu0 0.0
    %1831 = vmatpush.xpose.msra.mxu0 0.0
    %1832 = vmatpush.xpose.msra.mxu0 0.0
    %1833 = vmatpush.xpose.msra.mxu0 0.0
    %1834 = vmatpush.xpose.msra.mxu0 0.0
    %1835 = vmatpush.xpose.msra.mxu0 0.0
    %1836 = vmatpush.xpose.msra.mxu0 %v1796
    %1837 = vmatmul.f32.gmra.mxu0 %v1819
    %v1838 = vpop.f32.mrf.mxu0
    %v1839 = vadd.f32 0.0, %v1838
    %1840 = vdwg.mxu0
    %v1842 = vsel %vm172, %v1784, 0
    %1844 = vmatpush.xpose.msra.mxu0 0.0
    %1845 = vmatpush.xpose.msra.mxu0 0.0
    %1846 = vmatpush.xpose.msra.mxu0 0.0
    %1847 = vmatpush.xpose.msra.mxu0 0.0
    %1848 = vmatpush.xpose.msra.mxu0 0.0
    %1849 = vmatpush.xpose.msra.mxu0 0.0
    %1850 = vmatpush.xpose.msra.mxu0 0.0
    %1851 = vmatpush.xpose.msra.mxu0 0.0
    %1852 = vmatpush.xpose.msra.mxu0 0.0
    %1853 = vmatpush.xpose.msra.mxu0 0.0
    %1854 = vmatpush.xpose.msra.mxu0 0.0
    %1855 = vmatpush.xpose.msra.mxu0 0.0
    %1856 = vmatpush.xpose.msra.mxu0 0.0
    %1857 = vmatpush.xpose.msra.mxu0 0.0
    %1858 = vmatpush.xpose.msra.mxu0 0.0
    %1859 = vmatpush.xpose.msra.mxu0 %v1796
    %1860 = vmatmul.f32.gmra.mxu0 %v1842
    %v1861 = vpop.f32.mrf.mxu0
    %v1862 = vadd.f32 0.0, %v1861
    %1863 = vdwg.mxu0
    %v1865 = vsel %vm172, %v1785, 0
    %1867 = vmatpush.xpose.msra.mxu0 0.0
    %1868 = vmatpush.xpose.msra.mxu0 0.0
    %1869 = vmatpush.xpose.msra.mxu0 0.0
    %1870 = vmatpush.xpose.msra.mxu0 0.0
    %1871 = vmatpush.xpose.msra.mxu0 0.0
    %1872 = vmatpush.xpose.msra.mxu0 0.0
    %1873 = vmatpush.xpose.msra.mxu0 0.0
    %1874 = vmatpush.xpose.msra.mxu0 0.0
    %1875 = vmatpush.xpose.msra.mxu0 0.0
    %1876 = vmatpush.xpose.msra.mxu0 0.0
    %1877 = vmatpush.xpose.msra.mxu0 0.0
    %1878 = vmatpush.xpose.msra.mxu0 0.0
    %1879 = vmatpush.xpose.msra.mxu0 0.0
    %1880 = vmatpush.xpose.msra.mxu0 0.0
    %1881 = vmatpush.xpose.msra.mxu0 0.0
    %1882 = vmatpush.xpose.msra.mxu0 %v1796
    %1883 = vmatmul.f32.gmra.mxu0 %v1865
    %v1884 = vpop.f32.mrf.mxu0
    %v1885 = vadd.f32 0.0, %v1884
    %1886 = vdwg.mxu0
    %v1888 = vsel %vm172, %v1786, 0
    %1890 = vmatpush.xpose.msra.mxu0 0.0
    %1891 = vmatpush.xpose.msra.mxu0 0.0
    %1892 = vmatpush.xpose.msra.mxu0 0.0
    %1893 = vmatpush.xpose.msra.mxu0 0.0
    %1894 = vmatpush.xpose.msra.mxu0 0.0
    %1895 = vmatpush.xpose.msra.mxu0 0.0
    %1896 = vmatpush.xpose.msra.mxu0 0.0
    %1897 = vmatpush.xpose.msra.mxu0 0.0
    %1898 = vmatpush.xpose.msra.mxu0 0.0
    %1899 = vmatpush.xpose.msra.mxu0 0.0
    %1900 = vmatpush.xpose.msra.mxu0 0.0
    %1901 = vmatpush.xpose.msra.mxu0 0.0
    %1902 = vmatpush.xpose.msra.mxu0 0.0
    %1903 = vmatpush.xpose.msra.mxu0 0.0
    %1904 = vmatpush.xpose.msra.mxu0 0.0
    %1905 = vmatpush.xpose.msra.mxu0 %v1796
    %1906 = vmatmul.f32.gmra.mxu0 %v1888
    %v1907 = vpop.f32.mrf.mxu0
    %v1908 = vadd.f32 0.0, %v1907
    %1909 = vdwg.mxu0
    %v1911 = vsel %vm172, %v1787, 0
    %1913 = vmatpush.xpose.msra.mxu0 0.0
    %1914 = vmatpush.xpose.msra.mxu0 0.0
    %1915 = vmatpush.xpose.msra.mxu0 0.0
    %1916 = vmatpush.xpose.msra.mxu0 0.0
    %1917 = vmatpush.xpose.msra.mxu0 0.0
    %1918 = vmatpush.xpose.msra.mxu0 0.0
    %1919 = vmatpush.xpose.msra.mxu0 0.0
    %1920 = vmatpush.xpose.msra.mxu0 0.0
    %1921 = vmatpush.xpose.msra.mxu0 0.0
    %1922 = vmatpush.xpose.msra.mxu0 0.0
    %1923 = vmatpush.xpose.msra.mxu0 0.0
    %1924 = vmatpush.xpose.msra.mxu0 0.0
    %1925 = vmatpush.xpose.msra.mxu0 0.0
    %1926 = vmatpush.xpose.msra.mxu0 0.0
    %1927 = vmatpush.xpose.msra.mxu0 0.0
    %1928 = vmatpush.xpose.msra.mxu0 %v1796
    %1929 = vmatmul.f32.gmra.mxu0 %v1911
    %v1930 = vpop.f32.mrf.mxu0
    %v1931 = vadd.f32 0.0, %v1930
    %1932 = vdwg.mxu0
    %v1934 = vsel %vm172, %v1788, 0
    %1936 = vmatpush.xpose.msra.mxu0 0.0
    %1937 = vmatpush.xpose.msra.mxu0 0.0
    %1938 = vmatpush.xpose.msra.mxu0 0.0
    %1939 = vmatpush.xpose.msra.mxu0 0.0
    %1940 = vmatpush.xpose.msra.mxu0 0.0
    %1941 = vmatpush.xpose.msra.mxu0 0.0
    %1942 = vmatpush.xpose.msra.mxu0 0.0
    %1943 = vmatpush.xpose.msra.mxu0 0.0
    %1944 = vmatpush.xpose.msra.mxu0 0.0
    %1945 = vmatpush.xpose.msra.mxu0 0.0
    %1946 = vmatpush.xpose.msra.mxu0 0.0
    %1947 = vmatpush.xpose.msra.mxu0 0.0
    %1948 = vmatpush.xpose.msra.mxu0 0.0
    %1949 = vmatpush.xpose.msra.mxu0 0.0
    %1950 = vmatpush.xpose.msra.mxu0 0.0
    %1951 = vmatpush.xpose.msra.mxu0 %v1796
    %1952 = vmatmul.f32.gmra.mxu0 %v1934
    %v1953 = vpop.f32.mrf.mxu0
    %v1954 = vadd.f32 0.0, %v1953
    %1955 = vdwg.mxu0
    %v1957 = vsel %vm172, %v1789, 0
    %1959 = vmatpush.xpose.msra.mxu0 0.0
    %1960 = vmatpush.xpose.msra.mxu0 0.0
    %1961 = vmatpush.xpose.msra.mxu0 0.0
    %1962 = vmatpush.xpose.msra.mxu0 0.0
    %1963 = vmatpush.xpose.msra.mxu0 0.0
    %1964 = vmatpush.xpose.msra.mxu0 0.0
    %1965 = vmatpush.xpose.msra.mxu0 0.0
    %1966 = vmatpush.xpose.msra.mxu0 0.0
    %1967 = vmatpush.xpose.msra.mxu0 0.0
    %1968 = vmatpush.xpose.msra.mxu0 0.0
    %1969 = vmatpush.xpose.msra.mxu0 0.0
    %1970 = vmatpush.xpose.msra.mxu0 0.0
    %1971 = vmatpush.xpose.msra.mxu0 0.0
    %1972 = vmatpush.xpose.msra.mxu0 0.0
    %1973 = vmatpush.xpose.msra.mxu0 0.0
    %1974 = vmatpush.xpose.msra.mxu0 %v1796
    %1975 = vmatmul.f32.gmra.mxu0 %v1957
    %v1976 = vpop.f32.mrf.mxu0
    %v1977 = vadd.f32 0.0, %v1976
    %1978 = vdwg.mxu0
    %v1979 = vmul.f32 %v1816, 0.5
    %v1980 = vmul.f32 %v1839, 0.5
    %v1981 = vmul.f32 %v1862, 0.5
    %v1982 = vmul.f32 %v1885, 0.5
    %v1983 = vmul.f32 %v1908, 0.5
    %v1984 = vmul.f32 %v1931, 0.5
    %v1985 = vmul.f32 %v1954, 0.5
    %v1986 = vmul.f32 %v1977, 0.5
    %v1987 = vsel %vm472, %v1979, -inf
    %1988 = vmax.xlane.f32.xlu0 %v1987
    %v1989 = vpop.xlane.xlu0 %1988
    %v1990 = vsel %vm472, %v1980, -inf
    %1991 = vmax.xlane.f32.xlu0 %v1990
    %v1992 = vpop.xlane.xlu0 %1991
    %v1993 = vsel %vm472, %v1981, -inf
    %1994 = vmax.xlane.f32.xlu0 %v1993
    %v1995 = vpop.xlane.xlu0 %1994
    %v1996 = vsel %vm472, %v1982, -inf
    %1997 = vmax.xlane.f32.xlu0 %v1996
    %v1998 = vpop.xlane.xlu0 %1997
    %v1999 = vsel %vm472, %v1983, -inf
    %2000 = vmax.xlane.f32.xlu0 %v1999
    %v2001 = vpop.xlane.xlu0 %2000
    %v2002 = vsel %vm472, %v1984, -inf
    %2003 = vmax.xlane.f32.xlu0 %v2002
    %v2004 = vpop.xlane.xlu0 %2003
    %v2005 = vsel %vm472, %v1985, -inf
    %2006 = vmax.xlane.f32.xlu0 %v2005
    %v2007 = vpop.xlane.xlu0 %2006
    %v2008 = vsel %vm472, %v1986, -inf
    %2009 = vmax.xlane.f32.xlu0 %v2008
    %v2010 = vpop.xlane.xlu0 %2009
    %v2011 = vsub.f32 %v1979, %v1989
    %v2012 = vsub.f32 %v1980, %v1992
    %v2013 = vsub.f32 %v1981, %v1995
    %v2014 = vsub.f32 %v1982, %v1998
    %v2015 = vsub.f32 %v1983, %v2001
    %v2016 = vsub.f32 %v1984, %v2004
    %v2017 = vsub.f32 %v1985, %v2007
    %v2018 = vsub.f32 %v1986, %v2010
    %v2019 = vmul.f32 %v2011, 1.442695
    %v2020 = vpow.pop %v2019
    %v2021 = vmul.f32 %v2012, 1.442695
    %v2022 = vpow.pop %v2021
    %v2023 = vmul.f32 %v2013, 1.442695
    %v2024 = vpow.pop %v2023
    %v2025 = vmul.f32 %v2014, 1.442695
    %v2026 = vpow.pop %v2025
    %v2027 = vmul.f32 %v2015, 1.442695
    %v2028 = vpow.pop %v2027
    %v2029 = vmul.f32 %v2016, 1.442695
    %v2030 = vpow.pop %v2029
    %v2031 = vmul.f32 %v2017, 1.442695
    %v2032 = vpow.pop %v2031
    %v2033 = vmul.f32 %v2018, 1.442695
    %v2034 = vpow.pop %v2033
    %v2035 = vsel %vm472, %v2020, 0.0
    %2036 = vadd.xlane.f32.xlu0 %v2035
    %v2037 = vpop.xlane.xlu0 %2036
    %v2038 = vsel %vm472, %v2022, 0.0
    %2039 = vadd.xlane.f32.xlu0 %v2038
    %v2040 = vpop.xlane.xlu0 %2039
    %v2041 = vsel %vm472, %v2024, 0.0
    %2042 = vadd.xlane.f32.xlu0 %v2041
    %v2043 = vpop.xlane.xlu0 %2042
    %v2044 = vsel %vm472, %v2026, 0.0
    %2045 = vadd.xlane.f32.xlu0 %v2044
    %v2046 = vpop.xlane.xlu0 %2045
    %v2047 = vsel %vm472, %v2028, 0.0
    %2048 = vadd.xlane.f32.xlu0 %v2047
    %v2049 = vpop.xlane.xlu0 %2048
    %v2050 = vsel %vm472, %v2030, 0.0
    %2051 = vadd.xlane.f32.xlu0 %v2050
    %v2052 = vpop.xlane.xlu0 %2051
    %v2053 = vsel %vm472, %v2032, 0.0
    %2054 = vadd.xlane.f32.xlu0 %v2053
    %v2055 = vpop.xlane.xlu0 %2054
    %v2056 = vsel %vm472, %v2034, 0.0
    %2057 = vadd.xlane.f32.xlu0 %v2056
    %v2058 = vpop.xlane.xlu0 %2057
    %v2059 = vrcp.pop %v2037
    %v2060 = vrcp.pop %v2040
    %v2061 = vrcp.pop %v2043
    %v2062 = vrcp.pop %v2046
    %v2063 = vrcp.pop %v2049
    %v2064 = vrcp.pop %v2052
    %v2065 = vrcp.pop %v2055
    %v2066 = vrcp.pop %v2058
    %v2067 = vmul.f32 %v2020, %v2059
    %v2068 = vmul.f32 %v2022, %v2060
    %v2069 = vmul.f32 %v2024, %v2061
    %v2070 = vmul.f32 %v2026, %v2062
    %v2071 = vmul.f32 %v2028, %v2063
    %v2072 = vmul.f32 %v2030, %v2064
    %v2073 = vmul.f32 %v2032, %v2065
    %v2074 = vmul.f32 %v2034, %v2066
    %2075 = vrot.lane.b32.xlu0 %v1779, 64
    %v2076 = vpop.permute.xlu0 %2075
    %v2078 = vsel %vm563, %v2067, 0
    %v2080 = vsel %vm567, %v2076, 0
    %2082 = vmatpush.msra.mxu0 0.0
    %2083 = vmatpush.msra.mxu0 0.0
    %2084 = vmatpush.msra.mxu0 0.0
    %2085 = vmatpush.msra.mxu0 0.0
    %2086 = vmatpush.msra.mxu0 0.0
    %2087 = vmatpush.msra.mxu0 0.0
    %2088 = vmatpush.msra.mxu0 0.0
    %2089 = vmatpush.msra.mxu0 0.0
    %2090 = vmatpush.msra.mxu0 0.0
    %2091 = vmatpush.msra.mxu0 0.0
    %2092 = vmatpush.msra.mxu0 0.0
    %2093 = vmatpush.msra.mxu0 0.0
    %2094 = vmatpush.msra.mxu0 0.0
    %2095 = vmatpush.msra.mxu0 0.0
    %2096 = vmatpush.msra.mxu0 0.0
    %2097 = vmatpush.msra.mxu0 %v2080
    %2098 = vmatmul.f32.gmra.mxu0 %v2078
    %v2099 = vpop.f32.mrf.mxu0
    %v2100 = vadd.f32 0.0, %v2099
    %2101 = vdwg.mxu0
    %v2103 = vsel %vm563, %v2068, 0
    %2105 = vmatpush.msra.mxu0 0.0
    %2106 = vmatpush.msra.mxu0 0.0
    %2107 = vmatpush.msra.mxu0 0.0
    %2108 = vmatpush.msra.mxu0 0.0
    %2109 = vmatpush.msra.mxu0 0.0
    %2110 = vmatpush.msra.mxu0 0.0
    %2111 = vmatpush.msra.mxu0 0.0
    %2112 = vmatpush.msra.mxu0 0.0
    %2113 = vmatpush.msra.mxu0 0.0
    %2114 = vmatpush.msra.mxu0 0.0
    %2115 = vmatpush.msra.mxu0 0.0
    %2116 = vmatpush.msra.mxu0 0.0
    %2117 = vmatpush.msra.mxu0 0.0
    %2118 = vmatpush.msra.mxu0 0.0
    %2119 = vmatpush.msra.mxu0 0.0
    %2120 = vmatpush.msra.mxu0 %v2080
    %2121 = vmatmul.f32.gmra.mxu0 %v2103
    %v2122 = vpop.f32.mrf.mxu0
    %v2123 = vadd.f32 0.0, %v2122
    %2124 = vdwg.mxu0
    %v2126 = vsel %vm563, %v2069, 0
    %2128 = vmatpush.msra.mxu0 0.0
    %2129 = vmatpush.msra.mxu0 0.0
    %2130 = vmatpush.msra.mxu0 0.0
    %2131 = vmatpush.msra.mxu0 0.0
    %2132 = vmatpush.msra.mxu0 0.0
    %2133 = vmatpush.msra.mxu0 0.0
    %2134 = vmatpush.msra.mxu0 0.0
    %2135 = vmatpush.msra.mxu0 0.0
    %2136 = vmatpush.msra.mxu0 0.0
    %2137 = vmatpush.msra.mxu0 0.0
    %2138 = vmatpush.msra.mxu0 0.0
    %2139 = vmatpush.msra.mxu0 0.0
    %2140 = vmatpush.msra.mxu0 0.0
    %2141 = vmatpush.msra.mxu0 0.0
    %2142 = vmatpush.msra.mxu0 0.0
    %2143 = vmatpush.msra.mxu0 %v2080
    %2144 = vmatmul.f32.gmra.mxu0 %v2126
    %v2145 = vpop.f32.mrf.mxu0
    %v2146 = vadd.f32 0.0, %v2145
    %2147 = vdwg.mxu0
    %v2149 = vsel %vm563, %v2070, 0
    %2151 = vmatpush.msra.mxu0 0.0
    %2152 = vmatpush.msra.mxu0 0.0
    %2153 = vmatpush.msra.mxu0 0.0
    %2154 = vmatpush.msra.mxu0 0.0
    %2155 = vmatpush.msra.mxu0 0.0
    %2156 = vmatpush.msra.mxu0 0.0
    %2157 = vmatpush.msra.mxu0 0.0
    %2158 = vmatpush.msra.mxu0 0.0
    %2159 = vmatpush.msra.mxu0 0.0
    %2160 = vmatpush.msra.mxu0 0.0
    %2161 = vmatpush.msra.mxu0 0.0
    %2162 = vmatpush.msra.mxu0 0.0
    %2163 = vmatpush.msra.mxu0 0.0
    %2164 = vmatpush.msra.mxu0 0.0
    %2165 = vmatpush.msra.mxu0 0.0
    %2166 = vmatpush.msra.mxu0 %v2080
    %2167 = vmatmul.f32.gmra.mxu0 %v2149
    %v2168 = vpop.f32.mrf.mxu0
    %v2169 = vadd.f32 0.0, %v2168
    %2170 = vdwg.mxu0
    %v2172 = vsel %vm563, %v2071, 0
    %2174 = vmatpush.msra.mxu0 0.0
    %2175 = vmatpush.msra.mxu0 0.0
    %2176 = vmatpush.msra.mxu0 0.0
    %2177 = vmatpush.msra.mxu0 0.0
    %2178 = vmatpush.msra.mxu0 0.0
    %2179 = vmatpush.msra.mxu0 0.0
    %2180 = vmatpush.msra.mxu0 0.0
    %2181 = vmatpush.msra.mxu0 0.0
    %2182 = vmatpush.msra.mxu0 0.0
    %2183 = vmatpush.msra.mxu0 0.0
    %2184 = vmatpush.msra.mxu0 0.0
    %2185 = vmatpush.msra.mxu0 0.0
    %2186 = vmatpush.msra.mxu0 0.0
    %2187 = vmatpush.msra.mxu0 0.0
    %2188 = vmatpush.msra.mxu0 0.0
    %2189 = vmatpush.msra.mxu0 %v2080
    %2190 = vmatmul.f32.gmra.mxu0 %v2172
    %v2191 = vpop.f32.mrf.mxu0
    %v2192 = vadd.f32 0.0, %v2191
    %2193 = vdwg.mxu0
    %v2195 = vsel %vm563, %v2072, 0
    %2197 = vmatpush.msra.mxu0 0.0
    %2198 = vmatpush.msra.mxu0 0.0
    %2199 = vmatpush.msra.mxu0 0.0
    %2200 = vmatpush.msra.mxu0 0.0
    %2201 = vmatpush.msra.mxu0 0.0
    %2202 = vmatpush.msra.mxu0 0.0
    %2203 = vmatpush.msra.mxu0 0.0
    %2204 = vmatpush.msra.mxu0 0.0
    %2205 = vmatpush.msra.mxu0 0.0
    %2206 = vmatpush.msra.mxu0 0.0
    %2207 = vmatpush.msra.mxu0 0.0
    %2208 = vmatpush.msra.mxu0 0.0
    %2209 = vmatpush.msra.mxu0 0.0
    %2210 = vmatpush.msra.mxu0 0.0
    %2211 = vmatpush.msra.mxu0 0.0
    %2212 = vmatpush.msra.mxu0 %v2080
    %2213 = vmatmul.f32.gmra.mxu0 %v2195
    %v2214 = vpop.f32.mrf.mxu0
    %v2215 = vadd.f32 0.0, %v2214
    %2216 = vdwg.mxu0
    %v2218 = vsel %vm563, %v2073, 0
    %2220 = vmatpush.msra.mxu0 0.0
    %2221 = vmatpush.msra.mxu0 0.0
    %2222 = vmatpush.msra.mxu0 0.0
    %2223 = vmatpush.msra.mxu0 0.0
    %2224 = vmatpush.msra.mxu0 0.0
    %2225 = vmatpush.msra.mxu0 0.0
    %2226 = vmatpush.msra.mxu0 0.0
    %2227 = vmatpush.msra.mxu0 0.0
    %2228 = vmatpush.msra.mxu0 0.0
    %2229 = vmatpush.msra.mxu0 0.0
    %2230 = vmatpush.msra.mxu0 0.0
    %2231 = vmatpush.msra.mxu0 0.0
    %2232 = vmatpush.msra.mxu0 0.0
    %2233 = vmatpush.msra.mxu0 0.0
    %2234 = vmatpush.msra.mxu0 0.0
    %2235 = vmatpush.msra.mxu0 %v2080
    %2236 = vmatmul.f32.gmra.mxu0 %v2218
    %v2237 = vpop.f32.mrf.mxu0
    %v2238 = vadd.f32 0.0, %v2237
    %2239 = vdwg.mxu0
    %v2241 = vsel %vm563, %v2074, 0
    %2243 = vmatpush.msra.mxu0 0.0
    %2244 = vmatpush.msra.mxu0 0.0
    %2245 = vmatpush.msra.mxu0 0.0
    %2246 = vmatpush.msra.mxu0 0.0
    %2247 = vmatpush.msra.mxu0 0.0
    %2248 = vmatpush.msra.mxu0 0.0
    %2249 = vmatpush.msra.mxu0 0.0
    %2250 = vmatpush.msra.mxu0 0.0
    %2251 = vmatpush.msra.mxu0 0.0
    %2252 = vmatpush.msra.mxu0 0.0
    %2253 = vmatpush.msra.mxu0 0.0
    %2254 = vmatpush.msra.mxu0 0.0
    %2255 = vmatpush.msra.mxu0 0.0
    %2256 = vmatpush.msra.mxu0 0.0
    %2257 = vmatpush.msra.mxu0 0.0
    %2258 = vmatpush.msra.mxu0 %v2080
    %2259 = vmatmul.f32.gmra.mxu0 %v2241
    %v2260 = vpop.f32.mrf.mxu0
    %v2261 = vadd.f32 0.0, %v2260
    %2262 = vdwg.mxu0
    %v2263 = vmul.f32 %v2100, %v221
    %v2264 = vmul.f32 %v2123, %v222
    %v2265 = vmul.f32 %v2146, %v223
    %v2266 = vmul.f32 %v2169, %v224
    %v2267 = vmul.f32 %v2192, %v225
    %v2268 = vmul.f32 %v2215, %v226
    %v2269 = vmul.f32 %v2238, %v227
    %v2270 = vmul.f32 %v2261, %v228
    %v2271 = vsel %vm759, %v2263, 0.0
    %v2272 = vsel %vm759, %v2264, 0.0
    %v2273 = vadd.f32 %v2271, %v2272
    %v2274 = vsel %vm759, %v2265, 0.0
    %v2275 = vadd.f32 %v2273, %v2274
    %v2276 = vsel %vm759, %v2266, 0.0
    %v2277 = vadd.f32 %v2275, %v2276
    %v2278 = vsel %vm759, %v2267, 0.0
    %v2279 = vadd.f32 %v2277, %v2278
    %v2280 = vsel %vm759, %v2268, 0.0
    %v2281 = vadd.f32 %v2279, %v2280
    %v2282 = vsel %vm759, %v2269, 0.0
    %v2283 = vadd.f32 %v2281, %v2282
    %v2284 = vsel %vm759, %v2270, 0.0
    %v2285 = vadd.f32 %v2283, %v2284
    %v2286 = vpack.c.bf16 %v2285, %v2285
    %s2287 = scalar_lea.vmem %s6, 32
    %v2288 = vld [vmem:[%s2287] sm:$0xf]
    %v2289 = vld [vmem:[%s2287 + $0x4] sm:$0xf]
    %v2290 = vld [vmem:[%s2287 + $0x8] sm:$0xf]
    %v2291 = vld [vmem:[%s2287 + $0xc] sm:$0xf]
    %v2292 = vperm.slane %v1742, 0
    %v2297 = vunpack.c.l.b16 %v2288
    %v2298 = vunpack.c.l.b16 %v2289
    %v2299 = vunpack.c.l.b16 %v2290
    %v2300 = vunpack.c.l.b16 %v2291
    %v2301 = vpack.c.b16 %v2298, %v2297
    %v2302 = vpack.c.b16 %v2300, %v2299
    %v2306 = vsel %vm172, %v2286, 0
    %2308 = vmatpush.bf16.msra.mxu0 0
    %2309 = vmatpush.bf16.msra.mxu0 0
    %2310 = vmatpush.bf16.msra.mxu0 0
    %2311 = vmatpush.bf16.msra.mxu0 0
    %2312 = vmatpush.bf16.msra.mxu0 0
    %2313 = vmatpush.bf16.msra.mxu0 0
    %2314 = vmatpush.bf16.msra.mxu0 %v2302
    %2315 = vmatpush.bf16.msra.mxu0 %v2301
    %2316 = vmatmul.bf16.gmra.mxu0 %v2306
    %v2317 = vpop.f32.mrf.mxu0
    %v2318 = vadd.f32 %v2292, %v2317
    %v2319 = vpop.f32.mrf.mxu0
    %2320 = vdwg.mxu0
    %v2321 = vadd.f32 %v1740, %v2318
    %v2322 = vsel %vm759, %v2321, 0.0
    %2323 = vadd.xlane.f32.xlu0 %v2322
    %v2324 = vpop.xlane.xlu0 %2323
    %v2325 = vmul.f32 %v2324, %v819
    %v2326 = vsub.f32 %v2321, %v2325
    %v2327 = vmul.f32 %v2326, %v2326
    %v2328 = vsel %vm759, %v2327, 0.0
    %2329 = vadd.xlane.f32.xlu0 %v2328
    %v2330 = vpop.xlane.xlu0 %2329
    %v2331 = vmul.f32 %v2330, %v819
    %v2332 = vadd.f32 %v2331, 1e-05
    %v2333 = vrsqrt.pop %v2332
    %v2334 = vmul.f32 %v2333, %v2332
    %v2335 = vmul.f32 %v2334, %v2333
    %v2336 = vmul.f32 0.5, %v2335
    %v2337 = vsub.f32 1.5, %v2336
    %v2338 = vmul.f32 %v2333, %v2337
    %vm2339 = vweird.f32 %v2332
    %vm2340 = vweird.f32 %v2333
    %vm2341 = vmor %vm2339, %vm2340
    %v2342 = vsel %vm2341, %v2333, %v2338
    %v2343 = vmul.f32 %v2326, %v2342
    %v2344 = vperm.slane %v1742, 1
    %v2345 = vmul.f32 %v2343, %v2344
    %v2346 = vperm.slane %v1742, 2
    %v2347 = vadd.f32 %v2345, %v2346
    %v2348 = vpack.c.bf16 %v2347, %v2347
    %s2349 = scalar_lea.vmem %s7, 32
    %v2350 = vld [vmem:[%s2349] sm:$0xf]
    %v2351 = vld [vmem:[%s2349 + $0x4] sm:$0xf]
    %v2352 = vld [vmem:[%s2349 + $0x8] sm:$0xf]
    %v2353 = vld [vmem:[%s2349 + $0xc] sm:$0xf]
    %s2354 = scalar_lea.vmem %s8, 2
    %v2355 = vld [vmem:[%s2354] sm:$0x1]
    %v2357 = vperm.slane %v2355, 0
    %v2363 = vunpack.c.l.b16 %v2350
    %v2364 = vunpack.c.l.b16 %v2351
    %v2365 = vunpack.c.l.b16 %v2352
    %v2366 = vunpack.c.l.b16 %v2353
    %v2367 = vpack.c.b16 %v2364, %v2363
    %v2368 = vpack.c.b16 %v2366, %v2365
    %v2372 = vsel %vm172, %v2348, 0
    %2374 = vmatpush.bf16.msra.mxu0 0
    %2375 = vmatpush.bf16.msra.mxu0 0
    %2376 = vmatpush.bf16.msra.mxu0 0
    %2377 = vmatpush.bf16.msra.mxu0 0
    %2378 = vmatpush.bf16.msra.mxu0 0
    %2379 = vmatpush.bf16.msra.mxu0 0
    %2380 = vmatpush.bf16.msra.mxu0 %v2368
    %2381 = vmatpush.bf16.msra.mxu0 %v2367
    %2382 = vmatmul.bf16.gmra.mxu0 %v2372
    %v2383 = vpop.f32.mrf.mxu0
    %v2384 = vadd.f32 %v2357, %v2383
    %v2385 = vpop.f32.mrf.mxu0
    %2386 = vdwg.mxu0
    %v2387 = vmax.f32 %v2384, 0.0
    %v2388 = vpack.c.bf16 %v2387, %v2387
    %s2389 = scalar_lea.vmem %s9, 128
    %v2390 = vld [vmem:[%s2389] sm:$0xf]
    %v2391 = vld [vmem:[%s2389 + $0x4] sm:$0xf]
    %v2392 = vld [vmem:[%s2389 + $0x8] sm:$0xf]
    %v2393 = vld [vmem:[%s2389 + $0xc] sm:$0xf]
    %v2394 = vld [vmem:[%s2389 + $0x10] sm:$0xf]
    %v2395 = vld [vmem:[%s2389 + $0x14] sm:$0xf]
    %v2396 = vld [vmem:[%s2389 + $0x18] sm:$0xf]
    %v2397 = vld [vmem:[%s2389 + $0x1c] sm:$0xf]
    %v2398 = vld [vmem:[%s2389 + $0x20] sm:$0xf]
    %v2399 = vld [vmem:[%s2389 + $0x24] sm:$0xf]
    %v2400 = vld [vmem:[%s2389 + $0x28] sm:$0xf]
    %v2401 = vld [vmem:[%s2389 + $0x2c] sm:$0xf]
    %v2402 = vld [vmem:[%s2389 + $0x30] sm:$0xf]
    %v2403 = vld [vmem:[%s2389 + $0x34] sm:$0xf]
    %v2404 = vld [vmem:[%s2389 + $0x38] sm:$0xf]
    %v2405 = vld [vmem:[%s2389 + $0x3c] sm:$0xf]
    %v2406 = vperm.slane %v1742, 3
    %v2423 = vunpack.c.l.b16 %v2390
    %v2424 = vunpack.c.l.b16 %v2391
    %v2425 = vunpack.c.l.b16 %v2392
    %v2426 = vunpack.c.l.b16 %v2393
    %v2427 = vunpack.c.l.b16 %v2394
    %v2428 = vunpack.c.l.b16 %v2395
    %v2429 = vunpack.c.l.b16 %v2396
    %v2430 = vunpack.c.l.b16 %v2397
    %v2431 = vunpack.c.l.b16 %v2398
    %v2432 = vunpack.c.l.b16 %v2399
    %v2433 = vunpack.c.l.b16 %v2400
    %v2434 = vunpack.c.l.b16 %v2401
    %v2435 = vunpack.c.l.b16 %v2402
    %v2436 = vunpack.c.l.b16 %v2403
    %v2437 = vunpack.c.l.b16 %v2404
    %v2438 = vunpack.c.l.b16 %v2405
    %v2439 = vpack.c.b16 %v2424, %v2423
    %v2440 = vpack.c.b16 %v2426, %v2425
    %v2441 = vpack.c.b16 %v2428, %v2427
    %v2442 = vpack.c.b16 %v2430, %v2429
    %v2443 = vpack.c.b16 %v2432, %v2431
    %v2444 = vpack.c.b16 %v2434, %v2433
    %v2445 = vpack.c.b16 %v2436, %v2435
    %v2446 = vpack.c.b16 %v2438, %v2437
    %2455 = vmatpush.bf16.msra.mxu0 %v2446
    %2456 = vmatpush.bf16.msra.mxu0 %v2445
    %2457 = vmatpush.bf16.msra.mxu0 %v2444
    %2458 = vmatpush.bf16.msra.mxu0 %v2443
    %2459 = vmatpush.bf16.msra.mxu0 %v2442
    %2460 = vmatpush.bf16.msra.mxu0 %v2441
    %2461 = vmatpush.bf16.msra.mxu0 %v2440
    %2462 = vmatpush.bf16.msra.mxu0 %v2439
    %2463 = vmatmul.bf16.gmra.mxu0 %v2388
    %v2464 = vpop.f32.mrf.mxu0
    %v2465 = vadd.f32 %v2406, %v2464
    %v2466 = vpop.f32.mrf.mxu0
    %2467 = vdwg.mxu0
    %v2468 = vadd.f32 %v2347, %v2465
    %v2469 = vsel %vm759, %v2468, 0.0
    %2470 = vadd.xlane.f32.xlu0 %v2469
    %v2471 = vpop.xlane.xlu0 %2470
    %v2472 = vmul.f32 %v2471, %v819
    %v2473 = vsub.f32 %v2468, %v2472
    %v2474 = vmul.f32 %v2473, %v2473
    %v2475 = vsel %vm759, %v2474, 0.0
    %2476 = vadd.xlane.f32.xlu0 %v2475
    %v2477 = vpop.xlane.xlu0 %2476
    %v2478 = vmul.f32 %v2477, %v819
    %v2479 = vadd.f32 %v2478, 1e-05
    %v2480 = vrsqrt.pop %v2479
    %v2481 = vmul.f32 %v2480, %v2479
    %v2482 = vmul.f32 %v2481, %v2480
    %v2483 = vmul.f32 0.5, %v2482
    %v2484 = vsub.f32 1.5, %v2483
    %v2485 = vmul.f32 %v2480, %v2484
    %vm2486 = vweird.f32 %v2479
    %vm2487 = vweird.f32 %v2480
    %vm2488 = vmor %vm2486, %vm2487
    %v2489 = vsel %vm2488, %v2480, %v2485
    %v2490 = vmul.f32 %v2473, %v2489
    %v2491 = vperm.slane %v1742, 4
    %v2492 = vmul.f32 %v2490, %v2491
    %v2493 = vperm.slane %v1742, 5
    %v2494 = vadd.f32 %v2492, %v2493
    %s2495 = scalar_lea.vmem %s10, 24
    %v2496 = vld [vmem:[%s2495] sm:$0x3f]
    %v2497 = vpack.c.bf16 %v2494, %v2494
    %s2498 = scalar_lea.vmem %s4, 48
    %v2499 = vld [vmem:[%s2498] sm:$0xf]
    %v2500 = vld [vmem:[%s2498 + $0x4] sm:$0xf]
    %v2501 = vld [vmem:[%s2498 + $0x8] sm:$0xf]
    %v2502 = vld [vmem:[%s2498 + $0xc] sm:$0xf]
    %s2503 = scalar_lea.vmem %s5, 3
    %v2504 = vld [vmem:[%s2503] sm:$0x1]
    %v2506 = vperm.slane %v2504, 0
    %v2512 = vunpack.c.l.b16 %v2499
    %v2513 = vunpack.c.l.b16 %v2500
    %v2514 = vunpack.c.l.b16 %v2501
    %v2515 = vunpack.c.l.b16 %v2502
    %v2516 = vpack.c.b16 %v2513, %v2512
    %v2517 = vpack.c.b16 %v2515, %v2514
    %v2521 = vsel %vm172, %v2497, 0
    %2523 = vmatpush.bf16.msra.mxu0 0
    %2524 = vmatpush.bf16.msra.mxu0 0
    %2525 = vmatpush.bf16.msra.mxu0 0
    %2526 = vmatpush.bf16.msra.mxu0 0
    %2527 = vmatpush.bf16.msra.mxu0 0
    %2528 = vmatpush.bf16.msra.mxu0 0
    %2529 = vmatpush.bf16.msra.mxu0 %v2517
    %2530 = vmatpush.bf16.msra.mxu0 %v2516
    %2531 = vmatmul.bf16.gmra.mxu0 %v2521
    %v2532 = vpop.f32.mrf.mxu0
    %v2533 = vadd.f32 %v2506, %v2532
    %v2534 = vpop.f32.mrf.mxu0
    %2535 = vdwg.mxu0
    %v2536 = vmul.f32 %v2533, %v221
    %v2537 = vmul.f32 %v2533, %v222
    %v2538 = vmul.f32 %v2533, %v223
    %v2539 = vmul.f32 %v2533, %v224
    %v2540 = vmul.f32 %v2533, %v225
    %v2541 = vmul.f32 %v2533, %v226
    %v2542 = vmul.f32 %v2533, %v227
    %v2543 = vmul.f32 %v2533, %v228
    %2545 = vrot.lane.b32.xlu0 %v2533, 96
    %v2546 = vpop.permute.xlu0 %2545
    %v2548 = vsel %vm172, %v2536, 0
    %v2550 = vsel %vm172, %v2546, 0
    %2552 = vmatpush.xpose.msra.mxu0 0.0
    %2553 = vmatpush.xpose.msra.mxu0 0.0
    %2554 = vmatpush.xpose.msra.mxu0 0.0
    %2555 = vmatpush.xpose.msra.mxu0 0.0
    %2556 = vmatpush.xpose.msra.mxu0 0.0
    %2557 = vmatpush.xpose.msra.mxu0 0.0
    %2558 = vmatpush.xpose.msra.mxu0 0.0
    %2559 = vmatpush.xpose.msra.mxu0 0.0
    %2560 = vmatpush.xpose.msra.mxu0 0.0
    %2561 = vmatpush.xpose.msra.mxu0 0.0
    %2562 = vmatpush.xpose.msra.mxu0 0.0
    %2563 = vmatpush.xpose.msra.mxu0 0.0
    %2564 = vmatpush.xpose.msra.mxu0 0.0
    %2565 = vmatpush.xpose.msra.mxu0 0.0
    %2566 = vmatpush.xpose.msra.mxu0 0.0
    %2567 = vmatpush.xpose.msra.mxu0 %v2550
    %2568 = vmatmul.f32.gmra.mxu0 %v2548
    %v2569 = vpop.f32.mrf.mxu0
    %v2570 = vadd.f32 0.0, %v2569
    %2571 = vdwg.mxu0
    %v2573 = vsel %vm172, %v2537, 0
    %2575 = vmatpush.xpose.msra.mxu0 0.0
    %2576 = vmatpush.xpose.msra.mxu0 0.0
    %2577 = vmatpush.xpose.msra.mxu0 0.0
    %2578 = vmatpush.xpose.msra.mxu0 0.0
    %2579 = vmatpush.xpose.msra.mxu0 0.0
    %2580 = vmatpush.xpose.msra.mxu0 0.0
    %2581 = vmatpush.xpose.msra.mxu0 0.0
    %2582 = vmatpush.xpose.msra.mxu0 0.0
    %2583 = vmatpush.xpose.msra.mxu0 0.0
    %2584 = vmatpush.xpose.msra.mxu0 0.0
    %2585 = vmatpush.xpose.msra.mxu0 0.0
    %2586 = vmatpush.xpose.msra.mxu0 0.0
    %2587 = vmatpush.xpose.msra.mxu0 0.0
    %2588 = vmatpush.xpose.msra.mxu0 0.0
    %2589 = vmatpush.xpose.msra.mxu0 0.0
    %2590 = vmatpush.xpose.msra.mxu0 %v2550
    %2591 = vmatmul.f32.gmra.mxu0 %v2573
    %v2592 = vpop.f32.mrf.mxu0
    %v2593 = vadd.f32 0.0, %v2592
    %2594 = vdwg.mxu0
    %v2596 = vsel %vm172, %v2538, 0
    %2598 = vmatpush.xpose.msra.mxu0 0.0
    %2599 = vmatpush.xpose.msra.mxu0 0.0
    %2600 = vmatpush.xpose.msra.mxu0 0.0
    %2601 = vmatpush.xpose.msra.mxu0 0.0
    %2602 = vmatpush.xpose.msra.mxu0 0.0
    %2603 = vmatpush.xpose.msra.mxu0 0.0
    %2604 = vmatpush.xpose.msra.mxu0 0.0
    %2605 = vmatpush.xpose.msra.mxu0 0.0
    %2606 = vmatpush.xpose.msra.mxu0 0.0
    %2607 = vmatpush.xpose.msra.mxu0 0.0
    %2608 = vmatpush.xpose.msra.mxu0 0.0
    %2609 = vmatpush.xpose.msra.mxu0 0.0
    %2610 = vmatpush.xpose.msra.mxu0 0.0
    %2611 = vmatpush.xpose.msra.mxu0 0.0
    %2612 = vmatpush.xpose.msra.mxu0 0.0
    %2613 = vmatpush.xpose.msra.mxu0 %v2550
    %2614 = vmatmul.f32.gmra.mxu0 %v2596
    %v2615 = vpop.f32.mrf.mxu0
    %v2616 = vadd.f32 0.0, %v2615
    %2617 = vdwg.mxu0
    %v2619 = vsel %vm172, %v2539, 0
    %2621 = vmatpush.xpose.msra.mxu0 0.0
    %2622 = vmatpush.xpose.msra.mxu0 0.0
    %2623 = vmatpush.xpose.msra.mxu0 0.0
    %2624 = vmatpush.xpose.msra.mxu0 0.0
    %2625 = vmatpush.xpose.msra.mxu0 0.0
    %2626 = vmatpush.xpose.msra.mxu0 0.0
    %2627 = vmatpush.xpose.msra.mxu0 0.0
    %2628 = vmatpush.xpose.msra.mxu0 0.0
    %2629 = vmatpush.xpose.msra.mxu0 0.0
    %2630 = vmatpush.xpose.msra.mxu0 0.0
    %2631 = vmatpush.xpose.msra.mxu0 0.0
    %2632 = vmatpush.xpose.msra.mxu0 0.0
    %2633 = vmatpush.xpose.msra.mxu0 0.0
    %2634 = vmatpush.xpose.msra.mxu0 0.0
    %2635 = vmatpush.xpose.msra.mxu0 0.0
    %2636 = vmatpush.xpose.msra.mxu0 %v2550
    %2637 = vmatmul.f32.gmra.mxu0 %v2619
    %v2638 = vpop.f32.mrf.mxu0
    %v2639 = vadd.f32 0.0, %v2638
    %2640 = vdwg.mxu0
    %v2642 = vsel %vm172, %v2540, 0
    %2644 = vmatpush.xpose.msra.mxu0 0.0
    %2645 = vmatpush.xpose.msra.mxu0 0.0
    %2646 = vmatpush.xpose.msra.mxu0 0.0
    %2647 = vmatpush.xpose.msra.mxu0 0.0
    %2648 = vmatpush.xpose.msra.mxu0 0.0
    %2649 = vmatpush.xpose.msra.mxu0 0.0
    %2650 = vmatpush.xpose.msra.mxu0 0.0
    %2651 = vmatpush.xpose.msra.mxu0 0.0
    %2652 = vmatpush.xpose.msra.mxu0 0.0
    %2653 = vmatpush.xpose.msra.mxu0 0.0
    %2654 = vmatpush.xpose.msra.mxu0 0.0
    %2655 = vmatpush.xpose.msra.mxu0 0.0
    %2656 = vmatpush.xpose.msra.mxu0 0.0
    %2657 = vmatpush.xpose.msra.mxu0 0.0
    %2658 = vmatpush.xpose.msra.mxu0 0.0
    %2659 = vmatpush.xpose.msra.mxu0 %v2550
    %2660 = vmatmul.f32.gmra.mxu0 %v2642
    %v2661 = vpop.f32.mrf.mxu0
    %v2662 = vadd.f32 0.0, %v2661
    %2663 = vdwg.mxu0
    %v2665 = vsel %vm172, %v2541, 0
    %2667 = vmatpush.xpose.msra.mxu0 0.0
    %2668 = vmatpush.xpose.msra.mxu0 0.0
    %2669 = vmatpush.xpose.msra.mxu0 0.0
    %2670 = vmatpush.xpose.msra.mxu0 0.0
    %2671 = vmatpush.xpose.msra.mxu0 0.0
    %2672 = vmatpush.xpose.msra.mxu0 0.0
    %2673 = vmatpush.xpose.msra.mxu0 0.0
    %2674 = vmatpush.xpose.msra.mxu0 0.0
    %2675 = vmatpush.xpose.msra.mxu0 0.0
    %2676 = vmatpush.xpose.msra.mxu0 0.0
    %2677 = vmatpush.xpose.msra.mxu0 0.0
    %2678 = vmatpush.xpose.msra.mxu0 0.0
    %2679 = vmatpush.xpose.msra.mxu0 0.0
    %2680 = vmatpush.xpose.msra.mxu0 0.0
    %2681 = vmatpush.xpose.msra.mxu0 0.0
    %2682 = vmatpush.xpose.msra.mxu0 %v2550
    %2683 = vmatmul.f32.gmra.mxu0 %v2665
    %v2684 = vpop.f32.mrf.mxu0
    %v2685 = vadd.f32 0.0, %v2684
    %2686 = vdwg.mxu0
    %v2688 = vsel %vm172, %v2542, 0
    %2690 = vmatpush.xpose.msra.mxu0 0.0
    %2691 = vmatpush.xpose.msra.mxu0 0.0
    %2692 = vmatpush.xpose.msra.mxu0 0.0
    %2693 = vmatpush.xpose.msra.mxu0 0.0
    %2694 = vmatpush.xpose.msra.mxu0 0.0
    %2695 = vmatpush.xpose.msra.mxu0 0.0
    %2696 = vmatpush.xpose.msra.mxu0 0.0
    %2697 = vmatpush.xpose.msra.mxu0 0.0
    %2698 = vmatpush.xpose.msra.mxu0 0.0
    %2699 = vmatpush.xpose.msra.mxu0 0.0
    %2700 = vmatpush.xpose.msra.mxu0 0.0
    %2701 = vmatpush.xpose.msra.mxu0 0.0
    %2702 = vmatpush.xpose.msra.mxu0 0.0
    %2703 = vmatpush.xpose.msra.mxu0 0.0
    %2704 = vmatpush.xpose.msra.mxu0 0.0
    %2705 = vmatpush.xpose.msra.mxu0 %v2550
    %2706 = vmatmul.f32.gmra.mxu0 %v2688
    %v2707 = vpop.f32.mrf.mxu0
    %v2708 = vadd.f32 0.0, %v2707
    %2709 = vdwg.mxu0
    %v2711 = vsel %vm172, %v2543, 0
    %2713 = vmatpush.xpose.msra.mxu0 0.0
    %2714 = vmatpush.xpose.msra.mxu0 0.0
    %2715 = vmatpush.xpose.msra.mxu0 0.0
    %2716 = vmatpush.xpose.msra.mxu0 0.0
    %2717 = vmatpush.xpose.msra.mxu0 0.0
    %2718 = vmatpush.xpose.msra.mxu0 0.0
    %2719 = vmatpush.xpose.msra.mxu0 0.0
    %2720 = vmatpush.xpose.msra.mxu0 0.0
    %2721 = vmatpush.xpose.msra.mxu0 0.0
    %2722 = vmatpush.xpose.msra.mxu0 0.0
    %2723 = vmatpush.xpose.msra.mxu0 0.0
    %2724 = vmatpush.xpose.msra.mxu0 0.0
    %2725 = vmatpush.xpose.msra.mxu0 0.0
    %2726 = vmatpush.xpose.msra.mxu0 0.0
    %2727 = vmatpush.xpose.msra.mxu0 0.0
    %2728 = vmatpush.xpose.msra.mxu0 %v2550
    %2729 = vmatmul.f32.gmra.mxu0 %v2711
    %v2730 = vpop.f32.mrf.mxu0
    %v2731 = vadd.f32 0.0, %v2730
    %2732 = vdwg.mxu0
    %v2733 = vmul.f32 %v2570, 0.5
    %v2734 = vmul.f32 %v2593, 0.5
    %v2735 = vmul.f32 %v2616, 0.5
    %v2736 = vmul.f32 %v2639, 0.5
    %v2737 = vmul.f32 %v2662, 0.5
    %v2738 = vmul.f32 %v2685, 0.5
    %v2739 = vmul.f32 %v2708, 0.5
    %v2740 = vmul.f32 %v2731, 0.5
    %v2741 = vsel %vm472, %v2733, -inf
    %2742 = vmax.xlane.f32.xlu0 %v2741
    %v2743 = vpop.xlane.xlu0 %2742
    %v2744 = vsel %vm472, %v2734, -inf
    %2745 = vmax.xlane.f32.xlu0 %v2744
    %v2746 = vpop.xlane.xlu0 %2745
    %v2747 = vsel %vm472, %v2735, -inf
    %2748 = vmax.xlane.f32.xlu0 %v2747
    %v2749 = vpop.xlane.xlu0 %2748
    %v2750 = vsel %vm472, %v2736, -inf
    %2751 = vmax.xlane.f32.xlu0 %v2750
    %v2752 = vpop.xlane.xlu0 %2751
    %v2753 = vsel %vm472, %v2737, -inf
    %2754 = vmax.xlane.f32.xlu0 %v2753
    %v2755 = vpop.xlane.xlu0 %2754
    %v2756 = vsel %vm472, %v2738, -inf
    %2757 = vmax.xlane.f32.xlu0 %v2756
    %v2758 = vpop.xlane.xlu0 %2757
    %v2759 = vsel %vm472, %v2739, -inf
    %2760 = vmax.xlane.f32.xlu0 %v2759
    %v2761 = vpop.xlane.xlu0 %2760
    %v2762 = vsel %vm472, %v2740, -inf
    %2763 = vmax.xlane.f32.xlu0 %v2762
    %v2764 = vpop.xlane.xlu0 %2763
    %v2765 = vsub.f32 %v2733, %v2743
    %v2766 = vsub.f32 %v2734, %v2746
    %v2767 = vsub.f32 %v2735, %v2749
    %v2768 = vsub.f32 %v2736, %v2752
    %v2769 = vsub.f32 %v2737, %v2755
    %v2770 = vsub.f32 %v2738, %v2758
    %v2771 = vsub.f32 %v2739, %v2761
    %v2772 = vsub.f32 %v2740, %v2764
    %v2773 = vmul.f32 %v2765, 1.442695
    %v2774 = vpow.pop %v2773
    %v2775 = vmul.f32 %v2766, 1.442695
    %v2776 = vpow.pop %v2775
    %v2777 = vmul.f32 %v2767, 1.442695
    %v2778 = vpow.pop %v2777
    %v2779 = vmul.f32 %v2768, 1.442695
    %v2780 = vpow.pop %v2779
    %v2781 = vmul.f32 %v2769, 1.442695
    %v2782 = vpow.pop %v2781
    %v2783 = vmul.f32 %v2770, 1.442695
    %v2784 = vpow.pop %v2783
    %v2785 = vmul.f32 %v2771, 1.442695
    %v2786 = vpow.pop %v2785
    %v2787 = vmul.f32 %v2772, 1.442695
    %v2788 = vpow.pop %v2787
    %v2789 = vsel %vm472, %v2774, 0.0
    %2790 = vadd.xlane.f32.xlu0 %v2789
    %v2791 = vpop.xlane.xlu0 %2790
    %v2792 = vsel %vm472, %v2776, 0.0
    %2793 = vadd.xlane.f32.xlu0 %v2792
    %v2794 = vpop.xlane.xlu0 %2793
    %v2795 = vsel %vm472, %v2778, 0.0
    %2796 = vadd.xlane.f32.xlu0 %v2795
    %v2797 = vpop.xlane.xlu0 %2796
    %v2798 = vsel %vm472, %v2780, 0.0
    %2799 = vadd.xlane.f32.xlu0 %v2798
    %v2800 = vpop.xlane.xlu0 %2799
    %v2801 = vsel %vm472, %v2782, 0.0
    %2802 = vadd.xlane.f32.xlu0 %v2801
    %v2803 = vpop.xlane.xlu0 %2802
    %v2804 = vsel %vm472, %v2784, 0.0
    %2805 = vadd.xlane.f32.xlu0 %v2804
    %v2806 = vpop.xlane.xlu0 %2805
    %v2807 = vsel %vm472, %v2786, 0.0
    %2808 = vadd.xlane.f32.xlu0 %v2807
    %v2809 = vpop.xlane.xlu0 %2808
    %v2810 = vsel %vm472, %v2788, 0.0
    %2811 = vadd.xlane.f32.xlu0 %v2810
    %v2812 = vpop.xlane.xlu0 %2811
    %v2813 = vrcp.pop %v2791
    %v2814 = vrcp.pop %v2794
    %v2815 = vrcp.pop %v2797
    %v2816 = vrcp.pop %v2800
    %v2817 = vrcp.pop %v2803
    %v2818 = vrcp.pop %v2806
    %v2819 = vrcp.pop %v2809
    %v2820 = vrcp.pop %v2812
    %v2821 = vmul.f32 %v2774, %v2813
    %v2822 = vmul.f32 %v2776, %v2814
    %v2823 = vmul.f32 %v2778, %v2815
    %v2824 = vmul.f32 %v2780, %v2816
    %v2825 = vmul.f32 %v2782, %v2817
    %v2826 = vmul.f32 %v2784, %v2818
    %v2827 = vmul.f32 %v2786, %v2819
    %v2828 = vmul.f32 %v2788, %v2820
    %2829 = vrot.lane.b32.xlu0 %v2533, 64
    %v2830 = vpop.permute.xlu0 %2829
    %v2832 = vsel %vm563, %v2821, 0
    %v2834 = vsel %vm567, %v2830, 0
    %2836 = vmatpush.msra.mxu0 0.0
    %2837 = vmatpush.msra.mxu0 0.0
    %2838 = vmatpush.msra.mxu0 0.0
    %2839 = vmatpush.msra.mxu0 0.0
    %2840 = vmatpush.msra.mxu0 0.0
    %2841 = vmatpush.msra.mxu0 0.0
    %2842 = vmatpush.msra.mxu0 0.0
    %2843 = vmatpush.msra.mxu0 0.0
    %2844 = vmatpush.msra.mxu0 0.0
    %2845 = vmatpush.msra.mxu0 0.0
    %2846 = vmatpush.msra.mxu0 0.0
    %2847 = vmatpush.msra.mxu0 0.0
    %2848 = vmatpush.msra.mxu0 0.0
    %2849 = vmatpush.msra.mxu0 0.0
    %2850 = vmatpush.msra.mxu0 0.0
    %2851 = vmatpush.msra.mxu0 %v2834
    %2852 = vmatmul.f32.gmra.mxu0 %v2832
    %v2853 = vpop.f32.mrf.mxu0
    %v2854 = vadd.f32 0.0, %v2853
    %2855 = vdwg.mxu0
    %v2857 = vsel %vm563, %v2822, 0
    %2859 = vmatpush.msra.mxu0 0.0
    %2860 = vmatpush.msra.mxu0 0.0
    %2861 = vmatpush.msra.mxu0 0.0
    %2862 = vmatpush.msra.mxu0 0.0
    %2863 = vmatpush.msra.mxu0 0.0
    %2864 = vmatpush.msra.mxu0 0.0
    %2865 = vmatpush.msra.mxu0 0.0
    %2866 = vmatpush.msra.mxu0 0.0
    %2867 = vmatpush.msra.mxu0 0.0
    %2868 = vmatpush.msra.mxu0 0.0
    %2869 = vmatpush.msra.mxu0 0.0
    %2870 = vmatpush.msra.mxu0 0.0
    %2871 = vmatpush.msra.mxu0 0.0
    %2872 = vmatpush.msra.mxu0 0.0
    %2873 = vmatpush.msra.mxu0 0.0
    %2874 = vmatpush.msra.mxu0 %v2834
    %2875 = vmatmul.f32.gmra.mxu0 %v2857
    %v2876 = vpop.f32.mrf.mxu0
    %v2877 = vadd.f32 0.0, %v2876
    %2878 = vdwg.mxu0
    %v2880 = vsel %vm563, %v2823, 0
    %2882 = vmatpush.msra.mxu0 0.0
    %2883 = vmatpush.msra.mxu0 0.0
    %2884 = vmatpush.msra.mxu0 0.0
    %2885 = vmatpush.msra.mxu0 0.0
    %2886 = vmatpush.msra.mxu0 0.0
    %2887 = vmatpush.msra.mxu0 0.0
    %2888 = vmatpush.msra.mxu0 0.0
    %2889 = vmatpush.msra.mxu0 0.0
    %2890 = vmatpush.msra.mxu0 0.0
    %2891 = vmatpush.msra.mxu0 0.0
    %2892 = vmatpush.msra.mxu0 0.0
    %2893 = vmatpush.msra.mxu0 0.0
    %2894 = vmatpush.msra.mxu0 0.0
    %2895 = vmatpush.msra.mxu0 0.0
    %2896 = vmatpush.msra.mxu0 0.0
    %2897 = vmatpush.msra.mxu0 %v2834
    %2898 = vmatmul.f32.gmra.mxu0 %v2880
    %v2899 = vpop.f32.mrf.mxu0
    %v2900 = vadd.f32 0.0, %v2899
    %2901 = vdwg.mxu0
    %v2903 = vsel %vm563, %v2824, 0
    %2905 = vmatpush.msra.mxu0 0.0
    %2906 = vmatpush.msra.mxu0 0.0
    %2907 = vmatpush.msra.mxu0 0.0
    %2908 = vmatpush.msra.mxu0 0.0
    %2909 = vmatpush.msra.mxu0 0.0
    %2910 = vmatpush.msra.mxu0 0.0
    %2911 = vmatpush.msra.mxu0 0.0
    %2912 = vmatpush.msra.mxu0 0.0
    %2913 = vmatpush.msra.mxu0 0.0
    %2914 = vmatpush.msra.mxu0 0.0
    %2915 = vmatpush.msra.mxu0 0.0
    %2916 = vmatpush.msra.mxu0 0.0
    %2917 = vmatpush.msra.mxu0 0.0
    %2918 = vmatpush.msra.mxu0 0.0
    %2919 = vmatpush.msra.mxu0 0.0
    %2920 = vmatpush.msra.mxu0 %v2834
    %2921 = vmatmul.f32.gmra.mxu0 %v2903
    %v2922 = vpop.f32.mrf.mxu0
    %v2923 = vadd.f32 0.0, %v2922
    %2924 = vdwg.mxu0
    %v2926 = vsel %vm563, %v2825, 0
    %2928 = vmatpush.msra.mxu0 0.0
    %2929 = vmatpush.msra.mxu0 0.0
    %2930 = vmatpush.msra.mxu0 0.0
    %2931 = vmatpush.msra.mxu0 0.0
    %2932 = vmatpush.msra.mxu0 0.0
    %2933 = vmatpush.msra.mxu0 0.0
    %2934 = vmatpush.msra.mxu0 0.0
    %2935 = vmatpush.msra.mxu0 0.0
    %2936 = vmatpush.msra.mxu0 0.0
    %2937 = vmatpush.msra.mxu0 0.0
    %2938 = vmatpush.msra.mxu0 0.0
    %2939 = vmatpush.msra.mxu0 0.0
    %2940 = vmatpush.msra.mxu0 0.0
    %2941 = vmatpush.msra.mxu0 0.0
    %2942 = vmatpush.msra.mxu0 0.0
    %2943 = vmatpush.msra.mxu0 %v2834
    %2944 = vmatmul.f32.gmra.mxu0 %v2926
    %v2945 = vpop.f32.mrf.mxu0
    %v2946 = vadd.f32 0.0, %v2945
    %2947 = vdwg.mxu0
    %v2949 = vsel %vm563, %v2826, 0
    %2951 = vmatpush.msra.mxu0 0.0
    %2952 = vmatpush.msra.mxu0 0.0
    %2953 = vmatpush.msra.mxu0 0.0
    %2954 = vmatpush.msra.mxu0 0.0
    %2955 = vmatpush.msra.mxu0 0.0
    %2956 = vmatpush.msra.mxu0 0.0
    %2957 = vmatpush.msra.mxu0 0.0
    %2958 = vmatpush.msra.mxu0 0.0
    %2959 = vmatpush.msra.mxu0 0.0
    %2960 = vmatpush.msra.mxu0 0.0
    %2961 = vmatpush.msra.mxu0 0.0
    %2962 = vmatpush.msra.mxu0 0.0
    %2963 = vmatpush.msra.mxu0 0.0
    %2964 = vmatpush.msra.mxu0 0.0
    %2965 = vmatpush.msra.mxu0 0.0
    %2966 = vmatpush.msra.mxu0 %v2834
    %2967 = vmatmul.f32.gmra.mxu0 %v2949
    %v2968 = vpop.f32.mrf.mxu0
    %v2969 = vadd.f32 0.0, %v2968
    %2970 = vdwg.mxu0
    %v2972 = vsel %vm563, %v2827, 0
    %2974 = vmatpush.msra.mxu0 0.0
    %2975 = vmatpush.msra.mxu0 0.0
    %2976 = vmatpush.msra.mxu0 0.0
    %2977 = vmatpush.msra.mxu0 0.0
    %2978 = vmatpush.msra.mxu0 0.0
    %2979 = vmatpush.msra.mxu0 0.0
    %2980 = vmatpush.msra.mxu0 0.0
    %2981 = vmatpush.msra.mxu0 0.0
    %2982 = vmatpush.msra.mxu0 0.0
    %2983 = vmatpush.msra.mxu0 0.0
    %2984 = vmatpush.msra.mxu0 0.0
    %2985 = vmatpush.msra.mxu0 0.0
    %2986 = vmatpush.msra.mxu0 0.0
    %2987 = vmatpush.msra.mxu0 0.0
    %2988 = vmatpush.msra.mxu0 0.0
    %2989 = vmatpush.msra.mxu0 %v2834
    %2990 = vmatmul.f32.gmra.mxu0 %v2972
    %v2991 = vpop.f32.mrf.mxu0
    %v2992 = vadd.f32 0.0, %v2991
    %2993 = vdwg.mxu0
    %v2995 = vsel %vm563, %v2828, 0
    %2997 = vmatpush.msra.mxu0 0.0
    %2998 = vmatpush.msra.mxu0 0.0
    %2999 = vmatpush.msra.mxu0 0.0
    %3000 = vmatpush.msra.mxu0 0.0
    %3001 = vmatpush.msra.mxu0 0.0
    %3002 = vmatpush.msra.mxu0 0.0
    %3003 = vmatpush.msra.mxu0 0.0
    %3004 = vmatpush.msra.mxu0 0.0
    %3005 = vmatpush.msra.mxu0 0.0
    %3006 = vmatpush.msra.mxu0 0.0
    %3007 = vmatpush.msra.mxu0 0.0
    %3008 = vmatpush.msra.mxu0 0.0
    %3009 = vmatpush.msra.mxu0 0.0
    %3010 = vmatpush.msra.mxu0 0.0
    %3011 = vmatpush.msra.mxu0 0.0
    %3012 = vmatpush.msra.mxu0 %v2834
    %3013 = vmatmul.f32.gmra.mxu0 %v2995
    %v3014 = vpop.f32.mrf.mxu0
    %v3015 = vadd.f32 0.0, %v3014
    %3016 = vdwg.mxu0
    %v3017 = vmul.f32 %v2854, %v221
    %v3018 = vmul.f32 %v2877, %v222
    %v3019 = vmul.f32 %v2900, %v223
    %v3020 = vmul.f32 %v2923, %v224
    %v3021 = vmul.f32 %v2946, %v225
    %v3022 = vmul.f32 %v2969, %v226
    %v3023 = vmul.f32 %v2992, %v227
    %v3024 = vmul.f32 %v3015, %v228
    %v3025 = vsel %vm759, %v3017, 0.0
    %v3026 = vsel %vm759, %v3018, 0.0
    %v3027 = vadd.f32 %v3025, %v3026
    %v3028 = vsel %vm759, %v3019, 0.0
    %v3029 = vadd.f32 %v3027, %v3028
    %v3030 = vsel %vm759, %v3020, 0.0
    %v3031 = vadd.f32 %v3029, %v3030
    %v3032 = vsel %vm759, %v3021, 0.0
    %v3033 = vadd.f32 %v3031, %v3032
    %v3034 = vsel %vm759, %v3022, 0.0
    %v3035 = vadd.f32 %v3033, %v3034
    %v3036 = vsel %vm759, %v3023, 0.0
    %v3037 = vadd.f32 %v3035, %v3036
    %v3038 = vsel %vm759, %v3024, 0.0
    %v3039 = vadd.f32 %v3037, %v3038
    %v3040 = vpack.c.bf16 %v3039, %v3039
    %s3041 = scalar_lea.vmem %s6, 48
    %v3042 = vld [vmem:[%s3041] sm:$0xf]
    %v3043 = vld [vmem:[%s3041 + $0x4] sm:$0xf]
    %v3044 = vld [vmem:[%s3041 + $0x8] sm:$0xf]
    %v3045 = vld [vmem:[%s3041 + $0xc] sm:$0xf]
    %v3046 = vperm.slane %v2496, 0
    %v3051 = vunpack.c.l.b16 %v3042
    %v3052 = vunpack.c.l.b16 %v3043
    %v3053 = vunpack.c.l.b16 %v3044
    %v3054 = vunpack.c.l.b16 %v3045
    %v3055 = vpack.c.b16 %v3052, %v3051
    %v3056 = vpack.c.b16 %v3054, %v3053
    %v3060 = vsel %vm172, %v3040, 0
    %3062 = vmatpush.bf16.msra.mxu0 0
    %3063 = vmatpush.bf16.msra.mxu0 0
    %3064 = vmatpush.bf16.msra.mxu0 0
    %3065 = vmatpush.bf16.msra.mxu0 0
    %3066 = vmatpush.bf16.msra.mxu0 0
    %3067 = vmatpush.bf16.msra.mxu0 0
    %3068 = vmatpush.bf16.msra.mxu0 %v3056
    %3069 = vmatpush.bf16.msra.mxu0 %v3055
    %3070 = vmatmul.bf16.gmra.mxu0 %v3060
    %v3071 = vpop.f32.mrf.mxu0
    %v3072 = vadd.f32 %v3046, %v3071
    %v3073 = vpop.f32.mrf.mxu0
    %3074 = vdwg.mxu0
    %v3075 = vadd.f32 %v2494, %v3072
    %v3076 = vsel %vm759, %v3075, 0.0
    %3077 = vadd.xlane.f32.xlu0 %v3076
    %v3078 = vpop.xlane.xlu0 %3077
    %v3079 = vmul.f32 %v3078, %v819
    %v3080 = vsub.f32 %v3075, %v3079
    %v3081 = vmul.f32 %v3080, %v3080
    %v3082 = vsel %vm759, %v3081, 0.0
    %3083 = vadd.xlane.f32.xlu0 %v3082
    %v3084 = vpop.xlane.xlu0 %3083
    %v3085 = vmul.f32 %v3084, %v819
    %v3086 = vadd.f32 %v3085, 1e-05
    %v3087 = vrsqrt.pop %v3086
    %v3088 = vmul.f32 %v3087, %v3086
    %v3089 = vmul.f32 %v3088, %v3087
    %v3090 = vmul.f32 0.5, %v3089
    %v3091 = vsub.f32 1.5, %v3090
    %v3092 = vmul.f32 %v3087, %v3091
    %vm3093 = vweird.f32 %v3086
    %vm3094 = vweird.f32 %v3087
    %vm3095 = vmor %vm3093, %vm3094
    %v3096 = vsel %vm3095, %v3087, %v3092
    %v3097 = vmul.f32 %v3080, %v3096
    %v3098 = vperm.slane %v2496, 1
    %v3099 = vmul.f32 %v3097, %v3098
    %v3100 = vperm.slane %v2496, 2
    %v3101 = vadd.f32 %v3099, %v3100
    %v3102 = vpack.c.bf16 %v3101, %v3101
    %s3103 = scalar_lea.vmem %s7, 48
    %v3104 = vld [vmem:[%s3103] sm:$0xf]
    %v3105 = vld [vmem:[%s3103 + $0x4] sm:$0xf]
    %v3106 = vld [vmem:[%s3103 + $0x8] sm:$0xf]
    %v3107 = vld [vmem:[%s3103 + $0xc] sm:$0xf]
    %s3108 = scalar_lea.vmem %s8, 3
    %v3109 = vld [vmem:[%s3108] sm:$0x1]
    %v3111 = vperm.slane %v3109, 0
    %v3117 = vunpack.c.l.b16 %v3104
    %v3118 = vunpack.c.l.b16 %v3105
    %v3119 = vunpack.c.l.b16 %v3106
    %v3120 = vunpack.c.l.b16 %v3107
    %v3121 = vpack.c.b16 %v3118, %v3117
    %v3122 = vpack.c.b16 %v3120, %v3119
    %v3126 = vsel %vm172, %v3102, 0
    %3128 = vmatpush.bf16.msra.mxu0 0
    %3129 = vmatpush.bf16.msra.mxu0 0
    %3130 = vmatpush.bf16.msra.mxu0 0
    %3131 = vmatpush.bf16.msra.mxu0 0
    %3132 = vmatpush.bf16.msra.mxu0 0
    %3133 = vmatpush.bf16.msra.mxu0 0
    %3134 = vmatpush.bf16.msra.mxu0 %v3122
    %3135 = vmatpush.bf16.msra.mxu0 %v3121
    %3136 = vmatmul.bf16.gmra.mxu0 %v3126
    %v3137 = vpop.f32.mrf.mxu0
    %v3138 = vadd.f32 %v3111, %v3137
    %v3139 = vpop.f32.mrf.mxu0
    %3140 = vdwg.mxu0
    %v3141 = vmax.f32 %v3138, 0.0
    %v3142 = vpack.c.bf16 %v3141, %v3141
    %s3143 = scalar_lea.vmem %s9, 192
    %v3144 = vld [vmem:[%s3143] sm:$0xf]
    %v3145 = vld [vmem:[%s3143 + $0x4] sm:$0xf]
    %v3146 = vld [vmem:[%s3143 + $0x8] sm:$0xf]
    %v3147 = vld [vmem:[%s3143 + $0xc] sm:$0xf]
    %v3148 = vld [vmem:[%s3143 + $0x10] sm:$0xf]
    %v3149 = vld [vmem:[%s3143 + $0x14] sm:$0xf]
    %v3150 = vld [vmem:[%s3143 + $0x18] sm:$0xf]
    %v3151 = vld [vmem:[%s3143 + $0x1c] sm:$0xf]
    %v3152 = vld [vmem:[%s3143 + $0x20] sm:$0xf]
    %v3153 = vld [vmem:[%s3143 + $0x24] sm:$0xf]
    %v3154 = vld [vmem:[%s3143 + $0x28] sm:$0xf]
    %v3155 = vld [vmem:[%s3143 + $0x2c] sm:$0xf]
    %v3156 = vld [vmem:[%s3143 + $0x30] sm:$0xf]
    %v3157 = vld [vmem:[%s3143 + $0x34] sm:$0xf]
    %v3158 = vld [vmem:[%s3143 + $0x38] sm:$0xf]
    %v3159 = vld [vmem:[%s3143 + $0x3c] sm:$0xf]
    %v3160 = vperm.slane %v2496, 3
    %v3177 = vunpack.c.l.b16 %v3144
    %v3178 = vunpack.c.l.b16 %v3145
    %v3179 = vunpack.c.l.b16 %v3146
    %v3180 = vunpack.c.l.b16 %v3147
    %v3181 = vunpack.c.l.b16 %v3148
    %v3182 = vunpack.c.l.b16 %v3149
    %v3183 = vunpack.c.l.b16 %v3150
    %v3184 = vunpack.c.l.b16 %v3151
    %v3185 = vunpack.c.l.b16 %v3152
    %v3186 = vunpack.c.l.b16 %v3153
    %v3187 = vunpack.c.l.b16 %v3154
    %v3188 = vunpack.c.l.b16 %v3155
    %v3189 = vunpack.c.l.b16 %v3156
    %v3190 = vunpack.c.l.b16 %v3157
    %v3191 = vunpack.c.l.b16 %v3158
    %v3192 = vunpack.c.l.b16 %v3159
    %v3193 = vpack.c.b16 %v3178, %v3177
    %v3194 = vpack.c.b16 %v3180, %v3179
    %v3195 = vpack.c.b16 %v3182, %v3181
    %v3196 = vpack.c.b16 %v3184, %v3183
    %v3197 = vpack.c.b16 %v3186, %v3185
    %v3198 = vpack.c.b16 %v3188, %v3187
    %v3199 = vpack.c.b16 %v3190, %v3189
    %v3200 = vpack.c.b16 %v3192, %v3191
    %3209 = vmatpush.bf16.msra.mxu0 %v3200
    %3210 = vmatpush.bf16.msra.mxu0 %v3199
    %3211 = vmatpush.bf16.msra.mxu0 %v3198
    %3212 = vmatpush.bf16.msra.mxu0 %v3197
    %3213 = vmatpush.bf16.msra.mxu0 %v3196
    %3214 = vmatpush.bf16.msra.mxu0 %v3195
    %3215 = vmatpush.bf16.msra.mxu0 %v3194
    %3216 = vmatpush.bf16.msra.mxu0 %v3193
    %3217 = vmatmul.bf16.gmra.mxu0 %v3142
    %v3218 = vpop.f32.mrf.mxu0
    %v3219 = vadd.f32 %v3160, %v3218
    %v3220 = vpop.f32.mrf.mxu0
    %3221 = vdwg.mxu0
    %v3222 = vadd.f32 %v3101, %v3219
    %v3223 = vsel %vm759, %v3222, 0.0
    %3224 = vadd.xlane.f32.xlu0 %v3223
    %v3225 = vpop.xlane.xlu0 %3224
    %v3226 = vmul.f32 %v3225, %v819
    %v3227 = vsub.f32 %v3222, %v3226
    %v3228 = vmul.f32 %v3227, %v3227
    %v3229 = vsel %vm759, %v3228, 0.0
    %3230 = vadd.xlane.f32.xlu0 %v3229
    %v3231 = vpop.xlane.xlu0 %3230
    %v3232 = vmul.f32 %v3231, %v819
    %v3233 = vadd.f32 %v3232, 1e-05
    %v3234 = vrsqrt.pop %v3233
    %v3235 = vmul.f32 %v3234, %v3233
    %v3236 = vmul.f32 %v3235, %v3234
    %v3237 = vmul.f32 0.5, %v3236
    %v3238 = vsub.f32 1.5, %v3237
    %v3239 = vmul.f32 %v3234, %v3238
    %vm3240 = vweird.f32 %v3233
    %vm3241 = vweird.f32 %v3234
    %vm3242 = vmor %vm3240, %vm3241
    %v3243 = vsel %vm3242, %v3234, %v3239
    %v3244 = vmul.f32 %v3227, %v3243
    %v3245 = vperm.slane %v2496, 4
    %v3246 = vmul.f32 %v3244, %v3245
    %v3247 = vperm.slane %v2496, 5
    %v3248 = vadd.f32 %v3246, %v3247
    %v3249 = vpack.c.bf16 %v3248, %v3248
    %s3250 = scalar_lea.vmem %s2, 16
    %v3251 = vld [vmem:[%s3250] sm:$0xf]
    %v3252 = vld [vmem:[%s3250 + $0x4] sm:$0xf]
    %v3253 = vld [vmem:[%s3250 + $0x8] sm:$0xf]
    %v3254 = vld [vmem:[%s3250 + $0xc] sm:$0xf]
    %v3255 = vperm.slane %v153, 1
    %v3260 = vunpack.c.l.b16 %v3251
    %v3261 = vunpack.c.l.b16 %v3252
    %v3262 = vunpack.c.l.b16 %v3253
    %v3263 = vunpack.c.l.b16 %v3254
    %v3264 = vpack.c.b16 %v3261, %v3260
    %v3265 = vpack.c.b16 %v3263, %v3262
    %v3269 = vsel %vm172, %v3249, 0
    %3271 = vmatpush.bf16.msra.mxu0 0
    %3272 = vmatpush.bf16.msra.mxu0 0
    %3273 = vmatpush.bf16.msra.mxu0 0
    %3274 = vmatpush.bf16.msra.mxu0 0
    %3275 = vmatpush.bf16.msra.mxu0 0
    %3276 = vmatpush.bf16.msra.mxu0 0
    %3277 = vmatpush.bf16.msra.mxu0 %v3265
    %3278 = vmatpush.bf16.msra.mxu0 %v3264
    %3279 = vmatmul.bf16.gmra.mxu0 %v3269
    %v3280 = vpop.f32.mrf.mxu0
    %v3281 = vadd.f32 %v3255, %v3280
    %v3282 = vpop.f32.mrf.mxu0
    %3283 = vdwg.mxu0
    %v3284 = vsel %vm759, %v3281, 0.0
    %3285 = vadd.xlane.f32.xlu0 %v3284
    %v3286 = vpop.xlane.xlu0 %3285
    %v3287 = vmul.f32 %v3286, %v819
    %v3288 = vsub.f32 %v3281, %v3287
    %v3289 = vmul.f32 %v3288, %v3288
    %v3290 = vsel %vm759, %v3289, 0.0
    %3291 = vadd.xlane.f32.xlu0 %v3290
    %v3292 = vpop.xlane.xlu0 %3291
    %v3293 = vmul.f32 %v3292, %v819
    %v3294 = vadd.f32 %v3293, 1e-05
    %v3295 = vrsqrt.pop %v3294
    %v3296 = vmul.f32 %v3295, %v3294
    %v3297 = vmul.f32 %v3296, %v3295
    %v3298 = vmul.f32 0.5, %v3297
    %v3299 = vsub.f32 1.5, %v3298
    %v3300 = vmul.f32 %v3295, %v3299
    %vm3301 = vweird.f32 %v3294
    %vm3302 = vweird.f32 %v3295
    %vm3303 = vmor %vm3301, %vm3302
    %v3304 = vsel %vm3303, %v3295, %v3300
    %v3305 = vmul.f32 %v3288, %v3304
    %v3306 = vperm.slane %v153, 2
    %v3307 = vmul.f32 %v3305, %v3306
    %v3308 = vperm.slane %v153, 3
    %v3309 = vadd.f32 %v3307, %v3308
    %3310 = vst.msk [vmem:[#allocation2] sm:$0x3] %vm759, %v3309
    // Predicated region
    $region46: #{lcm_forward.1} parent=1 // pred_check
      _
    $region47: #{lcm_forward.1} parent=1 // pred_check_branch
      %3312 = sbr.rel (0) target = $region49
    $region48: #{lcm_forward.1} parent=1 // pred_region
      %3314 = vsyncadd [#allocation3], 0
      %s3316 = sshll.u32 [#allocation2], 4
      %s3317 = int_to_ptr.vmem [resolvable:$true] %s3316
      %s3318 = sshll.u32 %s11, 4
      %s3319 = int_to_ptr.hbm [resolvable:$true] %s3318
      %3321 = dma.vmem_to_hbm [thread:$0]  %s3317, 32, %s3319, [#allocation3]
    $region49: #{lcm_forward.1} parent=1 // pred_fallthru
      _
    // Predicated region
    $region50: #{lcm_forward.1} parent=1 // pred_check
      _
    $region51: #{lcm_forward.1} parent=1 // pred_check_branch
      %3323 = sbr.rel (0) target = $region53
    $region52: #{lcm_forward.1} parent=1 // pred_region
      %3325 = dma.done [#allocation3], 32
    $region53: #{lcm_forward.1} parent=1 // pred_fallthru
      _
    %3326 = vsyncpa [#allocation3], 1

</llo_original>
